<compile_context>
chip_gen: v5e
topology: v5e:2x2
jax: 0.10.0
libtpu: 0.0.40
codegen_flags: <defaults>
</compile_context>

<pallas_src>
import math
import functools

import jax
import jax.numpy as jnp
import numpy as np
from jax.experimental import pallas as pl
from jax.experimental.pallas import tpu as pltpu


# ----------------------------------------------------------------------------
# Helpers
# ----------------------------------------------------------------------------
def _layernorm(x, gamma, beta, eps=1e-5):
    mean = jnp.mean(x, axis=-1, keepdims=True)
    var = jnp.mean((x - mean) ** 2, axis=-1, keepdims=True)
    return (x - mean) * jax.lax.rsqrt(var + eps) * gamma + beta


def make_positional_encoding(max_len, d_model):
    pos = np.arange(max_len, dtype=np.float32)[:, None]
    div = np.exp(np.arange(0, d_model, 2, dtype=np.float32)
                 * (-math.log(10000.0) / d_model))
    pe = np.zeros((max_len, d_model), dtype=np.float32)
    pe[:, 0::2] = np.sin(pos * div)
    pe[:, 1::2] = np.cos(pos * div)
    return jnp.asarray(pe)


# ----------------------------------------------------------------------------
# Fused kernel: input projection + PE + all transformer layers
# ----------------------------------------------------------------------------
def fused_encoder_kernel(pv_ref, w_in_ref, b_in_ref, pe_ref,
                         wqkv_ref, bqkv_ref,      # (D,3D), (1,3D)  [per layer]
                         wo_ref, bo_ref,          # (D,D),  (1,D)
                         g1_ref, be1_ref,         # (1,D),  (1,D)
                         w1_ref, bb1_ref,         # (D,4D), (1,4D)
                         w2_ref, bb2_ref,         # (4D,D), (1,D)
                         g2_ref, be2_ref,         # (1,D),  (1,D)
                         o_ref,
                         acc_ref, attn_ref,
                         *, nhead, bg, seq):
    layer = pl.program_id(1)
    nlayers = pl.num_programs(1)

    # ---- first layer only: fused price/volume linear + positional encoding ----
    @pl.when(layer == 0)
    def _():
        xin = pv_ref[...].astype(jnp.float32)                     # (M, 2*NL)
        feat = jnp.dot(xin, w_in_ref[...],
                       preferred_element_type=jnp.float32)        # (M, D)
        acc_ref[...] = feat + b_in_ref[...] + pe_ref[...]

    x = acc_ref[...]                                              # (M, D) f32
    M, D = x.shape
    dh = D // nhead
    scale = 1.0 / math.sqrt(dh)

    # ---- multi-head self-attention --------------------------------------------
    qkv = jnp.dot(x, wqkv_ref[...],
                  preferred_element_type=jnp.float32) + bqkv_ref[...]
    q = qkv[:, :D] * scale          # fold 1/sqrt(dh) into q: one (M,D) multiply
    k = qkv[:, D:2 * D]
    v = qkv[:, 2 * D:]

    # batch (batch_elem, head) pairs along a new leading axis so scores and P@V
    # are single batched dot_generals (k.T never materialized).
    hq, hk, hv = [], [], []
    for b in range(bg):
        r0 = b * seq
        for h in range(nhead):
            c0 = h * dh
            hq.append(q[r0:r0 + seq, c0:c0 + dh])
            hk.append(k[r0:r0 + seq, c0:c0 + dh])
            hv.append(v[r0:r0 + seq, c0:c0 + dh])
    q3 = jnp.stack(hq, axis=0)       # (bg*H, S, dh)
    k3 = jnp.stack(hk, axis=0)
    v3 = jnp.stack(hv, axis=0)

    s = jnp.einsum('bqd,bkd->bqk', q3, k3,
                   preferred_element_type=jnp.float32)            # (bg*H, S, S)
    s = s - jnp.max(s, axis=-1, keepdims=True)
    p = jnp.exp(s)
    p = p / jnp.sum(p, axis=-1, keepdims=True)
    o = jnp.einsum('bqk,bkd->bqd', p, v3,
                   preferred_element_type=jnp.float32)            # (bg*H, S, dh)

    # scatter head outputs back into (M, D) layout via VMEM scratch writes
    # (no lane-dim concatenation / vreg pressure).
    for b in range(bg):
        for h in range(nhead):
            attn_ref[b * seq:(b + 1) * seq, h * dh:(h + 1) * dh] = o[b * nhead + h]

    attn = jnp.dot(attn_ref[...], wo_ref[...],
                   preferred_element_type=jnp.float32) + bo_ref[...]

    # residual + layernorm1 (post-norm; dropout == identity in eval)
    x = _layernorm(x + attn, g1_ref[...], be1_ref[...])

    # ---- feed-forward ----------------------------------------------------------
    h1 = jnp.dot(x, w1_ref[...],
                 preferred_element_type=jnp.float32) + bb1_ref[...]
    h1 = jnp.maximum(h1, 0.0)                                     # ReLU
    h2 = jnp.dot(h1, w2_ref[...],
                 preferred_element_type=jnp.float32) + bb2_ref[...]

    # residual + layernorm2; keep result resident in VMEM for the next layer
    x = _layernorm(x + h2, g2_ref[...], be2_ref[...])
    acc_ref[...] = x

    @pl.when(layer == nlayers - 1)
    def _():
        o_ref[...] = x.astype(o_ref.dtype)


# ----------------------------------------------------------------------------
# Wrapper
# ----------------------------------------------------------------------------
def order_book_encoder_forward(prices, volumes, params, *, nhead, num_groups=1):
    """Full OrderBookEncoder forward in ONE pallas_call.

    prices/volumes: (B, S, num_levels).  Returns (B, S, d_model).
    num_groups splits the batch over a "parallel" grid axis (set 2 on v7x to
    use both TensorCores); activations stay resident in VMEM across layers.
    """
    B, S, NL = prices.shape
    D = params["w_in"].shape[1]
    L = params["wqkv_t"].shape[0]
    assert B % num_groups == 0
    bg = B // num_groups
    M = bg * S

    # wrapper-side layout prep (cheap XLA ops, done once):
    pv = jnp.concatenate([prices, volumes], axis=-1).reshape(B * S, 2 * NL)
    pe_rep = jnp.tile(params["pe"][:S], (bg, 1))                  # (M, D)

    def rep_spec(shape):                       # layer-invariant, loaded once
        zeros = (0,) * len(shape)
        return pl.BlockSpec(tuple(shape), lambda g, l: zeros)

    def layer_spec(shape):                     # (L, ...) stacked per layer
        nrest = len(shape) - 1
        return pl.BlockSpec((None,) + tuple(shape[1:]),
                            lambda g, l: (l,) + (0,) * nrest)

    in_specs = [
        pl.BlockSpec((M, 2 * NL), lambda g, l: (g, 0)),           # pv
        rep_spec(params["w_in"].shape),
        rep_spec(params["b_in"].shape),
        pl.BlockSpec((M, D), lambda g, l: (0, 0)),                # pe (tiled)
        layer_spec(params["wqkv_t"].shape),
        layer_spec(params["bqkv"].shape),
        layer_spec(params["wo_t"].shape),
        layer_spec(params["bo"].shape),
        layer_spec(params["g1"].shape),
        layer_spec(params["be1"].shape),
        layer_spec(params["w1_t"].shape),
        layer_spec(params["bb1"].shape),
        layer_spec(params["w2_t"].shape),
        layer_spec(params["bb2"].shape),
        layer_spec(params["g2"].shape),
        layer_spec(params["be2"].shape),
    ]

    out = pl.pallas_call(
        functools.partial(fused_encoder_kernel, nhead=nhead, bg=bg, seq=S),
        out_shape=jax.ShapeDtypeStruct((B * S, D), prices.dtype),
        grid=(num_groups, L),
        in_specs=in_specs,
        out_specs=pl.BlockSpec((M, D), lambda g, l: (g, 0)),
        scratch_shapes=[pltpu.VMEM((M, D), jnp.float32),   # resident activations
                        pltpu.VMEM((M, D), jnp.float32)],  # attn head assembly
        compiler_params=pltpu.CompilerParams(
            dimension_semantics=("parallel", "arbitrary"),
            vmem_limit_bytes=32 * 1024 * 1024),
    )(pv, params["w_in"], params["b_in"], pe_rep,
      params["wqkv_t"], params["bqkv"], params["wo_t"], params["bo"],
      params["g1"], params["be1"], params["w1_t"], params["bb1"],
      params["w2_t"], params["bb2"], params["g2"], params["be2"])

    return out.reshape(B, S, D)


# ----------------------------------------------------------------------------
# Parameter construction (deterministic)
# ----------------------------------------------------------------------------
def init_params(key, num_levels, hidden_dim, num_layers, max_len):
    d_model = 2 * hidden_dim
    dff = 4 * d_model
    k_in, k_layers = jax.random.split(key)
    kin = jax.random.split(k_in, 4)
    lim_in = 1.0 / math.sqrt(num_levels)
    wp = jax.random.uniform(kin[0], (hidden_dim, num_levels), jnp.float32, -lim_in, lim_in)
    bp = jax.random.uniform(kin[1], (hidden_dim,), jnp.float32, -lim_in, lim_in)
    wv = jax.random.uniform(kin[2], (hidden_dim, num_levels), jnp.float32, -lim_in, lim_in)
    bv = jax.random.uniform(kin[3], (hidden_dim,), jnp.float32, -lim_in, lim_in)

    # block-diagonal fused input projection:
    #   [prices | volumes] @ w_in + b_in == concat(prices@Wp.T+bp, volumes@Wv.T+bv)
    w_in = jnp.zeros((2 * num_levels, d_model), jnp.float32)
    w_in = w_in.at[:num_levels, :hidden_dim].set(wp.T)
    w_in = w_in.at[num_levels:, hidden_dim:].set(wv.T)
    b_in = jnp.concatenate([bp, bv])[None, :]                     # (1, D)

    lim = 1.0 / math.sqrt(d_model)
    lim_ff = 1.0 / math.sqrt(dff)
    stacks = {k: [] for k in ("wqkv_t", "bqkv", "wo_t", "bo",
                              "w1_t", "bb1", "w2_t", "bb2")}
    for lk in jax.random.split(k_layers, num_layers):
        k = jax.random.split(lk, 8)
        stacks["wqkv_t"].append(jax.random.uniform(
            k[0], (3 * d_model, d_model), jnp.float32, -lim, lim).T)      # (D,3D)
        stacks["bqkv"].append(jax.random.uniform(
            k[1], (1, 3 * d_model), jnp.float32, -lim, lim))
        stacks["wo_t"].append(jax.random.uniform(
            k[2], (d_model, d_model), jnp.float32, -lim, lim).T)          # (D,D)
        stacks["bo"].append(jax.random.uniform(
            k[3], (1, d_model), jnp.float32, -lim, lim))
        stacks["w1_t"].append(jax.random.uniform(
            k[4], (dff, d_model), jnp.float32, -lim, lim).T)              # (D,4D)
        stacks["bb1"].append(jax.random.uniform(
            k[5], (1, dff), jnp.float32, -lim, lim))
        stacks["w2_t"].append(jax.random.uniform(
            k[6], (d_model, dff), jnp.float32, -lim_ff, lim_ff).T)        # (4D,D)
        stacks["bb2"].append(jax.random.uniform(
            k[7], (1, d_model), jnp.float32, -lim_ff, lim_ff))

    L = num_layers
    params = {
        "pe": make_positional_encoding(max_len, d_model),
        "w_in": w_in, "b_in": b_in,
        "g1": jnp.ones((L, 1, d_model), jnp.float32),
        "be1": jnp.zeros((L, 1, d_model), jnp.float32),
        "g2": jnp.ones((L, 1, d_model), jnp.float32),
        "be2": jnp.zeros((L, 1, d_model), jnp.float32),
    }
    for name, vals in stacks.items():
        params[name] = jnp.stack(vals)
    return params


# ----------------------------------------------------------------------------
# Pure-JAX reference (for verification)
# ----------------------------------------------------------------------------
def ref_layernorm(x, g, b, eps=1e-5):
    m = jnp.mean(x, -1, keepdims=True)
    v = jnp.mean((x - m) ** 2, -1, keepdims=True)
    return (x - m) / jnp.sqrt(v + eps) * g + b


def ref_encoder_layer(x, p, nhead):
    B, S, D = x.shape
    dh = D // nhead
    qkv = x @ p["wqkv_t"] + p["bqkv"]
    q, k, v = qkv[..., :D], qkv[..., D:2 * D], qkv[..., 2 * D:]

    def split_heads(t):  # (B,S,D) -> (B,H,S,dh)
        return t.reshape(B, S, nhead, dh).transpose(0, 2, 1, 3)

    qh, kh, vh = split_heads(q), split_heads(k), split_heads(v)
    s = jnp.einsum("bhqd,bhkd->bhqk", qh, kh) / math.sqrt(dh)
    pA = jax.nn.softmax(s, axis=-1)
    o = jnp.einsum("bhqk,bhkd->bhqd", pA, vh).transpose(0, 2, 1, 3).reshape(B, S, D)
    o = o @ p["wo_t"] + p["bo"]
    x = ref_layernorm(x + o, p["g1"], p["be1"])
    h = jnp.maximum(x @ p["w1_t"] + p["bb1"], 0.0) @ p["w2_t"] + p["bb2"]
    return ref_layernorm(x + h, p["g2"], p["be2"])


def ref_order_book_encoder(prices, volumes, params, nhead):
    B, S, NL = prices.shape
    D = params["w_in"].shape[1]
    H = D // 2
    pf = prices @ params["w_in"][:NL, :H] + params["b_in"][0, :H]
    vf = volumes @ params["w_in"][NL:, H:] + params["b_in"][0, H:]
    x = jnp.concatenate([pf, vf], axis=-1) + params["pe"][None, :S, :]
    L = params["wqkv_t"].shape[0]
    for li in range(L):
        p = {k: params[k][li] for k in ("wqkv_t", "bqkv", "wo_t", "bo",
                                        "g1", "be1", "w1_t", "bb1",
                                        "w2_t", "bb2", "g2", "be2")}
        x = ref_encoder_layer(x, p, nhead)
    return x


# ----------------------------------------------------------------------------
if __name__ == "__main__":
    # small shapes consistent with the module: prices/volumes (B, S, num_levels)
    B, S = 2, 8
    NUM_LEVELS = 10
    HIDDEN = 32            # d_model = 2*HIDDEN = 64
    NHEAD = 8              # module default
    NUM_LAYERS = 6         # module default

    key = jax.random.PRNGKey(0)
    kp, kv, kparams = jax.random.split(key, 3)
    prices = jax.random.normal(kp, (B, S, NUM_LEVELS), jnp.float32)
    volumes = jax.random.normal(kv, (B, S, NUM_LEVELS), jnp.float32)
    params = init_params(kparams, NUM_LEVELS, HIDDEN, NUM_LAYERS, max_len=S)

    # num_groups=1: whole batch resident per step; set 2 on v7x for megacore.
    out = order_book_encoder_forward(prices, volumes, params,
                                     nhead=NHEAD, num_groups=1)
    out = jax.block_until_ready(out)

    ref = ref_order_book_encoder(prices, volumes, params, NHEAD)
    np.testing.assert_allclose(np.asarray(out), np.asarray(ref),
                               rtol=5e-4, atol=5e-4)

    print("KERNEL_OK")
</pallas_src>

<mosaic_0001>
module attributes {stable_mosaic.version = 11 : i64} {
  func.func @fused_encoder_kernel(%arg0: i32, %arg1: i32, %arg2: memref<16x20xf32, #tpu.memory_space<vmem>>, %arg3: memref<20x64xf32, #tpu.memory_space<vmem>>, %arg4: memref<1x64xf32, #tpu.memory_space<vmem>>, %arg5: memref<16x64xf32, #tpu.memory_space<vmem>>, %arg6: memref<1x64x192xf32, #tpu.memory_space<vmem>>, %arg7: memref<1x1x192xf32, #tpu.memory_space<vmem>>, %arg8: memref<1x64x64xf32, #tpu.memory_space<vmem>>, %arg9: memref<1x1x64xf32, #tpu.memory_space<vmem>>, %arg10: memref<1x1x64xf32, #tpu.memory_space<vmem>>, %arg11: memref<1x1x64xf32, #tpu.memory_space<vmem>>, %arg12: memref<1x64x256xf32, #tpu.memory_space<vmem>>, %arg13: memref<1x1x256xf32, #tpu.memory_space<vmem>>, %arg14: memref<1x256x64xf32, #tpu.memory_space<vmem>>, %arg15: memref<1x1x64xf32, #tpu.memory_space<vmem>>, %arg16: memref<1x1x64xf32, #tpu.memory_space<vmem>>, %arg17: memref<1x1x64xf32, #tpu.memory_space<vmem>>, %arg18: memref<16x64xf32, #tpu.memory_space<vmem>>, %arg19: memref<16x64xf32, #tpu.memory_space<vmem>>, %arg20: memref<16x64xf32, #tpu.memory_space<vmem>>) attributes {dimension_semantics = [#tpu.dimension_semantics<parallel>, #tpu.dimension_semantics<arbitrary>], iteration_bounds = array<i64: 1, 6>, scalar_prefetch = 0 : i64, scratch_operands = 2 : i64, tpu.core_type = #tpu.core_type<tc>, window_params = [{transform_indices = @transform_0, window_bounds = array<i64: 16, 20>}, {pipeline_mode = #tpu.pipeline_mode<synchronous>, transform_indices = @transform_1, window_bounds = array<i64: 20, 64>}, {pipeline_mode = #tpu.pipeline_mode<synchronous>, transform_indices = @transform_2, window_bounds = array<i64: 1, 64>}, {pipeline_mode = #tpu.pipeline_mode<synchronous>, transform_indices = @transform_3, window_bounds = array<i64: 16, 64>}, {transform_indices = @transform_4, window_bounds = array<i64: 1, 64, 192>}, {transform_indices = @transform_5, window_bounds = array<i64: 1, 1, 192>}, {transform_indices = @transform_6, window_bounds = array<i64: 1, 64, 64>}, {transform_indices = @transform_7, window_bounds = array<i64: 1, 1, 64>}, {transform_indices = @transform_8, window_bounds = array<i64: 1, 1, 64>}, {transform_indices = @transform_9, window_bounds = array<i64: 1, 1, 64>}, {transform_indices = @transform_10, window_bounds = array<i64: 1, 64, 256>}, {transform_indices = @transform_11, window_bounds = array<i64: 1, 1, 256>}, {transform_indices = @transform_12, window_bounds = array<i64: 1, 256, 64>}, {transform_indices = @transform_13, window_bounds = array<i64: 1, 1, 64>}, {transform_indices = @transform_14, window_bounds = array<i64: 1, 1, 64>}, {transform_indices = @transform_15, window_bounds = array<i64: 1, 1, 64>}, {transform_indices = @transform_16, window_bounds = array<i64: 16, 64>}]} {
    %c0_i32 = arith.constant 0 : i32
    %0 = arith.cmpi eq, %arg1, %c0_i32 : i32
    %1 = arith.extui %0 : i1 to i32
    %c0_i32_0 = arith.constant 0 : i32
    %2 = arith.cmpi ne, %1, %c0_i32_0 : i32
    scf.if %2 {
      %c0_87 = arith.constant 0 : index
      %c0_88 = arith.constant 0 : index
      %256 = vector.load %arg2[%c0_87, %c0_88] : memref<16x20xf32, #tpu.memory_space<vmem>>, vector<16x20xf32>
      %c0_89 = arith.constant 0 : index
      %c0_90 = arith.constant 0 : index
      %257 = vector.load %arg3[%c0_89, %c0_90] : memref<20x64xf32, #tpu.memory_space<vmem>>, vector<20x64xf32>
      %cst_91 = arith.constant dense<0.000000e+00> : vector<16x64xf32>
      %258 = tpu.matmul %256, %257, %cst_91 {dimension_numbers = #tpu.dot_dimension_numbers<[1], [0], [0], [1], [0, 0, 1, 1], [], []>} : vector<16x20xf32>, vector<20x64xf32>, vector<16x64xf32> -> vector<16x64xf32>
      %c0_92 = arith.constant 0 : index
      %c0_93 = arith.constant 0 : index
      %259 = vector.load %arg4[%c0_92, %c0_93] : memref<1x64xf32, #tpu.memory_space<vmem>>, vector<1x64xf32>
      %260 = vector.broadcast %259 : vector<1x64xf32> to vector<16x64xf32>
      %261 = arith.addf %258, %260 : vector<16x64xf32>
      %c0_94 = arith.constant 0 : index
      %c0_95 = arith.constant 0 : index
      %262 = vector.load %arg5[%c0_94, %c0_95] : memref<16x64xf32, #tpu.memory_space<vmem>>, vector<16x64xf32>
      %263 = arith.addf %261, %262 : vector<16x64xf32>
      %c0_96 = arith.constant 0 : index
      %c0_97 = arith.constant 0 : index
      %264 = vector.load %arg19[%c0_96, %c0_97] : memref<16x64xf32, #tpu.memory_space<vmem>>, vector<16x64xf32>
      tpu.vector_store %arg19[%c0_96, %c0_97], %263 {strides = array<i32>} : memref<16x64xf32, #tpu.memory_space<vmem>>, vector<16x64xf32>,
    } else {
    }
    %c0 = arith.constant 0 : index
    %c0_1 = arith.constant 0 : index
    %3 = vector.load %arg19[%c0, %c0_1] : memref<16x64xf32, #tpu.memory_space<vmem>>, vector<16x64xf32>
    %c0_2 = arith.constant 0 : index
    %c0_3 = arith.constant 0 : index
    %c0_4 = arith.constant 0 : index
    %4 = vector.load %arg6[%c0_2, %c0_3, %c0_4] : memref<1x64x192xf32, #tpu.memory_space<vmem>>, vector<1x64x192xf32>
    %5 = vector.shape_cast %4 : vector<1x64x192xf32> to vector<64x192xf32>
    %cst = arith.constant dense<0.000000e+00> : vector<16x192xf32>
    %6 = tpu.matmul %3, %5, %cst {dimension_numbers = #tpu.dot_dimension_numbers<[1], [0], [0], [1], [0, 0, 1, 1], [], []>} : vector<16x64xf32>, vector<64x192xf32>, vector<16x192xf32> -> vector<16x192xf32>
    %c0_5 = arith.constant 0 : index
    %c0_6 = arith.constant 0 : index
    %c0_7 = arith.constant 0 : index
    %7 = vector.load %arg7[%c0_5, %c0_6, %c0_7] : memref<1x1x192xf32, #tpu.memory_space<vmem>>, vector<1x1x192xf32>
    %8 = vector.shape_cast %7 : vector<1x1x192xf32> to vector<1x192xf32>
    %9 = vector.broadcast %8 : vector<1x192xf32> to vector<16x192xf32>
    %10 = arith.addf %6, %9 : vector<16x192xf32>
    %11 = vector.extract_strided_slice %10 {offsets = [0, 0], sizes = [16, 64], strides = [1, 1]} : vector<16x192xf32> to vector<16x64xf32>
    %cst_8 = arith.constant 0.353553385 : f32
    %12 = vector.broadcast %cst_8 : f32 to vector<16x64xf32>
    %13 = arith.mulf %11, %12 : vector<16x64xf32>
    %14 = vector.extract_strided_slice %10 {offsets = [0, 64], sizes = [16, 64], strides = [1, 1]} : vector<16x192xf32> to vector<16x64xf32>
    %15 = vector.extract_strided_slice %10 {offsets = [0, 128], sizes = [16, 64], strides = [1, 1]} : vector<16x192xf32> to vector<16x64xf32>
    %16 = vector.extract_strided_slice %13 {offsets = [0, 0], sizes = [8, 8], strides = [1, 1]} : vector<16x64xf32> to vector<8x8xf32>
    %17 = vector.extract_strided_slice %14 {offsets = [0, 0], sizes = [8, 8], strides = [1, 1]} : vector<16x64xf32> to vector<8x8xf32>
    %18 = vector.extract_strided_slice %15 {offsets = [0, 0], sizes = [8, 8], strides = [1, 1]} : vector<16x64xf32> to vector<8x8xf32>
    %19 = vector.extract_strided_slice %13 {offsets = [0, 8], sizes = [8, 8], strides = [1, 1]} : vector<16x64xf32> to vector<8x8xf32>
    %20 = vector.extract_strided_slice %14 {offsets = [0, 8], sizes = [8, 8], strides = [1, 1]} : vector<16x64xf32> to vector<8x8xf32>
    %21 = vector.extract_strided_slice %15 {offsets = [0, 8], sizes = [8, 8], strides = [1, 1]} : vector<16x64xf32> to vector<8x8xf32>
    %22 = vector.extract_strided_slice %13 {offsets = [0, 16], sizes = [8, 8], strides = [1, 1]} : vector<16x64xf32> to vector<8x8xf32>
    %23 = vector.extract_strided_slice %14 {offsets = [0, 16], sizes = [8, 8], strides = [1, 1]} : vector<16x64xf32> to vector<8x8xf32>
    %24 = vector.extract_strided_slice %15 {offsets = [0, 16], sizes = [8, 8], strides = [1, 1]} : vector<16x64xf32> to vector<8x8xf32>
    %25 = vector.extract_strided_slice %13 {offsets = [0, 24], sizes = [8, 8], strides = [1, 1]} : vector<16x64xf32> to vector<8x8xf32>
    %26 = vector.extract_strided_slice %14 {offsets = [0, 24], sizes = [8, 8], strides = [1, 1]} : vector<16x64xf32> to vector<8x8xf32>
    %27 = vector.extract_strided_slice %15 {offsets = [0, 24], sizes = [8, 8], strides = [1, 1]} : vector<16x64xf32> to vector<8x8xf32>
    %28 = vector.extract_strided_slice %13 {offsets = [0, 32], sizes = [8, 8], strides = [1, 1]} : vector<16x64xf32> to vector<8x8xf32>
    %29 = vector.extract_strided_slice %14 {offsets = [0, 32], sizes = [8, 8], strides = [1, 1]} : vector<16x64xf32> to vector<8x8xf32>
    %30 = vector.extract_strided_slice %15 {offsets = [0, 32], sizes = [8, 8], strides = [1, 1]} : vector<16x64xf32> to vector<8x8xf32>
    %31 = vector.extract_strided_slice %13 {offsets = [0, 40], sizes = [8, 8], strides = [1, 1]} : vector<16x64xf32> to vector<8x8xf32>
    %32 = vector.extract_strided_slice %14 {offsets = [0, 40], sizes = [8, 8], strides = [1, 1]} : vector<16x64xf32> to vector<8x8xf32>
    %33 = vector.extract_strided_slice %15 {offsets = [0, 40], sizes = [8, 8], strides = [1, 1]} : vector<16x64xf32> to vector<8x8xf32>
    %34 = vector.extract_strided_slice %13 {offsets = [0, 48], sizes = [8, 8], strides = [1, 1]} : vector<16x64xf32> to vector<8x8xf32>
    %35 = vector.extract_strided_slice %14 {offsets = [0, 48], sizes = [8, 8], strides = [1, 1]} : vector<16x64xf32> to vector<8x8xf32>
    %36 = vector.extract_strided_slice %15 {offsets = [0, 48], sizes = [8, 8], strides = [1, 1]} : vector<16x64xf32> to vector<8x8xf32>
    %37 = vector.extract_strided_slice %13 {offsets = [0, 56], sizes = [8, 8], strides = [1, 1]} : vector<16x64xf32> to vector<8x8xf32>
    %38 = vector.extract_strided_slice %14 {offsets = [0, 56], sizes = [8, 8], strides = [1, 1]} : vector<16x64xf32> to vector<8x8xf32>
    %39 = vector.extract_strided_slice %15 {offsets = [0, 56], sizes = [8, 8], strides = [1, 1]} : vector<16x64xf32> to vector<8x8xf32>
    %40 = vector.extract_strided_slice %13 {offsets = [8, 0], sizes = [8, 8], strides = [1, 1]} : vector<16x64xf32> to vector<8x8xf32>
    %41 = vector.extract_strided_slice %14 {offsets = [8, 0], sizes = [8, 8], strides = [1, 1]} : vector<16x64xf32> to vector<8x8xf32>
    %42 = vector.extract_strided_slice %15 {offsets = [8, 0], sizes = [8, 8], strides = [1, 1]} : vector<16x64xf32> to vector<8x8xf32>
    %43 = vector.extract_strided_slice %13 {offsets = [8, 8], sizes = [8, 8], strides = [1, 1]} : vector<16x64xf32> to vector<8x8xf32>
    %44 = vector.extract_strided_slice %14 {offsets = [8, 8], sizes = [8, 8], strides = [1, 1]} : vector<16x64xf32> to vector<8x8xf32>
    %45 = vector.extract_strided_slice %15 {offsets = [8, 8], sizes = [8, 8], strides = [1, 1]} : vector<16x64xf32> to vector<8x8xf32>
    %46 = vector.extract_strided_slice %13 {offsets = [8, 16], sizes = [8, 8], strides = [1, 1]} : vector<16x64xf32> to vector<8x8xf32>
    %47 = vector.extract_strided_slice %14 {offsets = [8, 16], sizes = [8, 8], strides = [1, 1]} : vector<16x64xf32> to vector<8x8xf32>
    %48 = vector.extract_strided_slice %15 {offsets = [8, 16], sizes = [8, 8], strides = [1, 1]} : vector<16x64xf32> to vector<8x8xf32>
    %49 = vector.extract_strided_slice %13 {offsets = [8, 24], sizes = [8, 8], strides = [1, 1]} : vector<16x64xf32> to vector<8x8xf32>
    %50 = vector.extract_strided_slice %14 {offsets = [8, 24], sizes = [8, 8], strides = [1, 1]} : vector<16x64xf32> to vector<8x8xf32>
    %51 = vector.extract_strided_slice %15 {offsets = [8, 24], sizes = [8, 8], strides = [1, 1]} : vector<16x64xf32> to vector<8x8xf32>
    %52 = vector.extract_strided_slice %13 {offsets = [8, 32], sizes = [8, 8], strides = [1, 1]} : vector<16x64xf32> to vector<8x8xf32>
    %53 = vector.extract_strided_slice %14 {offsets = [8, 32], sizes = [8, 8], strides = [1, 1]} : vector<16x64xf32> to vector<8x8xf32>
    %54 = vector.extract_strided_slice %15 {offsets = [8, 32], sizes = [8, 8], strides = [1, 1]} : vector<16x64xf32> to vector<8x8xf32>
    %55 = vector.extract_strided_slice %13 {offsets = [8, 40], sizes = [8, 8], strides = [1, 1]} : vector<16x64xf32> to vector<8x8xf32>
    %56 = vector.extract_strided_slice %14 {offsets = [8, 40], sizes = [8, 8], strides = [1, 1]} : vector<16x64xf32> to vector<8x8xf32>
    %57 = vector.extract_strided_slice %15 {offsets = [8, 40], sizes = [8, 8], strides = [1, 1]} : vector<16x64xf32> to vector<8x8xf32>
    %58 = vector.extract_strided_slice %13 {offsets = [8, 48], sizes = [8, 8], strides = [1, 1]} : vector<16x64xf32> to vector<8x8xf32>
    %59 = vector.extract_strided_slice %14 {offsets = [8, 48], sizes = [8, 8], strides = [1, 1]} : vector<16x64xf32> to vector<8x8xf32>
    %60 = vector.extract_strided_slice %15 {offsets = [8, 48], sizes = [8, 8], strides = [1, 1]} : vector<16x64xf32> to vector<8x8xf32>
    %61 = vector.extract_strided_slice %13 {offsets = [8, 56], sizes = [8, 8], strides = [1, 1]} : vector<16x64xf32> to vector<8x8xf32>
    %62 = vector.extract_strided_slice %14 {offsets = [8, 56], sizes = [8, 8], strides = [1, 1]} : vector<16x64xf32> to vector<8x8xf32>
    %63 = vector.extract_strided_slice %15 {offsets = [8, 56], sizes = [8, 8], strides = [1, 1]} : vector<16x64xf32> to vector<8x8xf32>
    %64 = vector.shape_cast %16 : vector<8x8xf32> to vector<1x8x8xf32>
    %65 = vector.shape_cast %19 : vector<8x8xf32> to vector<1x8x8xf32>
    %66 = vector.shape_cast %22 : vector<8x8xf32> to vector<1x8x8xf32>
    %67 = vector.shape_cast %25 : vector<8x8xf32> to vector<1x8x8xf32>
    %68 = vector.shape_cast %28 : vector<8x8xf32> to vector<1x8x8xf32>
    %69 = vector.shape_cast %31 : vector<8x8xf32> to vector<1x8x8xf32>
    %70 = vector.shape_cast %34 : vector<8x8xf32> to vector<1x8x8xf32>
    %71 = vector.shape_cast %37 : vector<8x8xf32> to vector<1x8x8xf32>
    %72 = vector.shape_cast %40 : vector<8x8xf32> to vector<1x8x8xf32>
    %73 = vector.shape_cast %43 : vector<8x8xf32> to vector<1x8x8xf32>
    %74 = vector.shape_cast %46 : vector<8x8xf32> to vector<1x8x8xf32>
    %75 = vector.shape_cast %49 : vector<8x8xf32> to vector<1x8x8xf32>
    %76 = vector.shape_cast %52 : vector<8x8xf32> to vector<1x8x8xf32>
    %77 = vector.shape_cast %55 : vector<8x8xf32> to vector<1x8x8xf32>
    %78 = vector.shape_cast %58 : vector<8x8xf32> to vector<1x8x8xf32>
    %79 = vector.shape_cast %61 : vector<8x8xf32> to vector<1x8x8xf32>
    %80 = tpu.concatenate %64, %65, %66, %67, %68, %69, %70, %71, %72, %73, %74, %75, %76, %77, %78, %79 in 0 : vector<1x8x8xf32>, vector<1x8x8xf32>, vector<1x8x8xf32>, vector<1x8x8xf32>, vector<1x8x8xf32>, vector<1x8x8xf32>, vector<1x8x8xf32>, vector<1x8x8xf32>, vector<1x8x8xf32>, vector<1x8x8xf32>, vector<1x8x8xf32>, vector<1x8x8xf32>, vector<1x8x8xf32>, vector<1x8x8xf32>, vector<1x8x8xf32>, vector<1x8x8xf32> -> vector<16x8x8xf32>
    %81 = vector.shape_cast %17 : vector<8x8xf32> to vector<1x8x8xf32>
    %82 = vector.shape_cast %20 : vector<8x8xf32> to vector<1x8x8xf32>
    %83 = vector.shape_cast %23 : vector<8x8xf32> to vector<1x8x8xf32>
    %84 = vector.shape_cast %26 : vector<8x8xf32> to vector<1x8x8xf32>
    %85 = vector.shape_cast %29 : vector<8x8xf32> to vector<1x8x8xf32>
    %86 = vector.shape_cast %32 : vector<8x8xf32> to vector<1x8x8xf32>
    %87 = vector.shape_cast %35 : vector<8x8xf32> to vector<1x8x8xf32>
    %88 = vector.shape_cast %38 : vector<8x8xf32> to vector<1x8x8xf32>
    %89 = vector.shape_cast %41 : vector<8x8xf32> to vector<1x8x8xf32>
    %90 = vector.shape_cast %44 : vector<8x8xf32> to vector<1x8x8xf32>
    %91 = vector.shape_cast %47 : vector<8x8xf32> to vector<1x8x8xf32>
    %92 = vector.shape_cast %50 : vector<8x8xf32> to vector<1x8x8xf32>
    %93 = vector.shape_cast %53 : vector<8x8xf32> to vector<1x8x8xf32>
    %94 = vector.shape_cast %56 : vector<8x8xf32> to vector<1x8x8xf32>
    %95 = vector.shape_cast %59 : vector<8x8xf32> to vector<1x8x8xf32>
    %96 = vector.shape_cast %62 : vector<8x8xf32> to vector<1x8x8xf32>
    %97 = tpu.concatenate %81, %82, %83, %84, %85, %86, %87, %88, %89, %90, %91, %92, %93, %94, %95, %96 in 0 : vector<1x8x8xf32>, vector<1x8x8xf32>, vector<1x8x8xf32>, vector<1x8x8xf32>, vector<1x8x8xf32>, vector<1x8x8xf32>, vector<1x8x8xf32>, vector<1x8x8xf32>, vector<1x8x8xf32>, vector<1x8x8xf32>, vector<1x8x8xf32>, vector<1x8x8xf32>, vector<1x8x8xf32>, vector<1x8x8xf32>, vector<1x8x8xf32>, vector<1x8x8xf32> -> vector<16x8x8xf32>
    %98 = vector.shape_cast %18 : vector<8x8xf32> to vector<1x8x8xf32>
    %99 = vector.shape_cast %21 : vector<8x8xf32> to vector<1x8x8xf32>
    %100 = vector.shape_cast %24 : vector<8x8xf32> to vector<1x8x8xf32>
    %101 = vector.shape_cast %27 : vector<8x8xf32> to vector<1x8x8xf32>
    %102 = vector.shape_cast %30 : vector<8x8xf32> to vector<1x8x8xf32>
    %103 = vector.shape_cast %33 : vector<8x8xf32> to vector<1x8x8xf32>
    %104 = vector.shape_cast %36 : vector<8x8xf32> to vector<1x8x8xf32>
    %105 = vector.shape_cast %39 : vector<8x8xf32> to vector<1x8x8xf32>
    %106 = vector.shape_cast %42 : vector<8x8xf32> to vector<1x8x8xf32>
    %107 = vector.shape_cast %45 : vector<8x8xf32> to vector<1x8x8xf32>
    %108 = vector.shape_cast %48 : vector<8x8xf32> to vector<1x8x8xf32>
    %109 = vector.shape_cast %51 : vector<8x8xf32> to vector<1x8x8xf32>
    %110 = vector.shape_cast %54 : vector<8x8xf32> to vector<1x8x8xf32>
    %111 = vector.shape_cast %57 : vector<8x8xf32> to vector<1x8x8xf32>
    %112 = vector.shape_cast %60 : vector<8x8xf32> to vector<1x8x8xf32>
    %113 = vector.shape_cast %63 : vector<8x8xf32> to vector<1x8x8xf32>
    %114 = tpu.concatenate %98, %99, %100, %101, %102, %103, %104, %105, %106, %107, %108, %109, %110, %111, %112, %113 in 0 : vector<1x8x8xf32>, vector<1x8x8xf32>, vector<1x8x8xf32>, vector<1x8x8xf32>, vector<1x8x8xf32>, vector<1x8x8xf32>, vector<1x8x8xf32>, vector<1x8x8xf32>, vector<1x8x8xf32>, vector<1x8x8xf32>, vector<1x8x8xf32>, vector<1x8x8xf32>, vector<1x8x8xf32>, vector<1x8x8xf32>, vector<1x8x8xf32>, vector<1x8x8xf32> -> vector<16x8x8xf32>
    "tpu.trace_start"() <{level = 10 : i32, message = "bqd,bkd->bqk"}> : () -> ()
    %cst_9 = arith.constant dense<0.000000e+00> : vector<16x8x8xf32>
    %115 = tpu.matmul %80, %97, %cst_9 {dimension_numbers = #tpu.dot_dimension_numbers<[2], [2], [1], [1], [0, 0, 0, 1, 1, 1], [0], [0]>} : vector<16x8x8xf32>, vector<16x8x8xf32>, vector<16x8x8xf32> -> vector<16x8x8xf32>
    "tpu.trace_stop"() : () -> ()
    %cst_10 = arith.constant dense<0xFF800000> : vector<16x8xf32>
    %116 = vector.multi_reduction <maximumf>, %115, %cst_10 [2] : vector<16x8x8xf32> to vector<16x8xf32>
    %117 = vector.shape_cast %116 : vector<16x8xf32> to vector<16x8x1xf32>
    %118 = vector.broadcast %117 : vector<16x8x1xf32> to vector<16x8x8xf32>
    %119 = arith.subf %115, %118 : vector<16x8x8xf32>
    %120 = math.exp %119 : vector<16x8x8xf32>
    %cst_11 = arith.constant dense<0.000000e+00> : vector<16x8xf32>
    %121 = vector.multi_reduction <add>, %120, %cst_11 [2] : vector<16x8x8xf32> to vector<16x8xf32>
    %122 = vector.shape_cast %121 : vector<16x8xf32> to vector<16x8x1xf32>
    %123 = vector.broadcast %122 : vector<16x8x1xf32> to vector<16x8x8xf32>
    %124 = arith.divf %120, %123 : vector<16x8x8xf32>
    "tpu.trace_start"() <{level = 10 : i32, message = "bqk,bkd->bqd"}> : () -> ()
    %cst_12 = arith.constant dense<0.000000e+00> : vector<16x8x8xf32>
    %125 = tpu.matmul %124, %114, %cst_12 {dimension_numbers = #tpu.dot_dimension_numbers<[2], [1], [1], [2], [0, 0, 0, 1, 1, 2], [0], [0]>} : vector<16x8x8xf32>, vector<16x8x8xf32>, vector<16x8x8xf32> -> vector<16x8x8xf32>
    "tpu.trace_stop"() : () -> ()
    %126 = vector.extract_strided_slice %125 {offsets = [0, 0, 0], sizes = [1, 8, 8], strides = [1, 1, 1]} : vector<16x8x8xf32> to vector<1x8x8xf32>
    %127 = vector.shape_cast %126 : vector<1x8x8xf32> to vector<8x8xf32>
    %c0_13 = arith.constant 0 : index
    %c0_14 = arith.constant 0 : index
    %128 = vector.load %arg20[%c0_13, %c0_14] : memref<16x64xf32, #tpu.memory_space<vmem>>, vector<8x8xf32>
    tpu.vector_store %arg20[%c0_13, %c0_14], %127 {strides = array<i32>} : memref<16x64xf32, #tpu.memory_space<vmem>>, vector<8x8xf32>,
    %129 = vector.extract_strided_slice %125 {offsets = [1, 0, 0], sizes = [1, 8, 8], strides = [1, 1, 1]} : vector<16x8x8xf32> to vector<1x8x8xf32>
    %130 = vector.shape_cast %129 : vector<1x8x8xf32> to vector<8x8xf32>
    %c0_15 = arith.constant 0 : index
    %c8 = arith.constant 8 : index
    %131 = vector.load %arg20[%c0_15, %c8] : memref<16x64xf32, #tpu.memory_space<vmem>>, vector<8x8xf32>
    tpu.vector_store %arg20[%c0_15, %c8], %130 {strides = array<i32>} : memref<16x64xf32, #tpu.memory_space<vmem>>, vector<8x8xf32>,
    %132 = vector.extract_strided_slice %125 {offsets = [2, 0, 0], sizes = [1, 8, 8], strides = [1, 1, 1]} : vector<16x8x8xf32> to vector<1x8x8xf32>
    %133 = vector.shape_cast %132 : vector<1x8x8xf32> to vector<8x8xf32>
    %c0_16 = arith.constant 0 : index
    %c16 = arith.constant 16 : index
    %134 = vector.load %arg20[%c0_16, %c16] : memref<16x64xf32, #tpu.memory_space<vmem>>, vector<8x8xf32>
    tpu.vector_store %arg20[%c0_16, %c16], %133 {strides = array<i32>} : memref<16x64xf32, #tpu.memory_space<vmem>>, vector<8x8xf32>,
    %135 = vector.extract_strided_slice %125 {offsets = [3, 0, 0], sizes = [1, 8, 8], strides = [1, 1, 1]} : vector<16x8x8xf32> to vector<1x8x8xf32>
    %136 = vector.shape_cast %135 : vector<1x8x8xf32> to vector<8x8xf32>
    %c0_17 = arith.constant 0 : index
    %c24 = arith.constant 24 : index
    %137 = vector.load %arg20[%c0_17, %c24] : memref<16x64xf32, #tpu.memory_space<vmem>>, vector<8x8xf32>
    tpu.vector_store %arg20[%c0_17, %c24], %136 {strides = array<i32>} : memref<16x64xf32, #tpu.memory_space<vmem>>, vector<8x8xf32>,
    %138 = vector.extract_strided_slice %125 {offsets = [4, 0, 0], sizes = [1, 8, 8], strides = [1, 1, 1]} : vector<16x8x8xf32> to vector<1x8x8xf32>
    %139 = vector.shape_cast %138 : vector<1x8x8xf32> to vector<8x8xf32>
    %c0_18 = arith.constant 0 : index
    %c32 = arith.constant 32 : index
    %140 = vector.load %arg20[%c0_18, %c32] : memref<16x64xf32, #tpu.memory_space<vmem>>, vector<8x8xf32>
    tpu.vector_store %arg20[%c0_18, %c32], %139 {strides = array<i32>} : memref<16x64xf32, #tpu.memory_space<vmem>>, vector<8x8xf32>,
    %141 = vector.extract_strided_slice %125 {offsets = [5, 0, 0], sizes = [1, 8, 8], strides = [1, 1, 1]} : vector<16x8x8xf32> to vector<1x8x8xf32>
    %142 = vector.shape_cast %141 : vector<1x8x8xf32> to vector<8x8xf32>
    %c0_19 = arith.constant 0 : index
    %c40 = arith.constant 40 : index
    %143 = vector.load %arg20[%c0_19, %c40] : memref<16x64xf32, #tpu.memory_space<vmem>>, vector<8x8xf32>
    tpu.vector_store %arg20[%c0_19, %c40], %142 {strides = array<i32>} : memref<16x64xf32, #tpu.memory_space<vmem>>, vector<8x8xf32>,
    %144 = vector.extract_strided_slice %125 {offsets = [6, 0, 0], sizes = [1, 8, 8], strides = [1, 1, 1]} : vector<16x8x8xf32> to vector<1x8x8xf32>
    %145 = vector.shape_cast %144 : vector<1x8x8xf32> to vector<8x8xf32>
    %c0_20 = arith.constant 0 : index
    %c48 = arith.constant 48 : index
    %146 = vector.load %arg20[%c0_20, %c48] : memref<16x64xf32, #tpu.memory_space<vmem>>, vector<8x8xf32>
    tpu.vector_store %arg20[%c0_20, %c48], %145 {strides = array<i32>} : memref<16x64xf32, #tpu.memory_space<vmem>>, vector<8x8xf32>,
    %147 = vector.extract_strided_slice %125 {offsets = [7, 0, 0], sizes = [1, 8, 8], strides = [1, 1, 1]} : vector<16x8x8xf32> to vector<1x8x8xf32>
    %148 = vector.shape_cast %147 : vector<1x8x8xf32> to vector<8x8xf32>
    %c0_21 = arith.constant 0 : index
    %c56 = arith.constant 56 : index
    %149 = vector.load %arg20[%c0_21, %c56] : memref<16x64xf32, #tpu.memory_space<vmem>>, vector<8x8xf32>
    tpu.vector_store %arg20[%c0_21, %c56], %148 {strides = array<i32>} : memref<16x64xf32, #tpu.memory_space<vmem>>, vector<8x8xf32>,
    %150 = vector.extract_strided_slice %125 {offsets = [8, 0, 0], sizes = [1, 8, 8], strides = [1, 1, 1]} : vector<16x8x8xf32> to vector<1x8x8xf32>
    %151 = vector.shape_cast %150 : vector<1x8x8xf32> to vector<8x8xf32>
    %c8_22 = arith.constant 8 : index
    %c0_23 = arith.constant 0 : index
    %152 = vector.load %arg20[%c8_22, %c0_23] : memref<16x64xf32, #tpu.memory_space<vmem>>, vector<8x8xf32>
    tpu.vector_store %arg20[%c8_22, %c0_23], %151 {strides = array<i32>} : memref<16x64xf32, #tpu.memory_space<vmem>>, vector<8x8xf32>,
    %153 = vector.extract_strided_slice %125 {offsets = [9, 0, 0], sizes = [1, 8, 8], strides = [1, 1, 1]} : vector<16x8x8xf32> to vector<1x8x8xf32>
    %154 = vector.shape_cast %153 : vector<1x8x8xf32> to vector<8x8xf32>
    %c8_24 = arith.constant 8 : index
    %c8_25 = arith.constant 8 : index
    %155 = vector.load %arg20[%c8_24, %c8_25] : memref<16x64xf32, #tpu.memory_space<vmem>>, vector<8x8xf32>
    tpu.vector_store %arg20[%c8_24, %c8_25], %154 {strides = array<i32>} : memref<16x64xf32, #tpu.memory_space<vmem>>, vector<8x8xf32>,
    %156 = vector.extract_strided_slice %125 {offsets = [10, 0, 0], sizes = [1, 8, 8], strides = [1, 1, 1]} : vector<16x8x8xf32> to vector<1x8x8xf32>
    %157 = vector.shape_cast %156 : vector<1x8x8xf32> to vector<8x8xf32>
    %c8_26 = arith.constant 8 : index
    %c16_27 = arith.constant 16 : index
    %158 = vector.load %arg20[%c8_26, %c16_27] : memref<16x64xf32, #tpu.memory_space<vmem>>, vector<8x8xf32>
    tpu.vector_store %arg20[%c8_26, %c16_27], %157 {strides = array<i32>} : memref<16x64xf32, #tpu.memory_space<vmem>>, vector<8x8xf32>,
    %159 = vector.extract_strided_slice %125 {offsets = [11, 0, 0], sizes = [1, 8, 8], strides = [1, 1, 1]} : vector<16x8x8xf32> to vector<1x8x8xf32>
    %160 = vector.shape_cast %159 : vector<1x8x8xf32> to vector<8x8xf32>
    %c8_28 = arith.constant 8 : index
    %c24_29 = arith.constant 24 : index
    %161 = vector.load %arg20[%c8_28, %c24_29] : memref<16x64xf32, #tpu.memory_space<vmem>>, vector<8x8xf32>
    tpu.vector_store %arg20[%c8_28, %c24_29], %160 {strides = array<i32>} : memref<16x64xf32, #tpu.memory_space<vmem>>, vector<8x8xf32>,
    %162 = vector.extract_strided_slice %125 {offsets = [12, 0, 0], sizes = [1, 8, 8], strides = [1, 1, 1]} : vector<16x8x8xf32> to vector<1x8x8xf32>
    %163 = vector.shape_cast %162 : vector<1x8x8xf32> to vector<8x8xf32>
    %c8_30 = arith.constant 8 : index
    %c32_31 = arith.constant 32 : index
    %164 = vector.load %arg20[%c8_30, %c32_31] : memref<16x64xf32, #tpu.memory_space<vmem>>, vector<8x8xf32>
    tpu.vector_store %arg20[%c8_30, %c32_31], %163 {strides = array<i32>} : memref<16x64xf32, #tpu.memory_space<vmem>>, vector<8x8xf32>,
    %165 = vector.extract_strided_slice %125 {offsets = [13, 0, 0], sizes = [1, 8, 8], strides = [1, 1, 1]} : vector<16x8x8xf32> to vector<1x8x8xf32>
    %166 = vector.shape_cast %165 : vector<1x8x8xf32> to vector<8x8xf32>
    %c8_32 = arith.constant 8 : index
    %c40_33 = arith.constant 40 : index
    %167 = vector.load %arg20[%c8_32, %c40_33] : memref<16x64xf32, #tpu.memory_space<vmem>>, vector<8x8xf32>
    tpu.vector_store %arg20[%c8_32, %c40_33], %166 {strides = array<i32>} : memref<16x64xf32, #tpu.memory_space<vmem>>, vector<8x8xf32>,
    %168 = vector.extract_strided_slice %125 {offsets = [14, 0, 0], sizes = [1, 8, 8], strides = [1, 1, 1]} : vector<16x8x8xf32> to vector<1x8x8xf32>
    %169 = vector.shape_cast %168 : vector<1x8x8xf32> to vector<8x8xf32>
    %c8_34 = arith.constant 8 : index
    %c48_35 = arith.constant 48 : index
    %170 = vector.load %arg20[%c8_34, %c48_35] : memref<16x64xf32, #tpu.memory_space<vmem>>, vector<8x8xf32>
    tpu.vector_store %arg20[%c8_34, %c48_35], %169 {strides = array<i32>} : memref<16x64xf32, #tpu.memory_space<vmem>>, vector<8x8xf32>,
    %171 = vector.extract_strided_slice %125 {offsets = [15, 0, 0], sizes = [1, 8, 8], strides = [1, 1, 1]} : vector<16x8x8xf32> to vector<1x8x8xf32>
    %172 = vector.shape_cast %171 : vector<1x8x8xf32> to vector<8x8xf32>
    %c8_36 = arith.constant 8 : index
    %c56_37 = arith.constant 56 : index
    %173 = vector.load %arg20[%c8_36, %c56_37] : memref<16x64xf32, #tpu.memory_space<vmem>>, vector<8x8xf32>
    tpu.vector_store %arg20[%c8_36, %c56_37], %172 {strides = array<i32>} : memref<16x64xf32, #tpu.memory_space<vmem>>, vector<8x8xf32>,
    %c0_38 = arith.constant 0 : index
    %c0_39 = arith.constant 0 : index
    %174 = vector.load %arg20[%c0_38, %c0_39] : memref<16x64xf32, #tpu.memory_space<vmem>>, vector<16x64xf32>
    %c0_40 = arith.constant 0 : index
    %c0_41 = arith.constant 0 : index
    %c0_42 = arith.constant 0 : index
    %175 = vector.load %arg8[%c0_40, %c0_41, %c0_42] : memref<1x64x64xf32, #tpu.memory_space<vmem>>, vector<1x64x64xf32>
    %176 = vector.shape_cast %175 : vector<1x64x64xf32> to vector<64x64xf32>
    %cst_43 = arith.constant dense<0.000000e+00> : vector<16x64xf32>
    %177 = tpu.matmul %174, %176, %cst_43 {dimension_numbers = #tpu.dot_dimension_numbers<[1], [0], [0], [1], [0, 0, 1, 1], [], []>} : vector<16x64xf32>, vector<64x64xf32>, vector<16x64xf32> -> vector<16x64xf32>
    %c0_44 = arith.constant 0 : index
    %c0_45 = arith.constant 0 : index
    %c0_46 = arith.constant 0 : index
    %178 = vector.load %arg9[%c0_44, %c0_45, %c0_46] : memref<1x1x64xf32, #tpu.memory_space<vmem>>, vector<1x1x64xf32>
    %179 = vector.shape_cast %178 : vector<1x1x64xf32> to vector<1x64xf32>
    %180 = vector.broadcast %179 : vector<1x64xf32> to vector<16x64xf32>
    %181 = arith.addf %177, %180 : vector<16x64xf32>
    %182 = arith.addf %3, %181 : vector<16x64xf32>
    %c0_47 = arith.constant 0 : index
    %c0_48 = arith.constant 0 : index
    %c0_49 = arith.constant 0 : index
    %183 = vector.load %arg10[%c0_47, %c0_48, %c0_49] : memref<1x1x64xf32, #tpu.memory_space<vmem>>, vector<1x1x64xf32>
    %184 = vector.shape_cast %183 : vector<1x1x64xf32> to vector<1x64xf32>
    %c0_50 = arith.constant 0 : index
    %c0_51 = arith.constant 0 : index
    %c0_52 = arith.constant 0 : index
    %185 = vector.load %arg11[%c0_50, %c0_51, %c0_52] : memref<1x1x64xf32, #tpu.memory_space<vmem>>, vector<1x1x64xf32>
    %186 = vector.shape_cast %185 : vector<1x1x64xf32> to vector<1x64xf32>
    %cst_53 = arith.constant dense<0.000000e+00> : vector<16xf32>
    %187 = vector.multi_reduction <add>, %182, %cst_53 [1] : vector<16x64xf32> to vector<16xf32>
    %188 = vector.shape_cast %187 : vector<16xf32> to vector<16x1xf32>
    %cst_54 = arith.constant 6.400000e+01 : f32
    %189 = vector.broadcast %cst_54 : f32 to vector<16x1xf32>
    %190 = arith.divf %188, %189 : vector<16x1xf32>
    %191 = vector.broadcast %190 : vector<16x1xf32> to vector<16x64xf32>
    %192 = arith.subf %182, %191 : vector<16x64xf32>
    %193 = arith.mulf %192, %192 : vector<16x64xf32>
    %cst_55 = arith.constant dense<0.000000e+00> : vector<16xf32>
    %194 = vector.multi_reduction <add>, %193, %cst_55 [1] : vector<16x64xf32> to vector<16xf32>
    %195 = vector.shape_cast %194 : vector<16xf32> to vector<16x1xf32>
    %cst_56 = arith.constant 6.400000e+01 : f32
    %196 = vector.broadcast %cst_56 : f32 to vector<16x1xf32>
    %197 = arith.divf %195, %196 : vector<16x1xf32>
    %198 = vector.broadcast %190 : vector<16x1xf32> to vector<16x64xf32>
    %199 = arith.subf %182, %198 : vector<16x64xf32>
    %cst_57 = arith.constant 9.99999974E-6 : f32
    %200 = vector.broadcast %cst_57 : f32 to vector<16x1xf32>
    %201 = arith.addf %197, %200 : vector<16x1xf32>
    %202 = math.rsqrt %201 : vector<16x1xf32>
    %203 = vector.broadcast %202 : vector<16x1xf32> to vector<16x64xf32>
    %204 = arith.mulf %199, %203 : vector<16x64xf32>
    %205 = vector.broadcast %184 : vector<1x64xf32> to vector<16x64xf32>
    %206 = arith.mulf %204, %205 : vector<16x64xf32>
    %207 = vector.broadcast %186 : vector<1x64xf32> to vector<16x64xf32>
    %208 = arith.addf %206, %207 : vector<16x64xf32>
    %c0_58 = arith.constant 0 : index
    %c0_59 = arith.constant 0 : index
    %c0_60 = arith.constant 0 : index
    %209 = vector.load %arg12[%c0_58, %c0_59, %c0_60] : memref<1x64x256xf32, #tpu.memory_space<vmem>>, vector<1x64x256xf32>
    %210 = vector.shape_cast %209 : vector<1x64x256xf32> to vector<64x256xf32>
    %cst_61 = arith.constant dense<0.000000e+00> : vector<16x256xf32>
    %211 = tpu.matmul %208, %210, %cst_61 {dimension_numbers = #tpu.dot_dimension_numbers<[1], [0], [0], [1], [0, 0, 1, 1], [], []>} : vector<16x64xf32>, vector<64x256xf32>, vector<16x256xf32> -> vector<16x256xf32>
    %c0_62 = arith.constant 0 : index
    %c0_63 = arith.constant 0 : index
    %c0_64 = arith.constant 0 : index
    %212 = vector.load %arg13[%c0_62, %c0_63, %c0_64] : memref<1x1x256xf32, #tpu.memory_space<vmem>>, vector<1x1x256xf32>
    %213 = vector.shape_cast %212 : vector<1x1x256xf32> to vector<1x256xf32>
    %214 = vector.broadcast %213 : vector<1x256xf32> to vector<16x256xf32>
    %215 = arith.addf %211, %214 : vector<16x256xf32>
    %cst_65 = arith.constant 0.000000e+00 : f32
    %216 = vector.broadcast %cst_65 : f32 to vector<16x256xf32>
    %217 = arith.maximumf %215, %216 : vector<16x256xf32>
    %c0_66 = arith.constant 0 : index
    %c0_67 = arith.constant 0 : index
    %c0_68 = arith.constant 0 : index
    %218 = vector.load %arg14[%c0_66, %c0_67, %c0_68] : memref<1x256x64xf32, #tpu.memory_space<vmem>>, vector<1x256x64xf32>
    %219 = vector.shape_cast %218 : vector<1x256x64xf32> to vector<256x64xf32>
    %cst_69 = arith.constant dense<0.000000e+00> : vector<16x64xf32>
    %220 = tpu.matmul %217, %219, %cst_69 {dimension_numbers = #tpu.dot_dimension_numbers<[1], [0], [0], [1], [0, 0, 1, 1], [], []>} : vector<16x256xf32>, vector<256x64xf32>, vector<16x64xf32> -> vector<16x64xf32>
    %c0_70 = arith.constant 0 : index
    %c0_71 = arith.constant 0 : index
    %c0_72 = arith.constant 0 : index
    %221 = vector.load %arg15[%c0_70, %c0_71, %c0_72] : memref<1x1x64xf32, #tpu.memory_space<vmem>>, vector<1x1x64xf32>
    %222 = vector.shape_cast %221 : vector<1x1x64xf32> to vector<1x64xf32>
    %223 = vector.broadcast %222 : vector<1x64xf32> to vector<16x64xf32>
    %224 = arith.addf %220, %223 : vector<16x64xf32>
    %225 = arith.addf %208, %224 : vector<16x64xf32>
    %c0_73 = arith.constant 0 : index
    %c0_74 = arith.constant 0 : index
    %c0_75 = arith.constant 0 : index
    %226 = vector.load %arg16[%c0_73, %c0_74, %c0_75] : memref<1x1x64xf32, #tpu.memory_space<vmem>>, vector<1x1x64xf32>
    %227 = vector.shape_cast %226 : vector<1x1x64xf32> to vector<1x64xf32>
    %c0_76 = arith.constant 0 : index
    %c0_77 = arith.constant 0 : index
    %c0_78 = arith.constant 0 : index
    %228 = vector.load %arg17[%c0_76, %c0_77, %c0_78] : memref<1x1x64xf32, #tpu.memory_space<vmem>>, vector<1x1x64xf32>
    %229 = vector.shape_cast %228 : vector<1x1x64xf32> to vector<1x64xf32>
    %cst_79 = arith.constant dense<0.000000e+00> : vector<16xf32>
    %230 = vector.multi_reduction <add>, %225, %cst_79 [1] : vector<16x64xf32> to vector<16xf32>
    %231 = vector.shape_cast %230 : vector<16xf32> to vector<16x1xf32>
    %cst_80 = arith.constant 6.400000e+01 : f32
    %232 = vector.broadcast %cst_80 : f32 to vector<16x1xf32>
    %233 = arith.divf %231, %232 : vector<16x1xf32>
    %234 = vector.broadcast %233 : vector<16x1xf32> to vector<16x64xf32>
    %235 = arith.subf %225, %234 : vector<16x64xf32>
    %236 = arith.mulf %235, %235 : vector<16x64xf32>
    %cst_81 = arith.constant dense<0.000000e+00> : vector<16xf32>
    %237 = vector.multi_reduction <add>, %236, %cst_81 [1] : vector<16x64xf32> to vector<16xf32>
    %238 = vector.shape_cast %237 : vector<16xf32> to vector<16x1xf32>
    %cst_82 = arith.constant 6.400000e+01 : f32
    %239 = vector.broadcast %cst_82 : f32 to vector<16x1xf32>
    %240 = arith.divf %238, %239 : vector<16x1xf32>
    %241 = vector.broadcast %233 : vector<16x1xf32> to vector<16x64xf32>
    %242 = arith.subf %225, %241 : vector<16x64xf32>
    %cst_83 = arith.constant 9.99999974E-6 : f32
    %243 = vector.broadcast %cst_83 : f32 to vector<16x1xf32>
    %244 = arith.addf %240, %243 : vector<16x1xf32>
    %245 = math.rsqrt %244 : vector<16x1xf32>
    %246 = vector.broadcast %245 : vector<16x1xf32> to vector<16x64xf32>
    %247 = arith.mulf %242, %246 : vector<16x64xf32>
    %248 = vector.broadcast %227 : vector<1x64xf32> to vector<16x64xf32>
    %249 = arith.mulf %247, %248 : vector<16x64xf32>
    %250 = vector.broadcast %229 : vector<1x64xf32> to vector<16x64xf32>
    %251 = arith.addf %249, %250 : vector<16x64xf32>
    %c0_84 = arith.constant 0 : index
    %c0_85 = arith.constant 0 : index
    %252 = vector.load %arg19[%c0_84, %c0_85] : memref<16x64xf32, #tpu.memory_space<vmem>>, vector<16x64xf32>
    tpu.vector_store %arg19[%c0_84, %c0_85], %251 {strides = array<i32>} : memref<16x64xf32, #tpu.memory_space<vmem>>, vector<16x64xf32>,
    %c5_i32 = arith.constant 5 : i32
    %253 = arith.cmpi eq, %arg1, %c5_i32 : i32
    %254 = arith.extui %253 : i1 to i32
    %c0_i32_86 = arith.constant 0 : i32
    %255 = arith.cmpi ne, %254, %c0_i32_86 : i32
    scf.if %255 {
      %c0_87 = arith.constant 0 : index
      %c0_88 = arith.constant 0 : index
      %256 = vector.load %arg18[%c0_87, %c0_88] : memref<16x64xf32, #tpu.memory_space<vmem>>, vector<16x64xf32>
      tpu.vector_store %arg18[%c0_87, %c0_88], %251 {strides = array<i32>} : memref<16x64xf32, #tpu.memory_space<vmem>>, vector<16x64xf32>,
    } else {
    }
    return
  }
  func.func @transform_0(%arg0: i32, %arg1: i32) -> (i32, i32) {
    %c0_i32 = arith.constant 0 : i32
    %c0_i32_0 = arith.constant 0 : i32
    return %arg0, %c0_i32 : i32, i32
  }
  func.func @transform_1(%arg0: i32, %arg1: i32) -> (i32, i32) {
    %c0_i32 = arith.constant 0 : i32
    %c0_i32_0 = arith.constant 0 : i32
    %c0_i32_1 = arith.constant 0 : i32
    return %c0_i32, %c0_i32_0 : i32, i32
  }
  func.func @transform_2(%arg0: i32, %arg1: i32) -> (i32, i32) {
    %c0_i32 = arith.constant 0 : i32
    %c0_i32_0 = arith.constant 0 : i32
    %c0_i32_1 = arith.constant 0 : i32
    return %c0_i32, %c0_i32_0 : i32, i32
  }
  func.func @transform_3(%arg0: i32, %arg1: i32) -> (i32, i32) {
    %c0_i32 = arith.constant 0 : i32
    %c0_i32_0 = arith.constant 0 : i32
    %c0_i32_1 = arith.constant 0 : i32
    return %c0_i32, %c0_i32_0 : i32, i32
  }
  func.func @transform_4(%arg0: i32, %arg1: i32) -> (i32, i32, i32) {
    %c0_i32 = arith.constant 0 : i32
    %c0_i32_0 = arith.constant 0 : i32
    %c0_i32_1 = arith.constant 0 : i32
    return %arg1, %c0_i32, %c0_i32_0 : i32, i32, i32
  }
  func.func @transform_5(%arg0: i32, %arg1: i32) -> (i32, i32, i32) {
    %c0_i32 = arith.constant 0 : i32
    %c0_i32_0 = arith.constant 0 : i32
    %c0_i32_1 = arith.constant 0 : i32
    return %arg1, %c0_i32, %c0_i32_0 : i32, i32, i32
  }
  func.func @transform_6(%arg0: i32, %arg1: i32) -> (i32, i32, i32) {
    %c0_i32 = arith.constant 0 : i32
    %c0_i32_0 = arith.constant 0 : i32
    %c0_i32_1 = arith.constant 0 : i32
    return %arg1, %c0_i32, %c0_i32_0 : i32, i32, i32
  }
  func.func @transform_7(%arg0: i32, %arg1: i32) -> (i32, i32, i32) {
    %c0_i32 = arith.constant 0 : i32
    %c0_i32_0 = arith.constant 0 : i32
    %c0_i32_1 = arith.constant 0 : i32
    return %arg1, %c0_i32, %c0_i32_0 : i32, i32, i32
  }
  func.func @transform_8(%arg0: i32, %arg1: i32) -> (i32, i32, i32) {
    %c0_i32 = arith.constant 0 : i32
    %c0_i32_0 = arith.constant 0 : i32
    %c0_i32_1 = arith.constant 0 : i32
    return %arg1, %c0_i32, %c0_i32_0 : i32, i32, i32
  }
  func.func @transform_9(%arg0: i32, %arg1: i32) -> (i32, i32, i32) {
    %c0_i32 = arith.constant 0 : i32
    %c0_i32_0 = arith.constant 0 : i32
    %c0_i32_1 = arith.constant 0 : i32
    return %arg1, %c0_i32, %c0_i32_0 : i32, i32, i32
  }
  func.func @transform_10(%arg0: i32, %arg1: i32) -> (i32, i32, i32) {
    %c0_i32 = arith.constant 0 : i32
    %c0_i32_0 = arith.constant 0 : i32
    %c0_i32_1 = arith.constant 0 : i32
    return %arg1, %c0_i32, %c0_i32_0 : i32, i32, i32
  }
  func.func @transform_11(%arg0: i32, %arg1: i32) -> (i32, i32, i32) {
    %c0_i32 = arith.constant 0 : i32
    %c0_i32_0 = arith.constant 0 : i32
    %c0_i32_1 = arith.constant 0 : i32
    return %arg1, %c0_i32, %c0_i32_0 : i32, i32, i32
  }
  func.func @transform_12(%arg0: i32, %arg1: i32) -> (i32, i32, i32) {
    %c0_i32 = arith.constant 0 : i32
    %c0_i32_0 = arith.constant 0 : i32
    %c0_i32_1 = arith.constant 0 : i32
    return %arg1, %c0_i32, %c0_i32_0 : i32, i32, i32
  }
  func.func @transform_13(%arg0: i32, %arg1: i32) -> (i32, i32, i32) {
    %c0_i32 = arith.constant 0 : i32
    %c0_i32_0 = arith.constant 0 : i32
    %c0_i32_1 = arith.constant 0 : i32
    return %arg1, %c0_i32, %c0_i32_0 : i32, i32, i32
  }
  func.func @transform_14(%arg0: i32, %arg1: i32) -> (i32, i32, i32) {
    %c0_i32 = arith.constant 0 : i32
    %c0_i32_0 = arith.constant 0 : i32
    %c0_i32_1 = arith.constant 0 : i32
    return %arg1, %c0_i32, %c0_i32_0 : i32, i32, i32
  }
  func.func @transform_15(%arg0: i32, %arg1: i32) -> (i32, i32, i32) {
    %c0_i32 = arith.constant 0 : i32
    %c0_i32_0 = arith.constant 0 : i32
    %c0_i32_1 = arith.constant 0 : i32
    return %arg1, %c0_i32, %c0_i32_0 : i32, i32, i32
  }
  func.func @transform_16(%arg0: i32, %arg1: i32) -> (i32, i32) {
    %c0_i32 = arith.constant 0 : i32
    %c0_i32_0 = arith.constant 0 : i32
    return %arg0, %c0_i32 : i32, i32
  }
}

</mosaic_0001>

<llo_original>
// kernel: tpu_custom_call.1
$region0: #{tpu_custom_call.1}
  #allocation0 [shape = 'u32[]', space=smem, size = 0x4, offset = 0x4, fixed_abs, tag = 'smem constant byte address 0x4 - core index']
  #allocation1 [shape = 'u32[72,128]{1,0:T(1,128)}', space=vmem, size = 0x9000, scoped, tag = 'internal scratch']
  #allocation2 [shape = 'f32[16,64]{1,0:T(8,128)}', space=vmem, size = 0x2000, scoped, tag = 'scratch operand']
  #allocation3 [shape = 'f32[16,64]{1,0:T(8,128)}', space=vmem, size = 0x2000, scoped, tag = 'scratch operand']
  %s0 = inlined_call_operand.vmem [shape: f32[16,20], index: 0, kind: input, shape index: {}]
  %s1 = inlined_call_operand.vmem [shape: f32[20,64], index: 1, kind: input, shape index: {}]
  %s2 = inlined_call_operand.vmem [shape: f32[1,64], index: 2, kind: input, shape index: {}]
  %s3 = inlined_call_operand.vmem [shape: f32[16,64], index: 3, kind: input, shape index: {}]
  %s4 = inlined_call_operand.vmem [shape: f32[6,64,192], index: 4, kind: input, shape index: {}]
  %s5 = inlined_call_operand.vmem [shape: f32[6,1,192], index: 5, kind: input, shape index: {}]
  %s6 = inlined_call_operand.vmem [shape: f32[6,64,64], index: 6, kind: input, shape index: {}]
  %s7 = inlined_call_operand.vmem [shape: f32[6,1,64], index: 7, kind: input, shape index: {}]
  %s8 = inlined_call_operand.vmem [shape: f32[6,1,64], index: 8, kind: input, shape index: {}]
  %s9 = inlined_call_operand.vmem [shape: f32[6,1,64], index: 9, kind: input, shape index: {}]
  %s10 = inlined_call_operand.vmem [shape: f32[6,64,256], index: 10, kind: input, shape index: {}]
  %s11 = inlined_call_operand.vmem [shape: f32[6,1,256], index: 11, kind: input, shape index: {}]
  %s12 = inlined_call_operand.vmem [shape: f32[6,256,64], index: 12, kind: input, shape index: {}]
  %s13 = inlined_call_operand.vmem [shape: f32[6,1,64], index: 13, kind: input, shape index: {}]
  %s14 = inlined_call_operand.vmem [shape: f32[6,1,64], index: 14, kind: input, shape index: {}]
  %s15 = inlined_call_operand.vmem [shape: f32[6,1,64], index: 15, kind: input, shape index: {}]
  %s16 = inlined_call_operand.hbm [shape: f32[16,64], index: 16, kind: output, shape index: {}]
  %s17 = sld [smem:[#allocation0]]
  $region105: #{tpu_custom_call.1} parent=0
    _
  %s19 = ssub.s32 1, %s17
  %s20 = scalar_select 0, %s19, %s17
  $region1: #{tpu_custom_call.1} parent=0
    #allocation4 [shape = 'u8[8192]{0}', space=vmem, size = 0x2000, scoped, tag = 'output window, operand 0, single buffered']
    #allocation5 [shape = 's32[2]{0}', space=sflag, size = 0x8, scoped, tag = 'scoped memory for tpu_custom_call.1']
    %21 = vsyncpa [#allocation5], 0
    loop: start=0, step=1, limit=8
    $region2: #{tpu_custom_call.1} parent=1 // loop_pre_header
      _
    $region3: #{tpu_custom_call.1} parent=1 // loop_header
      %s23 = sphi 0, %s27
      %p24 = scmp.ge.s32.totalorder %s23, 8
      %s30 = sphi 0, %s42
      %s31 = sphi 0, %s38
      %s32 = sphi 0, %s30
      %s33 = sphi 0, %s31
      %s34 = sphi 0, %s32
      %s35 = sphi 0, %s33
      %s45 = sphi 0, %s47
      %s48 = sphi 0, %s45
      %s49 = sphi 0, %s48
      %s65 = sphi 0, %s49
      %s69 = sphi 0, %s69
      %s71 = sphi 0, %s69
      %s72 = sphi 0, %s71
      %s86 = sphi 0, %s72
      %s90 = sphi 0, %s90
      %s92 = sphi 0, %s90
      %s93 = sphi 0, %s92
      %s107 = sphi 0, %s93
      %s111 = sphi 0, %s111
      %s113 = sphi 0, %s111
      %s114 = sphi 0, %s113
      %s128 = sphi 0, %s114
      %s134 = sphi 0, %s136
      %s137 = sphi 0, %s134
      %s138 = sphi 0, %s137
      %s154 = sphi 0, %s138
      %s160 = sphi 0, %s162
      %s163 = sphi 0, %s160
      %s164 = sphi 0, %s163
      %s180 = sphi 0, %s164
      %s186 = sphi 0, %s188
      %s189 = sphi 0, %s186
      %s190 = sphi 0, %s189
      %s206 = sphi 0, %s190
      %s212 = sphi 0, %s214
      %s215 = sphi 0, %s212
      %s216 = sphi 0, %s215
      %s232 = sphi 0, %s216
      %s238 = sphi 0, %s240
      %s241 = sphi 0, %s238
      %s242 = sphi 0, %s241
      %s258 = sphi 0, %s242
      %s264 = sphi 0, %s266
      %s267 = sphi 0, %s264
      %s268 = sphi 0, %s267
      %s284 = sphi 0, %s268
      %s290 = sphi 0, %s292
      %s293 = sphi 0, %s290
      %s294 = sphi 0, %s293
      %s310 = sphi 0, %s294
      %s316 = sphi 0, %s318
      %s319 = sphi 0, %s316
      %s320 = sphi 0, %s319
      %s336 = sphi 0, %s320
      %s342 = sphi 0, %s344
      %s345 = sphi 0, %s342
      %s346 = sphi 0, %s345
      %s362 = sphi 0, %s346
      %s368 = sphi 0, %s370
      %s371 = sphi 0, %s368
      %s372 = sphi 0, %s371
      %s388 = sphi 0, %s372
      %s394 = sphi 0, %s396
      %s397 = sphi 0, %s394
      %s398 = sphi 0, %s397
      %s414 = sphi 0, %s398
      %s420 = sphi 0, %s422
      %s423 = sphi 0, %s420
      %s424 = sphi 0, %s423
      %s440 = sphi 0, %s424
      %s446 = sphi 0, %s448
      %s449 = sphi 0, %s446
      %s450 = sphi 0, %s449
      %s466 = sphi 0, %s450
    $region4: #{tpu_custom_call.1} parent=1 // loop_header_branch
      %26 = sbr.rel (%p24) target = $region8
    $region5: #{tpu_custom_call.1} parent=1 // loop_body
      %s28 = ssub.s32 %s23, 1
      %s29 = ssub.s32 %s23, 2
      %s36 = sadd.s32 1, %s31
      %p37 = scmp.ge.s32.totalorder %s36, 6
      %s38 = scalar_select %p37, 0, %s36
      %s39 = sadd.s32 1, %s30
      %s40 = scalar_select %p37, %s39, %s30
      %p41 = scmp.ge.s32.totalorder %s40, 1
      %s42 = scalar_select %p41, 0, %s40
      %s43 = ssub.s32 %s30, %s42
      %p44 = scmp.eq.s32.totalorder %s43, 0
      %s46 = sadd.s32 %s45, 1
      %s47 = scalar_select %p44, %s45, %s46
      %p50 = pneg %p44
      %p51 = scmp.eq.s32.totalorder %s23, 5
      %p52 = por %p50, %p51
      %p53 = scmp.ne.s32.totalorder %s45, %s48
      %p54 = scmp.eq.s32.totalorder %s23, 0
      %p55 = por %p53, %p54
      %p56 = scmp.ne.s32.totalorder %s45, %s48
      %p57 = scmp.eq.s32.totalorder %s28, 5
      %p58 = por %p56, %p57
      %p59 = scmp.ne.s32.totalorder %s48, %s49
      %p60 = scmp.eq.s32.totalorder %s28, 0
      %p61 = por %p59, %p60
      %p62 = scmp.ne.s32.totalorder %s48, %s49
      %p63 = scmp.eq.s32.totalorder %s29, 5
      %p64 = por %p62, %p63
      %p66 = scmp.ne.s32.totalorder %s49, %s65
      %p67 = scmp.eq.s32.totalorder %s29, 0
      %p68 = por %p66, %p67
      %s70 = sadd.s32 %s69, 1
      %p73 = scmp.eq.s32.totalorder %s23, 5
      %p74 = scmp.ne.s32.totalorder %s69, %s71
      %p75 = scmp.eq.s32.totalorder %s23, 0
      %p76 = por %p74, %p75
      %p77 = scmp.ne.s32.totalorder %s69, %s71
      %p78 = scmp.eq.s32.totalorder %s28, 5
      %p79 = por %p77, %p78
      %p80 = scmp.ne.s32.totalorder %s71, %s72
      %p81 = scmp.eq.s32.totalorder %s28, 0
      %p82 = por %p80, %p81
      %p83 = scmp.ne.s32.totalorder %s71, %s72
      %p84 = scmp.eq.s32.totalorder %s29, 5
      %p85 = por %p83, %p84
      %p87 = scmp.ne.s32.totalorder %s72, %s86
      %p88 = scmp.eq.s32.totalorder %s29, 0
      %p89 = por %p87, %p88
      %s91 = sadd.s32 %s90, 1
      %p94 = scmp.eq.s32.totalorder %s23, 5
      %p95 = scmp.ne.s32.totalorder %s90, %s92
      %p96 = scmp.eq.s32.totalorder %s23, 0
      %p97 = por %p95, %p96
      %p98 = scmp.ne.s32.totalorder %s90, %s92
      %p99 = scmp.eq.s32.totalorder %s28, 5
      %p100 = por %p98, %p99
      %p101 = scmp.ne.s32.totalorder %s92, %s93
      %p102 = scmp.eq.s32.totalorder %s28, 0
      %p103 = por %p101, %p102
      %p104 = scmp.ne.s32.totalorder %s92, %s93
      %p105 = scmp.eq.s32.totalorder %s29, 5
      %p106 = por %p104, %p105
      %p108 = scmp.ne.s32.totalorder %s93, %s107
      %p109 = scmp.eq.s32.totalorder %s29, 0
      %p110 = por %p108, %p109
      %s112 = sadd.s32 %s111, 1
      %p115 = scmp.eq.s32.totalorder %s23, 5
      %p116 = scmp.ne.s32.totalorder %s111, %s113
      %p117 = scmp.eq.s32.totalorder %s23, 0
      %p118 = por %p116, %p117
      %p119 = scmp.ne.s32.totalorder %s111, %s113
      %p120 = scmp.eq.s32.totalorder %s28, 5
      %p121 = por %p119, %p120
      %p122 = scmp.ne.s32.totalorder %s113, %s114
      %p123 = scmp.eq.s32.totalorder %s28, 0
      %p124 = por %p122, %p123
      %p125 = scmp.ne.s32.totalorder %s113, %s114
      %p126 = scmp.eq.s32.totalorder %s29, 5
      %p127 = por %p125, %p126
      %p129 = scmp.ne.s32.totalorder %s114, %s128
      %p130 = scmp.eq.s32.totalorder %s29, 0
      %p131 = por %p129, %p130
      %s132 = ssub.s32 %s31, %s38
      %p133 = scmp.eq.s32.totalorder %s132, 0
      %s135 = sadd.s32 %s134, 1
      %s136 = scalar_select %p133, %s134, %s135
      %p139 = pneg %p133
      %p140 = scmp.eq.s32.totalorder %s23, 5
      %p141 = por %p139, %p140
      %p142 = scmp.ne.s32.totalorder %s134, %s137
      %p143 = scmp.eq.s32.totalorder %s23, 0
      %p144 = por %p142, %p143
      %p145 = scmp.ne.s32.totalorder %s134, %s137
      %p146 = scmp.eq.s32.totalorder %s28, 5
      %p147 = por %p145, %p146
      %p148 = scmp.ne.s32.totalorder %s137, %s138
      %p149 = scmp.eq.s32.totalorder %s28, 0
      %p150 = por %p148, %p149
      %p151 = scmp.ne.s32.totalorder %s137, %s138
      %p152 = scmp.eq.s32.totalorder %s29, 5
      %p153 = por %p151, %p152
      %p155 = scmp.ne.s32.totalorder %s138, %s154
      %p156 = scmp.eq.s32.totalorder %s29, 0
      %p157 = por %p155, %p156
      %s158 = ssub.s32 %s31, %s38
      %p159 = scmp.eq.s32.totalorder %s158, 0
      %s161 = sadd.s32 %s160, 1
      %s162 = scalar_select %p159, %s160, %s161
      %p165 = pneg %p159
      %p166 = scmp.eq.s32.totalorder %s23, 5
      %p167 = por %p165, %p166
      %p168 = scmp.ne.s32.totalorder %s160, %s163
      %p169 = scmp.eq.s32.totalorder %s23, 0
      %p170 = por %p168, %p169
      %p171 = scmp.ne.s32.totalorder %s160, %s163
      %p172 = scmp.eq.s32.totalorder %s28, 5
      %p173 = por %p171, %p172
      %p174 = scmp.ne.s32.totalorder %s163, %s164
      %p175 = scmp.eq.s32.totalorder %s28, 0
      %p176 = por %p174, %p175
      %p177 = scmp.ne.s32.totalorder %s163, %s164
      %p178 = scmp.eq.s32.totalorder %s29, 5
      %p179 = por %p177, %p178
      %p181 = scmp.ne.s32.totalorder %s164, %s180
      %p182 = scmp.eq.s32.totalorder %s29, 0
      %p183 = por %p181, %p182
      %s184 = ssub.s32 %s31, %s38
      %p185 = scmp.eq.s32.totalorder %s184, 0
      %s187 = sadd.s32 %s186, 1
      %s188 = scalar_select %p185, %s186, %s187
      %p191 = pneg %p185
      %p192 = scmp.eq.s32.totalorder %s23, 5
      %p193 = por %p191, %p192
      %p194 = scmp.ne.s32.totalorder %s186, %s189
      %p195 = scmp.eq.s32.totalorder %s23, 0
      %p196 = por %p194, %p195
      %p197 = scmp.ne.s32.totalorder %s186, %s189
      %p198 = scmp.eq.s32.totalorder %s28, 5
      %p199 = por %p197, %p198
      %p200 = scmp.ne.s32.totalorder %s189, %s190
      %p201 = scmp.eq.s32.totalorder %s28, 0
      %p202 = por %p200, %p201
      %p203 = scmp.ne.s32.totalorder %s189, %s190
      %p204 = scmp.eq.s32.totalorder %s29, 5
      %p205 = por %p203, %p204
      %p207 = scmp.ne.s32.totalorder %s190, %s206
      %p208 = scmp.eq.s32.totalorder %s29, 0
      %p209 = por %p207, %p208
      %s210 = ssub.s32 %s31, %s38
      %p211 = scmp.eq.s32.totalorder %s210, 0
      %s213 = sadd.s32 %s212, 1
      %s214 = scalar_select %p211, %s212, %s213
      %p217 = pneg %p211
      %p218 = scmp.eq.s32.totalorder %s23, 5
      %p219 = por %p217, %p218
      %p220 = scmp.ne.s32.totalorder %s212, %s215
      %p221 = scmp.eq.s32.totalorder %s23, 0
      %p222 = por %p220, %p221
      %p223 = scmp.ne.s32.totalorder %s212, %s215
      %p224 = scmp.eq.s32.totalorder %s28, 5
      %p225 = por %p223, %p224
      %p226 = scmp.ne.s32.totalorder %s215, %s216
      %p227 = scmp.eq.s32.totalorder %s28, 0
      %p228 = por %p226, %p227
      %p229 = scmp.ne.s32.totalorder %s215, %s216
      %p230 = scmp.eq.s32.totalorder %s29, 5
      %p231 = por %p229, %p230
      %p233 = scmp.ne.s32.totalorder %s216, %s232
      %p234 = scmp.eq.s32.totalorder %s29, 0
      %p235 = por %p233, %p234
      %s236 = ssub.s32 %s31, %s38
      %p237 = scmp.eq.s32.totalorder %s236, 0
      %s239 = sadd.s32 %s238, 1
      %s240 = scalar_select %p237, %s238, %s239
      %p243 = pneg %p237
      %p244 = scmp.eq.s32.totalorder %s23, 5
      %p245 = por %p243, %p244
      %p246 = scmp.ne.s32.totalorder %s238, %s241
      %p247 = scmp.eq.s32.totalorder %s23, 0
      %p248 = por %p246, %p247
      %p249 = scmp.ne.s32.totalorder %s238, %s241
      %p250 = scmp.eq.s32.totalorder %s28, 5
      %p251 = por %p249, %p250
      %p252 = scmp.ne.s32.totalorder %s241, %s242
      %p253 = scmp.eq.s32.totalorder %s28, 0
      %p254 = por %p252, %p253
      %p255 = scmp.ne.s32.totalorder %s241, %s242
      %p256 = scmp.eq.s32.totalorder %s29, 5
      %p257 = por %p255, %p256
      %p259 = scmp.ne.s32.totalorder %s242, %s258
      %p260 = scmp.eq.s32.totalorder %s29, 0
      %p261 = por %p259, %p260
      %s262 = ssub.s32 %s31, %s38
      %p263 = scmp.eq.s32.totalorder %s262, 0
      %s265 = sadd.s32 %s264, 1
      %s266 = scalar_select %p263, %s264, %s265
      %p269 = pneg %p263
      %p270 = scmp.eq.s32.totalorder %s23, 5
      %p271 = por %p269, %p270
      %p272 = scmp.ne.s32.totalorder %s264, %s267
      %p273 = scmp.eq.s32.totalorder %s23, 0
      %p274 = por %p272, %p273
      %p275 = scmp.ne.s32.totalorder %s264, %s267
      %p276 = scmp.eq.s32.totalorder %s28, 5
      %p277 = por %p275, %p276
      %p278 = scmp.ne.s32.totalorder %s267, %s268
      %p279 = scmp.eq.s32.totalorder %s28, 0
      %p280 = por %p278, %p279
      %p281 = scmp.ne.s32.totalorder %s267, %s268
      %p282 = scmp.eq.s32.totalorder %s29, 5
      %p283 = por %p281, %p282
      %p285 = scmp.ne.s32.totalorder %s268, %s284
      %p286 = scmp.eq.s32.totalorder %s29, 0
      %p287 = por %p285, %p286
      %s288 = ssub.s32 %s31, %s38
      %p289 = scmp.eq.s32.totalorder %s288, 0
      %s291 = sadd.s32 %s290, 1
      %s292 = scalar_select %p289, %s290, %s291
      %p295 = pneg %p289
      %p296 = scmp.eq.s32.totalorder %s23, 5
      %p297 = por %p295, %p296
      %p298 = scmp.ne.s32.totalorder %s290, %s293
      %p299 = scmp.eq.s32.totalorder %s23, 0
      %p300 = por %p298, %p299
      %p301 = scmp.ne.s32.totalorder %s290, %s293
      %p302 = scmp.eq.s32.totalorder %s28, 5
      %p303 = por %p301, %p302
      %p304 = scmp.ne.s32.totalorder %s293, %s294
      %p305 = scmp.eq.s32.totalorder %s28, 0
      %p306 = por %p304, %p305
      %p307 = scmp.ne.s32.totalorder %s293, %s294
      %p308 = scmp.eq.s32.totalorder %s29, 5
      %p309 = por %p307, %p308
      %p311 = scmp.ne.s32.totalorder %s294, %s310
      %p312 = scmp.eq.s32.totalorder %s29, 0
      %p313 = por %p311, %p312
      %s314 = ssub.s32 %s31, %s38
      %p315 = scmp.eq.s32.totalorder %s314, 0
      %s317 = sadd.s32 %s316, 1
      %s318 = scalar_select %p315, %s316, %s317
      %p321 = pneg %p315
      %p322 = scmp.eq.s32.totalorder %s23, 5
      %p323 = por %p321, %p322
      %p324 = scmp.ne.s32.totalorder %s316, %s319
      %p325 = scmp.eq.s32.totalorder %s23, 0
      %p326 = por %p324, %p325
      %p327 = scmp.ne.s32.totalorder %s316, %s319
      %p328 = scmp.eq.s32.totalorder %s28, 5
      %p329 = por %p327, %p328
      %p330 = scmp.ne.s32.totalorder %s319, %s320
      %p331 = scmp.eq.s32.totalorder %s28, 0
      %p332 = por %p330, %p331
      %p333 = scmp.ne.s32.totalorder %s319, %s320
      %p334 = scmp.eq.s32.totalorder %s29, 5
      %p335 = por %p333, %p334
      %p337 = scmp.ne.s32.totalorder %s320, %s336
      %p338 = scmp.eq.s32.totalorder %s29, 0
      %p339 = por %p337, %p338
      %s340 = ssub.s32 %s31, %s38
      %p341 = scmp.eq.s32.totalorder %s340, 0
      %s343 = sadd.s32 %s342, 1
      %s344 = scalar_select %p341, %s342, %s343
      %p347 = pneg %p341
      %p348 = scmp.eq.s32.totalorder %s23, 5
      %p349 = por %p347, %p348
      %p350 = scmp.ne.s32.totalorder %s342, %s345
      %p351 = scmp.eq.s32.totalorder %s23, 0
      %p352 = por %p350, %p351
      %p353 = scmp.ne.s32.totalorder %s342, %s345
      %p354 = scmp.eq.s32.totalorder %s28, 5
      %p355 = por %p353, %p354
      %p356 = scmp.ne.s32.totalorder %s345, %s346
      %p357 = scmp.eq.s32.totalorder %s28, 0
      %p358 = por %p356, %p357
      %p359 = scmp.ne.s32.totalorder %s345, %s346
      %p360 = scmp.eq.s32.totalorder %s29, 5
      %p361 = por %p359, %p360
      %p363 = scmp.ne.s32.totalorder %s346, %s362
      %p364 = scmp.eq.s32.totalorder %s29, 0
      %p365 = por %p363, %p364
      %s366 = ssub.s32 %s31, %s38
      %p367 = scmp.eq.s32.totalorder %s366, 0
      %s369 = sadd.s32 %s368, 1
      %s370 = scalar_select %p367, %s368, %s369
      %p373 = pneg %p367
      %p374 = scmp.eq.s32.totalorder %s23, 5
      %p375 = por %p373, %p374
      %p376 = scmp.ne.s32.totalorder %s368, %s371
      %p377 = scmp.eq.s32.totalorder %s23, 0
      %p378 = por %p376, %p377
      %p379 = scmp.ne.s32.totalorder %s368, %s371
      %p380 = scmp.eq.s32.totalorder %s28, 5
      %p381 = por %p379, %p380
      %p382 = scmp.ne.s32.totalorder %s371, %s372
      %p383 = scmp.eq.s32.totalorder %s28, 0
      %p384 = por %p382, %p383
      %p385 = scmp.ne.s32.totalorder %s371, %s372
      %p386 = scmp.eq.s32.totalorder %s29, 5
      %p387 = por %p385, %p386
      %p389 = scmp.ne.s32.totalorder %s372, %s388
      %p390 = scmp.eq.s32.totalorder %s29, 0
      %p391 = por %p389, %p390
      %s392 = ssub.s32 %s31, %s38
      %p393 = scmp.eq.s32.totalorder %s392, 0
      %s395 = sadd.s32 %s394, 1
      %s396 = scalar_select %p393, %s394, %s395
      %p399 = pneg %p393
      %p400 = scmp.eq.s32.totalorder %s23, 5
      %p401 = por %p399, %p400
      %p402 = scmp.ne.s32.totalorder %s394, %s397
      %p403 = scmp.eq.s32.totalorder %s23, 0
      %p404 = por %p402, %p403
      %p405 = scmp.ne.s32.totalorder %s394, %s397
      %p406 = scmp.eq.s32.totalorder %s28, 5
      %p407 = por %p405, %p406
      %p408 = scmp.ne.s32.totalorder %s397, %s398
      %p409 = scmp.eq.s32.totalorder %s28, 0
      %p410 = por %p408, %p409
      %p411 = scmp.ne.s32.totalorder %s397, %s398
      %p412 = scmp.eq.s32.totalorder %s29, 5
      %p413 = por %p411, %p412
      %p415 = scmp.ne.s32.totalorder %s398, %s414
      %p416 = scmp.eq.s32.totalorder %s29, 0
      %p417 = por %p415, %p416
      %s418 = ssub.s32 %s31, %s38
      %p419 = scmp.eq.s32.totalorder %s418, 0
      %s421 = sadd.s32 %s420, 1
      %s422 = scalar_select %p419, %s420, %s421
      %p425 = pneg %p419
      %p426 = scmp.eq.s32.totalorder %s23, 5
      %p427 = por %p425, %p426
      %p428 = scmp.ne.s32.totalorder %s420, %s423
      %p429 = scmp.eq.s32.totalorder %s23, 0
      %p430 = por %p428, %p429
      %p431 = scmp.ne.s32.totalorder %s420, %s423
      %p432 = scmp.eq.s32.totalorder %s28, 5
      %p433 = por %p431, %p432
      %p434 = scmp.ne.s32.totalorder %s423, %s424
      %p435 = scmp.eq.s32.totalorder %s28, 0
      %p436 = por %p434, %p435
      %p437 = scmp.ne.s32.totalorder %s423, %s424
      %p438 = scmp.eq.s32.totalorder %s29, 5
      %p439 = por %p437, %p438
      %p441 = scmp.ne.s32.totalorder %s424, %s440
      %p442 = scmp.eq.s32.totalorder %s29, 0
      %p443 = por %p441, %p442
      %s444 = ssub.s32 %s30, %s42
      %p445 = scmp.eq.s32.totalorder %s444, 0
      %s447 = sadd.s32 %s446, 1
      %s448 = scalar_select %p445, %s446, %s447
      %p451 = pneg %p445
      %p452 = scmp.eq.s32.totalorder %s23, 5
      %p453 = por %p451, %p452
      %p454 = scmp.ne.s32.totalorder %s446, %s449
      %p455 = scmp.eq.s32.totalorder %s23, 0
      %p456 = por %p454, %p455
      %p457 = scmp.ne.s32.totalorder %s446, %s449
      %p458 = scmp.eq.s32.totalorder %s28, 5
      %p459 = por %p457, %p458
      %p460 = scmp.ne.s32.totalorder %s449, %s450
      %p461 = scmp.eq.s32.totalorder %s28, 0
      %p462 = por %p460, %p461
      %p463 = scmp.ne.s32.totalorder %s449, %s450
      %p464 = scmp.eq.s32.totalorder %s29, 5
      %p465 = por %p463, %p464
      %p467 = scmp.ne.s32.totalorder %s450, %s466
      %p468 = scmp.eq.s32.totalorder %s29, 0
      %p469 = por %p467, %p468
      %p470 = scmp.le.s32.totalorder 1, %s23
      %p471 = scmp.lt.s32.totalorder %s23, 7
      %p472 = pnand %p470, %p471
      %p473 = pneg %p472
      // Predicated region
      $region9: #{tpu_custom_call.1} parent=5 // pred_check
        _
      $region10: #{tpu_custom_call.1} parent=5 // pred_check_branch
        %475 = sbr.rel (%p472) target = $region12
      $region11: #{tpu_custom_call.1} parent=5 // pred_region
        %s476 = ssub.s32 %s23, 1
        // Predicated region
        $region13: #{tpu_custom_call.1} parent=11 // pred_check
          %p477 = pneg %p61
        $region14: #{tpu_custom_call.1} parent=11 // pred_check_branch
          %479 = sbr.rel (%p477) target = $region16
        $region15: #{tpu_custom_call.1} parent=11 // pred_region
          %s480 = smul.u32 2, %s32
          %p481 = scmp.lt.s32.totalorder %s480, 1
          %s482 = scalar_select %p481, %s480, 1
          %s483 = smul.addr %s482, 8
          %s484 = scalar_lea.vmem %s0, %s483
          %s485 = smul.u32 2, %s32
        $region16: #{tpu_custom_call.1} parent=11 // pred_fallthru
          _
        // Predicated region
        $region17: #{tpu_custom_call.1} parent=11 // pred_check
          %p486 = pneg %p82
        $region18: #{tpu_custom_call.1} parent=11 // pred_check_branch
          %488 = sbr.rel (%p486) target = $region20
        $region19: #{tpu_custom_call.1} parent=11 // pred_region
          _
        $region20: #{tpu_custom_call.1} parent=11 // pred_fallthru
          _
        // Predicated region
        $region21: #{tpu_custom_call.1} parent=11 // pred_check
          %p489 = pneg %p103
        $region22: #{tpu_custom_call.1} parent=11 // pred_check_branch
          %491 = sbr.rel (%p489) target = $region24
        $region23: #{tpu_custom_call.1} parent=11 // pred_region
          _
        $region24: #{tpu_custom_call.1} parent=11 // pred_fallthru
          _
        // Predicated region
        $region25: #{tpu_custom_call.1} parent=11 // pred_check
          %p492 = pneg %p124
        $region26: #{tpu_custom_call.1} parent=11 // pred_check_branch
          %494 = sbr.rel (%p492) target = $region28
        $region27: #{tpu_custom_call.1} parent=11 // pred_region
          _
        $region28: #{tpu_custom_call.1} parent=11 // pred_fallthru
          _
      $region12: #{tpu_custom_call.1} parent=5 // pred_fallthru
        _
      %p495 = scmp.lt.s32.totalorder %s23, 6
      // Predicated region
      $region29: #{tpu_custom_call.1} parent=5 // pred_check
        %p496 = pneg %p495
      $region30: #{tpu_custom_call.1} parent=5 // pred_check_branch
        %498 = sbr.rel (%p496) target = $region32
      $region31: #{tpu_custom_call.1} parent=5 // pred_region
        // Predicated region
        $region33: #{tpu_custom_call.1} parent=31 // pred_check
          %p499 = pneg %p144
        $region34: #{tpu_custom_call.1} parent=31 // pred_check_branch
          %501 = sbr.rel (%p499) target = $region36
        $region35: #{tpu_custom_call.1} parent=31 // pred_region
          %p502 = scmp.lt.s32.totalorder %s31, 5
          %s503 = scalar_select %p502, %s31, 5
          %s504 = smul.addr %s503, 16
          %s505 = smul.addr %s504, 8
          %s506 = scalar_lea.vmem %s4, %s505
        $region36: #{tpu_custom_call.1} parent=31 // pred_fallthru
          _
        // Predicated region
        $region37: #{tpu_custom_call.1} parent=31 // pred_check
          %p507 = pneg %p170
        $region38: #{tpu_custom_call.1} parent=31 // pred_check_branch
          %509 = sbr.rel (%p507) target = $region40
        $region39: #{tpu_custom_call.1} parent=31 // pred_region
          %p510 = scmp.lt.s32.totalorder %s31, 5
          %s511 = scalar_select %p510, %s31, 5
          %s512 = smul.addr %s511, 2
          %s513 = scalar_lea.vmem %s5, %s512
        $region40: #{tpu_custom_call.1} parent=31 // pred_fallthru
          _
        // Predicated region
        $region41: #{tpu_custom_call.1} parent=31 // pred_check
          %p514 = pneg %p196
        $region42: #{tpu_custom_call.1} parent=31 // pred_check_branch
          %516 = sbr.rel (%p514) target = $region44
        $region43: #{tpu_custom_call.1} parent=31 // pred_region
          %p517 = scmp.lt.s32.totalorder %s31, 5
          %s518 = scalar_select %p517, %s31, 5
          %s519 = smul.addr %s518, 8
          %s520 = smul.addr %s519, 8
          %s521 = scalar_lea.vmem %s6, %s520
        $region44: #{tpu_custom_call.1} parent=31 // pred_fallthru
          _
        // Predicated region
        $region45: #{tpu_custom_call.1} parent=31 // pred_check
          %p522 = pneg %p222
        $region46: #{tpu_custom_call.1} parent=31 // pred_check_branch
          %524 = sbr.rel (%p522) target = $region48
        $region47: #{tpu_custom_call.1} parent=31 // pred_region
          %p525 = scmp.lt.s32.totalorder %s31, 5
          %s526 = scalar_select %p525, %s31, 5
          %s527 = scalar_lea.vmem %s7, %s526
        $region48: #{tpu_custom_call.1} parent=31 // pred_fallthru
          _
        // Predicated region
        $region49: #{tpu_custom_call.1} parent=31 // pred_check
          %p528 = pneg %p248
        $region50: #{tpu_custom_call.1} parent=31 // pred_check_branch
          %530 = sbr.rel (%p528) target = $region52
        $region51: #{tpu_custom_call.1} parent=31 // pred_region
          %p531 = scmp.lt.s32.totalorder %s31, 5
          %s532 = scalar_select %p531, %s31, 5
          %s533 = scalar_lea.vmem %s8, %s532
        $region52: #{tpu_custom_call.1} parent=31 // pred_fallthru
          _
        // Predicated region
        $region53: #{tpu_custom_call.1} parent=31 // pred_check
          %p534 = pneg %p274
        $region54: #{tpu_custom_call.1} parent=31 // pred_check_branch
          %536 = sbr.rel (%p534) target = $region56
        $region55: #{tpu_custom_call.1} parent=31 // pred_region
          %p537 = scmp.lt.s32.totalorder %s31, 5
          %s538 = scalar_select %p537, %s31, 5
          %s539 = scalar_lea.vmem %s9, %s538
        $region56: #{tpu_custom_call.1} parent=31 // pred_fallthru
          _
        // Predicated region
        $region57: #{tpu_custom_call.1} parent=31 // pred_check
          %p540 = pneg %p300
        $region58: #{tpu_custom_call.1} parent=31 // pred_check_branch
          %542 = sbr.rel (%p540) target = $region60
        $region59: #{tpu_custom_call.1} parent=31 // pred_region
          %p543 = scmp.lt.s32.totalorder %s31, 5
          %s544 = scalar_select %p543, %s31, 5
          %s545 = smul.addr %s544, 16
          %s546 = smul.addr %s545, 8
          %s547 = scalar_lea.vmem %s10, %s546
        $region60: #{tpu_custom_call.1} parent=31 // pred_fallthru
          _
        // Predicated region
        $region61: #{tpu_custom_call.1} parent=31 // pred_check
          %p548 = pneg %p326
        $region62: #{tpu_custom_call.1} parent=31 // pred_check_branch
          %550 = sbr.rel (%p548) target = $region64
        $region63: #{tpu_custom_call.1} parent=31 // pred_region
          %p551 = scmp.lt.s32.totalorder %s31, 5
          %s552 = scalar_select %p551, %s31, 5
          %s553 = smul.addr %s552, 2
          %s554 = scalar_lea.vmem %s11, %s553
        $region64: #{tpu_custom_call.1} parent=31 // pred_fallthru
          _
        // Predicated region
        $region65: #{tpu_custom_call.1} parent=31 // pred_check
          %p555 = pneg %p352
        $region66: #{tpu_custom_call.1} parent=31 // pred_check_branch
          %557 = sbr.rel (%p555) target = $region68
        $region67: #{tpu_custom_call.1} parent=31 // pred_region
          %p558 = scmp.lt.s32.totalorder %s31, 5
          %s559 = scalar_select %p558, %s31, 5
          %s560 = smul.addr %s559, 32
          %s561 = smul.addr %s560, 8
          %s562 = scalar_lea.vmem %s12, %s561
        $region68: #{tpu_custom_call.1} parent=31 // pred_fallthru
          _
        // Predicated region
        $region69: #{tpu_custom_call.1} parent=31 // pred_check
          %p563 = pneg %p378
        $region70: #{tpu_custom_call.1} parent=31 // pred_check_branch
          %565 = sbr.rel (%p563) target = $region72
        $region71: #{tpu_custom_call.1} parent=31 // pred_region
          %p566 = scmp.lt.s32.totalorder %s31, 5
          %s567 = scalar_select %p566, %s31, 5
          %s568 = scalar_lea.vmem %s13, %s567
        $region72: #{tpu_custom_call.1} parent=31 // pred_fallthru
          _
        // Predicated region
        $region73: #{tpu_custom_call.1} parent=31 // pred_check
          %p569 = pneg %p404
        $region74: #{tpu_custom_call.1} parent=31 // pred_check_branch
          %571 = sbr.rel (%p569) target = $region76
        $region75: #{tpu_custom_call.1} parent=31 // pred_region
          %p572 = scmp.lt.s32.totalorder %s31, 5
          %s573 = scalar_select %p572, %s31, 5
          %s574 = scalar_lea.vmem %s14, %s573
        $region76: #{tpu_custom_call.1} parent=31 // pred_fallthru
          _
        // Predicated region
        $region77: #{tpu_custom_call.1} parent=31 // pred_check
          %p575 = pneg %p430
        $region78: #{tpu_custom_call.1} parent=31 // pred_check_branch
          %577 = sbr.rel (%p575) target = $region80
        $region79: #{tpu_custom_call.1} parent=31 // pred_region
          %p578 = scmp.lt.s32.totalorder %s31, 5
          %s579 = scalar_select %p578, %s31, 5
          %s580 = scalar_lea.vmem %s15, %s579
        $region80: #{tpu_custom_call.1} parent=31 // pred_fallthru
          _
      $region32: #{tpu_custom_call.1} parent=5 // pred_fallthru
        _
      %p581 = scmp.le.s32.totalorder 1, %s23
      %p582 = scmp.lt.s32.totalorder %s23, 7
      %p583 = pnand %p581, %p582
      %p584 = pneg %p583
      // Predicated region
      $region81: #{tpu_custom_call.1} parent=5 // pred_check
        _
      $region82: #{tpu_custom_call.1} parent=5 // pred_check_branch
        %586 = sbr.rel (%p583) target = $region84
      $region83: #{tpu_custom_call.1} parent=5 // pred_region
        %s587 = ssub.s32 %s23, 1
        %s588 = smul.u32 2, %s32
        %p589 = scmp.lt.s32.totalorder %s588, 1
        %s590 = scalar_select %p589, %s588, 1
        %s591 = smul.addr %s590, 8
        %s592 = scalar_lea.vmem %s0, %s591
        %p593 = pneg %p61
        %p594 = pneg %p58
        %p595 = pneg %p82
        %p596 = pneg %p79
        %p597 = pneg %p103
        %p598 = pneg %p100
        %p599 = pneg %p124
        %p600 = pneg %p121
        %p601 = scmp.lt.s32.totalorder %s33, 5
        %s602 = scalar_select %p601, %s33, 5
        %s603 = smul.addr %s602, 16
        %s604 = smul.addr %s603, 8
        %s605 = scalar_lea.vmem %s4, %s604
        %p606 = pneg %p150
        %p607 = pneg %p147
        %p608 = scmp.lt.s32.totalorder %s33, 5
        %s609 = scalar_select %p608, %s33, 5
        %s610 = smul.addr %s609, 2
        %s611 = scalar_lea.vmem %s5, %s610
        %p612 = pneg %p176
        %p613 = pneg %p173
        %p614 = scmp.lt.s32.totalorder %s33, 5
        %s615 = scalar_select %p614, %s33, 5
        %s616 = smul.addr %s615, 8
        %s617 = smul.addr %s616, 8
        %s618 = scalar_lea.vmem %s6, %s617
        %p619 = pneg %p202
        %p620 = pneg %p199
        %p621 = scmp.lt.s32.totalorder %s33, 5
        %s622 = scalar_select %p621, %s33, 5
        %s623 = scalar_lea.vmem %s7, %s622
        %p624 = pneg %p228
        %p625 = pneg %p225
        %p626 = scmp.lt.s32.totalorder %s33, 5
        %s627 = scalar_select %p626, %s33, 5
        %s628 = scalar_lea.vmem %s8, %s627
        %p629 = pneg %p254
        %p630 = pneg %p251
        %p631 = scmp.lt.s32.totalorder %s33, 5
        %s632 = scalar_select %p631, %s33, 5
        %s633 = scalar_lea.vmem %s9, %s632
        %p634 = pneg %p280
        %p635 = pneg %p277
        %p636 = scmp.lt.s32.totalorder %s33, 5
        %s637 = scalar_select %p636, %s33, 5
        %s638 = smul.addr %s637, 16
        %s639 = smul.addr %s638, 8
        %s640 = scalar_lea.vmem %s10, %s639
        %p641 = pneg %p306
        %p642 = pneg %p303
        %p643 = scmp.lt.s32.totalorder %s33, 5
        %s644 = scalar_select %p643, %s33, 5
        %s645 = smul.addr %s644, 2
        %s646 = scalar_lea.vmem %s11, %s645
        %p647 = pneg %p332
        %p648 = pneg %p329
        %p649 = scmp.lt.s32.totalorder %s33, 5
        %s650 = scalar_select %p649, %s33, 5
        %s651 = smul.addr %s650, 32
        %s652 = smul.addr %s651, 8
        %s653 = scalar_lea.vmem %s12, %s652
        %p654 = pneg %p358
        %p655 = pneg %p355
        %p656 = scmp.lt.s32.totalorder %s33, 5
        %s657 = scalar_select %p656, %s33, 5
        %s658 = scalar_lea.vmem %s13, %s657
        %p659 = pneg %p384
        %p660 = pneg %p381
        %p661 = scmp.lt.s32.totalorder %s33, 5
        %s662 = scalar_select %p661, %s33, 5
        %s663 = scalar_lea.vmem %s14, %s662
        %p664 = pneg %p410
        %p665 = pneg %p407
        %p666 = scmp.lt.s32.totalorder %s33, 5
        %s667 = scalar_select %p666, %s33, 5
        %s668 = scalar_lea.vmem %s15, %s667
        %p669 = pneg %p436
        %p670 = pneg %p433
        %p671 = pneg %p462
        %p672 = pneg %p459
        %s673 = smul.u32 2, %s32
        %p674 = scmp.lt.s32.totalorder %s673, 1
        %s675 = scalar_select %p674, %s673, 1
        %s676 = smul.addr %s675, 8
        %s677 = scalar_lea.vmem %s0, %s676
        %s678 = smul.u32 2, %s32
        %p679 = scmp.lt.s32.totalorder %s33, 5
        %s680 = scalar_select %p679, %s33, 5
        %s681 = smul.addr %s680, 16
        %s682 = smul.addr %s681, 8
        %s683 = scalar_lea.vmem %s4, %s682
        %p684 = scmp.lt.s32.totalorder %s33, 5
        %s685 = scalar_select %p684, %s33, 5
        %s686 = smul.addr %s685, 2
        %s687 = scalar_lea.vmem %s5, %s686
        %p688 = scmp.lt.s32.totalorder %s33, 5
        %s689 = scalar_select %p688, %s33, 5
        %s690 = smul.addr %s689, 8
        %s691 = smul.addr %s690, 8
        %s692 = scalar_lea.vmem %s6, %s691
        %p693 = scmp.lt.s32.totalorder %s33, 5
        %s694 = scalar_select %p693, %s33, 5
        %s695 = scalar_lea.vmem %s7, %s694
        %p696 = scmp.lt.s32.totalorder %s33, 5
        %s697 = scalar_select %p696, %s33, 5
        %s698 = scalar_lea.vmem %s8, %s697
        %p699 = scmp.lt.s32.totalorder %s33, 5
        %s700 = scalar_select %p699, %s33, 5
        %s701 = scalar_lea.vmem %s9, %s700
        %p702 = scmp.lt.s32.totalorder %s33, 5
        %s703 = scalar_select %p702, %s33, 5
        %s704 = smul.addr %s703, 16
        %s705 = smul.addr %s704, 8
        %s706 = scalar_lea.vmem %s10, %s705
        %p707 = scmp.lt.s32.totalorder %s33, 5
        %s708 = scalar_select %p707, %s33, 5
        %s709 = smul.addr %s708, 2
        %s710 = scalar_lea.vmem %s11, %s709
        %p711 = scmp.lt.s32.totalorder %s33, 5
        %s712 = scalar_select %p711, %s33, 5
        %s713 = smul.addr %s712, 32
        %s714 = smul.addr %s713, 8
        %s715 = scalar_lea.vmem %s12, %s714
        %p716 = scmp.lt.s32.totalorder %s33, 5
        %s717 = scalar_select %p716, %s33, 5
        %s718 = scalar_lea.vmem %s13, %s717
        %p719 = scmp.lt.s32.totalorder %s33, 5
        %s720 = scalar_select %p719, %s33, 5
        %s721 = scalar_lea.vmem %s14, %s720
        %p722 = scmp.lt.s32.totalorder %s33, 5
        %s723 = scalar_select %p722, %s33, 5
        %s724 = scalar_lea.vmem %s15, %s723
        %s725 = smul.u32 2, %s32
        %p726 = scmp.eq.s32.totalorder %s33, 0
        // Predicated region
        $region85: #{tpu_custom_call.1} parent=83 // pred_check
          %p727 = pneg %p726
        $region86: #{tpu_custom_call.1} parent=83 // pred_check_branch
          %729 = sbr.rel (%p727) target = $region88
        $region87: #{tpu_custom_call.1} parent=83 // pred_region
          %v730 = vld [vmem:[%s677] sm:$0xff]
          %v731 = vld [vmem:[%s677 + $0x8] sm:$0xff]
          %v732 = vld [vmem:[%s1] sm:$0xff]
          %v733 = vld [vmem:[%s1 + $0x8] sm:$0xff]
          %v734 = vld [vmem:[%s1 + $0x10] sm:$0xf]
          %v735 = vld [vmem:[%s2] sm:$0x1]
          %v737 = vperm.slane %v735, 0
          %vm739 = vcmask 162816
          %v741 = vsel %vm739, %v730, 0
          %v744 = vsel %vm739, %v731, 0
          %vm746 = vcmask 1043456
          %v748 = vsel %vm746, %v734, 0
          %750 = vmatpush.msra.mxu0 0.0
          %751 = vmatpush.msra.mxu0 0.0
          %752 = vmatpush.msra.mxu0 0.0
          %753 = vmatpush.msra.mxu0 0.0
          %754 = vmatpush.msra.mxu0 0.0
          %755 = vmatpush.msra.mxu0 0.0
          %756 = vmatpush.msra.mxu0 0.0
          %757 = vmatpush.msra.mxu0 0.0
          %758 = vmatpush.msra.mxu0 0.0
          %759 = vmatpush.msra.mxu0 0.0
          %760 = vmatpush.msra.mxu0 0.0
          %761 = vmatpush.msra.mxu0 0.0
          %762 = vmatpush.msra.mxu0 0.0
          %763 = vmatpush.msra.mxu0 %v748
          %764 = vmatpush.msra.mxu0 %v733
          %765 = vmatpush.msra.mxu0 %v732
          %766 = vmatmul.f32.gmra.mxu0 %v741
          %v767 = vpop.f32.mrf.mxu0
          %v768 = vadd.f32 %v737, %v767
          %769 = vmatmul.f32.gmra.mxu0 %v744
          %v770 = vpop.f32.mrf.mxu0
          %v771 = vadd.f32 %v737, %v770
          %772 = vdwg.mxu0
          %v773 = vld [vmem:[%s3] sm:$0xff]
          %v774 = vld [vmem:[%s3 + $0x8] sm:$0xff]
          %v775 = vadd.f32 %v768, %v773
          %v776 = vadd.f32 %v771, %v774
          %vm777 = vcmask 523264
          %778 = vst.msk [vmem:[#allocation2] sm:$0xff] %vm777, %v775
          %779 = vst.msk [vmem:[#allocation2 + $0x8] sm:$0xff] %vm777, %v776
        $region88: #{tpu_custom_call.1} parent=83 // pred_fallthru
          _
        %v780 = vld [vmem:[#allocation2] sm:$0xff]
        %v781 = vld [vmem:[#allocation2 + $0x8] sm:$0xff]
        %v782 = vld [vmem:[%s683] sm:$0xff]
        %v783 = vld [vmem:[%s683 + $0x8] sm:$0xff]
        %v784 = vld [vmem:[%s683 + $0x10] sm:$0xff]
        %v785 = vld [vmem:[%s683 + $0x18] sm:$0xff]
        %v786 = vld [vmem:[%s683 + $0x20] sm:$0xff]
        %v787 = vld [vmem:[%s683 + $0x28] sm:$0xff]
        %v788 = vld [vmem:[%s683 + $0x30] sm:$0xff]
        %v789 = vld [vmem:[%s683 + $0x38] sm:$0xff]
        %v790 = vld [vmem:[%s683 + $0x40] sm:$0xff]
        %v791 = vld [vmem:[%s683 + $0x48] sm:$0xff]
        %v792 = vld [vmem:[%s683 + $0x50] sm:$0xff]
        %v793 = vld [vmem:[%s683 + $0x58] sm:$0xff]
        %v794 = vld [vmem:[%s683 + $0x60] sm:$0xff]
        %v795 = vld [vmem:[%s683 + $0x68] sm:$0xff]
        %v796 = vld [vmem:[%s683 + $0x70] sm:$0xff]
        %v797 = vld [vmem:[%s683 + $0x78] sm:$0xff]
        %v798 = vld [vmem:[%s687] sm:$0x3]
        %v800 = vperm.slane %v798, 0
        %v801 = vperm.slane %v798, 1
        %vm804 = vcmask 523264
        %v806 = vsel %vm804, %v780, 0
        %v809 = vsel %vm804, %v781, 0
        %811 = vmatpush.msra.mxu0 0.0
        %812 = vmatpush.msra.mxu0 0.0
        %813 = vmatpush.msra.mxu0 0.0
        %814 = vmatpush.msra.mxu0 0.0
        %815 = vmatpush.msra.mxu0 0.0
        %816 = vmatpush.msra.mxu0 0.0
        %817 = vmatpush.msra.mxu0 0.0
        %818 = vmatpush.msra.mxu0 0.0
        %819 = vmatpush.msra.mxu0 %v796
        %820 = vmatpush.msra.mxu0 %v794
        %821 = vmatpush.msra.mxu0 %v792
        %822 = vmatpush.msra.mxu0 %v790
        %823 = vmatpush.msra.mxu0 %v788
        %824 = vmatpush.msra.mxu0 %v786
        %825 = vmatpush.msra.mxu0 %v784
        %826 = vmatpush.msra.mxu0 %v782
        %827 = vmatmul.f32.gmra.mxu0 %v806
        %v828 = vpop.f32.mrf.mxu0
        %v829 = vadd.f32 %v800, %v828
        %830 = vmatmul.f32.gmra.mxu0 %v809
        %v831 = vpop.f32.mrf.mxu0
        %v832 = vadd.f32 %v800, %v831
        %833 = vdwg.mxu0
        %834 = vmatpush.msra.mxu0 0.0
        %835 = vmatpush.msra.mxu0 0.0
        %836 = vmatpush.msra.mxu0 0.0
        %837 = vmatpush.msra.mxu0 0.0
        %838 = vmatpush.msra.mxu0 0.0
        %839 = vmatpush.msra.mxu0 0.0
        %840 = vmatpush.msra.mxu0 0.0
        %841 = vmatpush.msra.mxu0 0.0
        %842 = vmatpush.msra.mxu0 %v797
        %843 = vmatpush.msra.mxu0 %v795
        %844 = vmatpush.msra.mxu0 %v793
        %845 = vmatpush.msra.mxu0 %v791
        %846 = vmatpush.msra.mxu0 %v789
        %847 = vmatpush.msra.mxu0 %v787
        %848 = vmatpush.msra.mxu0 %v785
        %849 = vmatpush.msra.mxu0 %v783
        %850 = vmatmul.f32.gmra.mxu0 %v806
        %v851 = vpop.f32.mrf.mxu0
        %v852 = vadd.f32 %v801, %v851
        %853 = vmatmul.f32.gmra.mxu0 %v809
        %v854 = vpop.f32.mrf.mxu0
        %v855 = vadd.f32 %v801, %v854
        %856 = vdwg.mxu0
        %v857 = vmul.f32 %v829, 0.35355338
        %v858 = vmul.f32 %v832, 0.35355338
        %860 = vrot.lane.b32.xlu0 %v857, 120
        %v861 = vpop.permute.xlu0 %860
        %862 = vrot.lane.b32.xlu0 %v857, 112
        %v863 = vpop.permute.xlu0 %862
        %864 = vrot.lane.b32.xlu0 %v857, 104
        %v865 = vpop.permute.xlu0 %864
        %866 = vrot.lane.b32.xlu0 %v857, 96
        %v867 = vpop.permute.xlu0 %866
        %868 = vrot.lane.b32.xlu0 %v857, 88
        %v869 = vpop.permute.xlu0 %868
        %870 = vrot.lane.b32.xlu0 %v857, 80
        %v871 = vpop.permute.xlu0 %870
        %872 = vrot.lane.b32.xlu0 %v857, 72
        %v873 = vpop.permute.xlu0 %872
        %875 = vrot.lane.b32.xlu0 %v858, 120
        %v876 = vpop.permute.xlu0 %875
        %877 = vrot.lane.b32.xlu0 %v858, 112
        %v878 = vpop.permute.xlu0 %877
        %879 = vrot.lane.b32.xlu0 %v858, 104
        %v880 = vpop.permute.xlu0 %879
        %881 = vrot.lane.b32.xlu0 %v858, 96
        %v882 = vpop.permute.xlu0 %881
        %883 = vrot.lane.b32.xlu0 %v858, 88
        %v884 = vpop.permute.xlu0 %883
        %885 = vrot.lane.b32.xlu0 %v858, 80
        %v886 = vpop.permute.xlu0 %885
        %887 = vrot.lane.b32.xlu0 %v858, 72
        %v888 = vpop.permute.xlu0 %887
        %890 = vrot.lane.b32.xlu0 %v829, 120
        %v891 = vpop.permute.xlu0 %890
        %892 = vrot.lane.b32.xlu0 %v829, 112
        %v893 = vpop.permute.xlu0 %892
        %894 = vrot.lane.b32.xlu0 %v829, 104
        %v895 = vpop.permute.xlu0 %894
        %896 = vrot.lane.b32.xlu0 %v829, 96
        %v897 = vpop.permute.xlu0 %896
        %898 = vrot.lane.b32.xlu0 %v829, 88
        %v899 = vpop.permute.xlu0 %898
        %900 = vrot.lane.b32.xlu0 %v829, 80
        %v901 = vpop.permute.xlu0 %900
        %902 = vrot.lane.b32.xlu0 %v829, 72
        %v903 = vpop.permute.xlu0 %902
        %905 = vrot.lane.b32.xlu0 %v832, 120
        %v906 = vpop.permute.xlu0 %905
        %907 = vrot.lane.b32.xlu0 %v832, 112
        %v908 = vpop.permute.xlu0 %907
        %909 = vrot.lane.b32.xlu0 %v832, 104
        %v910 = vpop.permute.xlu0 %909
        %911 = vrot.lane.b32.xlu0 %v832, 96
        %v912 = vpop.permute.xlu0 %911
        %913 = vrot.lane.b32.xlu0 %v832, 88
        %v914 = vpop.permute.xlu0 %913
        %915 = vrot.lane.b32.xlu0 %v832, 80
        %v916 = vpop.permute.xlu0 %915
        %917 = vrot.lane.b32.xlu0 %v832, 72
        %v918 = vpop.permute.xlu0 %917
        %920 = vrot.lane.b32.xlu0 %v852, 120
        %v921 = vpop.permute.xlu0 %920
        %923 = vrot.lane.b32.xlu0 %v852, 112
        %v924 = vpop.permute.xlu0 %923
        %926 = vrot.lane.b32.xlu0 %v852, 104
        %v927 = vpop.permute.xlu0 %926
        %929 = vrot.lane.b32.xlu0 %v852, 96
        %v930 = vpop.permute.xlu0 %929
        %932 = vrot.lane.b32.xlu0 %v852, 88
        %v933 = vpop.permute.xlu0 %932
        %935 = vrot.lane.b32.xlu0 %v852, 80
        %v936 = vpop.permute.xlu0 %935
        %938 = vrot.lane.b32.xlu0 %v852, 72
        %v939 = vpop.permute.xlu0 %938
        %942 = vrot.lane.b32.xlu0 %v855, 120
        %v943 = vpop.permute.xlu0 %942
        %945 = vrot.lane.b32.xlu0 %v855, 112
        %v946 = vpop.permute.xlu0 %945
        %948 = vrot.lane.b32.xlu0 %v855, 104
        %v949 = vpop.permute.xlu0 %948
        %951 = vrot.lane.b32.xlu0 %v855, 96
        %v952 = vpop.permute.xlu0 %951
        %954 = vrot.lane.b32.xlu0 %v855, 88
        %v955 = vpop.permute.xlu0 %954
        %957 = vrot.lane.b32.xlu0 %v855, 80
        %v958 = vpop.permute.xlu0 %957
        %960 = vrot.lane.b32.xlu0 %v855, 72
        %v961 = vpop.permute.xlu0 %960
        %963 = vrot.lane.b32.xlu0 %v829, 64
        %v964 = vpop.permute.xlu0 %963
        %vm965 = vcmask 64512
        %v966 = vsel %vm965, %v857, 0
        %v968 = vsel %vm965, %v964, 0
        %970 = vmatpush.xpose.msra.mxu0 0.0
        %971 = vmatpush.xpose.msra.mxu0 0.0
        %972 = vmatpush.xpose.msra.mxu0 0.0
        %973 = vmatpush.xpose.msra.mxu0 0.0
        %974 = vmatpush.xpose.msra.mxu0 0.0
        %975 = vmatpush.xpose.msra.mxu0 0.0
        %976 = vmatpush.xpose.msra.mxu0 0.0
        %977 = vmatpush.xpose.msra.mxu0 0.0
        %978 = vmatpush.xpose.msra.mxu0 0.0
        %979 = vmatpush.xpose.msra.mxu0 0.0
        %980 = vmatpush.xpose.msra.mxu0 0.0
        %981 = vmatpush.xpose.msra.mxu0 0.0
        %982 = vmatpush.xpose.msra.mxu0 0.0
        %983 = vmatpush.xpose.msra.mxu0 0.0
        %984 = vmatpush.xpose.msra.mxu0 0.0
        %985 = vmatpush.xpose.msra.mxu0 %v968
        %986 = vmatmul.f32.gmra.mxu0 %v966
        %v987 = vpop.f32.mrf.mxu0
        %v988 = vadd.f32 0.0, %v987
        %989 = vdwg.mxu0
        %990 = vrot.lane.b32.xlu0 %v891, 64
        %v991 = vpop.permute.xlu0 %990
        %v992 = vsel %vm965, %v861, 0
        %v994 = vsel %vm965, %v991, 0
        %996 = vmatpush.xpose.msra.mxu0 0.0
        %997 = vmatpush.xpose.msra.mxu0 0.0
        %998 = vmatpush.xpose.msra.mxu0 0.0
        %999 = vmatpush.xpose.msra.mxu0 0.0
        %1000 = vmatpush.xpose.msra.mxu0 0.0
        %1001 = vmatpush.xpose.msra.mxu0 0.0
        %1002 = vmatpush.xpose.msra.mxu0 0.0
        %1003 = vmatpush.xpose.msra.mxu0 0.0
        %1004 = vmatpush.xpose.msra.mxu0 0.0
        %1005 = vmatpush.xpose.msra.mxu0 0.0
        %1006 = vmatpush.xpose.msra.mxu0 0.0
        %1007 = vmatpush.xpose.msra.mxu0 0.0
        %1008 = vmatpush.xpose.msra.mxu0 0.0
        %1009 = vmatpush.xpose.msra.mxu0 0.0
        %1010 = vmatpush.xpose.msra.mxu0 0.0
        %1011 = vmatpush.xpose.msra.mxu0 %v994
        %1012 = vmatmul.f32.gmra.mxu0 %v992
        %v1013 = vpop.f32.mrf.mxu0
        %v1014 = vadd.f32 0.0, %v1013
        %1015 = vdwg.mxu0
        %1016 = vrot.lane.b32.xlu0 %v893, 64
        %v1017 = vpop.permute.xlu0 %1016
        %v1018 = vsel %vm965, %v863, 0
        %v1020 = vsel %vm965, %v1017, 0
        %1022 = vmatpush.xpose.msra.mxu0 0.0
        %1023 = vmatpush.xpose.msra.mxu0 0.0
        %1024 = vmatpush.xpose.msra.mxu0 0.0
        %1025 = vmatpush.xpose.msra.mxu0 0.0
        %1026 = vmatpush.xpose.msra.mxu0 0.0
        %1027 = vmatpush.xpose.msra.mxu0 0.0
        %1028 = vmatpush.xpose.msra.mxu0 0.0
        %1029 = vmatpush.xpose.msra.mxu0 0.0
        %1030 = vmatpush.xpose.msra.mxu0 0.0
        %1031 = vmatpush.xpose.msra.mxu0 0.0
        %1032 = vmatpush.xpose.msra.mxu0 0.0
        %1033 = vmatpush.xpose.msra.mxu0 0.0
        %1034 = vmatpush.xpose.msra.mxu0 0.0
        %1035 = vmatpush.xpose.msra.mxu0 0.0
        %1036 = vmatpush.xpose.msra.mxu0 0.0
        %1037 = vmatpush.xpose.msra.mxu0 %v1020
        %1038 = vmatmul.f32.gmra.mxu0 %v1018
        %v1039 = vpop.f32.mrf.mxu0
        %v1040 = vadd.f32 0.0, %v1039
        %1041 = vdwg.mxu0
        %1042 = vrot.lane.b32.xlu0 %v895, 64
        %v1043 = vpop.permute.xlu0 %1042
        %v1044 = vsel %vm965, %v865, 0
        %v1046 = vsel %vm965, %v1043, 0
        %1048 = vmatpush.xpose.msra.mxu0 0.0
        %1049 = vmatpush.xpose.msra.mxu0 0.0
        %1050 = vmatpush.xpose.msra.mxu0 0.0
        %1051 = vmatpush.xpose.msra.mxu0 0.0
        %1052 = vmatpush.xpose.msra.mxu0 0.0
        %1053 = vmatpush.xpose.msra.mxu0 0.0
        %1054 = vmatpush.xpose.msra.mxu0 0.0
        %1055 = vmatpush.xpose.msra.mxu0 0.0
        %1056 = vmatpush.xpose.msra.mxu0 0.0
        %1057 = vmatpush.xpose.msra.mxu0 0.0
        %1058 = vmatpush.xpose.msra.mxu0 0.0
        %1059 = vmatpush.xpose.msra.mxu0 0.0
        %1060 = vmatpush.xpose.msra.mxu0 0.0
        %1061 = vmatpush.xpose.msra.mxu0 0.0
        %1062 = vmatpush.xpose.msra.mxu0 0.0
        %1063 = vmatpush.xpose.msra.mxu0 %v1046
        %1064 = vmatmul.f32.gmra.mxu0 %v1044
        %v1065 = vpop.f32.mrf.mxu0
        %v1066 = vadd.f32 0.0, %v1065
        %1067 = vdwg.mxu0
        %1068 = vrot.lane.b32.xlu0 %v897, 64
        %v1069 = vpop.permute.xlu0 %1068
        %v1070 = vsel %vm965, %v867, 0
        %v1072 = vsel %vm965, %v1069, 0
        %1074 = vmatpush.xpose.msra.mxu0 0.0
        %1075 = vmatpush.xpose.msra.mxu0 0.0
        %1076 = vmatpush.xpose.msra.mxu0 0.0
        %1077 = vmatpush.xpose.msra.mxu0 0.0
        %1078 = vmatpush.xpose.msra.mxu0 0.0
        %1079 = vmatpush.xpose.msra.mxu0 0.0
        %1080 = vmatpush.xpose.msra.mxu0 0.0
        %1081 = vmatpush.xpose.msra.mxu0 0.0
        %1082 = vmatpush.xpose.msra.mxu0 0.0
        %1083 = vmatpush.xpose.msra.mxu0 0.0
        %1084 = vmatpush.xpose.msra.mxu0 0.0
        %1085 = vmatpush.xpose.msra.mxu0 0.0
        %1086 = vmatpush.xpose.msra.mxu0 0.0
        %1087 = vmatpush.xpose.msra.mxu0 0.0
        %1088 = vmatpush.xpose.msra.mxu0 0.0
        %1089 = vmatpush.xpose.msra.mxu0 %v1072
        %1090 = vmatmul.f32.gmra.mxu0 %v1070
        %v1091 = vpop.f32.mrf.mxu0
        %v1092 = vadd.f32 0.0, %v1091
        %1093 = vdwg.mxu0
        %1094 = vrot.lane.b32.xlu0 %v899, 64
        %v1095 = vpop.permute.xlu0 %1094
        %v1096 = vsel %vm965, %v869, 0
        %v1098 = vsel %vm965, %v1095, 0
        %1100 = vmatpush.xpose.msra.mxu0 0.0
        %1101 = vmatpush.xpose.msra.mxu0 0.0
        %1102 = vmatpush.xpose.msra.mxu0 0.0
        %1103 = vmatpush.xpose.msra.mxu0 0.0
        %1104 = vmatpush.xpose.msra.mxu0 0.0
        %1105 = vmatpush.xpose.msra.mxu0 0.0
        %1106 = vmatpush.xpose.msra.mxu0 0.0
        %1107 = vmatpush.xpose.msra.mxu0 0.0
        %1108 = vmatpush.xpose.msra.mxu0 0.0
        %1109 = vmatpush.xpose.msra.mxu0 0.0
        %1110 = vmatpush.xpose.msra.mxu0 0.0
        %1111 = vmatpush.xpose.msra.mxu0 0.0
        %1112 = vmatpush.xpose.msra.mxu0 0.0
        %1113 = vmatpush.xpose.msra.mxu0 0.0
        %1114 = vmatpush.xpose.msra.mxu0 0.0
        %1115 = vmatpush.xpose.msra.mxu0 %v1098
        %1116 = vmatmul.f32.gmra.mxu0 %v1096
        %v1117 = vpop.f32.mrf.mxu0
        %v1118 = vadd.f32 0.0, %v1117
        %1119 = vdwg.mxu0
        %1120 = vrot.lane.b32.xlu0 %v901, 64
        %v1121 = vpop.permute.xlu0 %1120
        %v1122 = vsel %vm965, %v871, 0
        %v1124 = vsel %vm965, %v1121, 0
        %1126 = vmatpush.xpose.msra.mxu0 0.0
        %1127 = vmatpush.xpose.msra.mxu0 0.0
        %1128 = vmatpush.xpose.msra.mxu0 0.0
        %1129 = vmatpush.xpose.msra.mxu0 0.0
        %1130 = vmatpush.xpose.msra.mxu0 0.0
        %1131 = vmatpush.xpose.msra.mxu0 0.0
        %1132 = vmatpush.xpose.msra.mxu0 0.0
        %1133 = vmatpush.xpose.msra.mxu0 0.0
        %1134 = vmatpush.xpose.msra.mxu0 0.0
        %1135 = vmatpush.xpose.msra.mxu0 0.0
        %1136 = vmatpush.xpose.msra.mxu0 0.0
        %1137 = vmatpush.xpose.msra.mxu0 0.0
        %1138 = vmatpush.xpose.msra.mxu0 0.0
        %1139 = vmatpush.xpose.msra.mxu0 0.0
        %1140 = vmatpush.xpose.msra.mxu0 0.0
        %1141 = vmatpush.xpose.msra.mxu0 %v1124
        %1142 = vmatmul.f32.gmra.mxu0 %v1122
        %v1143 = vpop.f32.mrf.mxu0
        %v1144 = vadd.f32 0.0, %v1143
        %1145 = vdwg.mxu0
        %1146 = vrot.lane.b32.xlu0 %v903, 64
        %v1147 = vpop.permute.xlu0 %1146
        %v1148 = vsel %vm965, %v873, 0
        %v1150 = vsel %vm965, %v1147, 0
        %1152 = vmatpush.xpose.msra.mxu0 0.0
        %1153 = vmatpush.xpose.msra.mxu0 0.0
        %1154 = vmatpush.xpose.msra.mxu0 0.0
        %1155 = vmatpush.xpose.msra.mxu0 0.0
        %1156 = vmatpush.xpose.msra.mxu0 0.0
        %1157 = vmatpush.xpose.msra.mxu0 0.0
        %1158 = vmatpush.xpose.msra.mxu0 0.0
        %1159 = vmatpush.xpose.msra.mxu0 0.0
        %1160 = vmatpush.xpose.msra.mxu0 0.0
        %1161 = vmatpush.xpose.msra.mxu0 0.0
        %1162 = vmatpush.xpose.msra.mxu0 0.0
        %1163 = vmatpush.xpose.msra.mxu0 0.0
        %1164 = vmatpush.xpose.msra.mxu0 0.0
        %1165 = vmatpush.xpose.msra.mxu0 0.0
        %1166 = vmatpush.xpose.msra.mxu0 0.0
        %1167 = vmatpush.xpose.msra.mxu0 %v1150
        %1168 = vmatmul.f32.gmra.mxu0 %v1148
        %v1169 = vpop.f32.mrf.mxu0
        %v1170 = vadd.f32 0.0, %v1169
        %1171 = vdwg.mxu0
        %1172 = vrot.lane.b32.xlu0 %v832, 64
        %v1173 = vpop.permute.xlu0 %1172
        %v1174 = vsel %vm965, %v858, 0
        %v1176 = vsel %vm965, %v1173, 0
        %1178 = vmatpush.xpose.msra.mxu0 0.0
        %1179 = vmatpush.xpose.msra.mxu0 0.0
        %1180 = vmatpush.xpose.msra.mxu0 0.0
        %1181 = vmatpush.xpose.msra.mxu0 0.0
        %1182 = vmatpush.xpose.msra.mxu0 0.0
        %1183 = vmatpush.xpose.msra.mxu0 0.0
        %1184 = vmatpush.xpose.msra.mxu0 0.0
        %1185 = vmatpush.xpose.msra.mxu0 0.0
        %1186 = vmatpush.xpose.msra.mxu0 0.0
        %1187 = vmatpush.xpose.msra.mxu0 0.0
        %1188 = vmatpush.xpose.msra.mxu0 0.0
        %1189 = vmatpush.xpose.msra.mxu0 0.0
        %1190 = vmatpush.xpose.msra.mxu0 0.0
        %1191 = vmatpush.xpose.msra.mxu0 0.0
        %1192 = vmatpush.xpose.msra.mxu0 0.0
        %1193 = vmatpush.xpose.msra.mxu0 %v1176
        %1194 = vmatmul.f32.gmra.mxu0 %v1174
        %v1195 = vpop.f32.mrf.mxu0
        %v1196 = vadd.f32 0.0, %v1195
        %1197 = vdwg.mxu0
        %1198 = vrot.lane.b32.xlu0 %v906, 64
        %v1199 = vpop.permute.xlu0 %1198
        %v1200 = vsel %vm965, %v876, 0
        %v1202 = vsel %vm965, %v1199, 0
        %1204 = vmatpush.xpose.msra.mxu0 0.0
        %1205 = vmatpush.xpose.msra.mxu0 0.0
        %1206 = vmatpush.xpose.msra.mxu0 0.0
        %1207 = vmatpush.xpose.msra.mxu0 0.0
        %1208 = vmatpush.xpose.msra.mxu0 0.0
        %1209 = vmatpush.xpose.msra.mxu0 0.0
        %1210 = vmatpush.xpose.msra.mxu0 0.0
        %1211 = vmatpush.xpose.msra.mxu0 0.0
        %1212 = vmatpush.xpose.msra.mxu0 0.0
        %1213 = vmatpush.xpose.msra.mxu0 0.0
        %1214 = vmatpush.xpose.msra.mxu0 0.0
        %1215 = vmatpush.xpose.msra.mxu0 0.0
        %1216 = vmatpush.xpose.msra.mxu0 0.0
        %1217 = vmatpush.xpose.msra.mxu0 0.0
        %1218 = vmatpush.xpose.msra.mxu0 0.0
        %1219 = vmatpush.xpose.msra.mxu0 %v1202
        %1220 = vmatmul.f32.gmra.mxu0 %v1200
        %v1221 = vpop.f32.mrf.mxu0
        %v1222 = vadd.f32 0.0, %v1221
        %1223 = vdwg.mxu0
        %1224 = vrot.lane.b32.xlu0 %v908, 64
        %v1225 = vpop.permute.xlu0 %1224
        %v1226 = vsel %vm965, %v878, 0
        %v1228 = vsel %vm965, %v1225, 0
        %1230 = vmatpush.xpose.msra.mxu0 0.0
        %1231 = vmatpush.xpose.msra.mxu0 0.0
        %1232 = vmatpush.xpose.msra.mxu0 0.0
        %1233 = vmatpush.xpose.msra.mxu0 0.0
        %1234 = vmatpush.xpose.msra.mxu0 0.0
        %1235 = vmatpush.xpose.msra.mxu0 0.0
        %1236 = vmatpush.xpose.msra.mxu0 0.0
        %1237 = vmatpush.xpose.msra.mxu0 0.0
        %1238 = vmatpush.xpose.msra.mxu0 0.0
        %1239 = vmatpush.xpose.msra.mxu0 0.0
        %1240 = vmatpush.xpose.msra.mxu0 0.0
        %1241 = vmatpush.xpose.msra.mxu0 0.0
        %1242 = vmatpush.xpose.msra.mxu0 0.0
        %1243 = vmatpush.xpose.msra.mxu0 0.0
        %1244 = vmatpush.xpose.msra.mxu0 0.0
        %1245 = vmatpush.xpose.msra.mxu0 %v1228
        %1246 = vmatmul.f32.gmra.mxu0 %v1226
        %v1247 = vpop.f32.mrf.mxu0
        %v1248 = vadd.f32 0.0, %v1247
        %1249 = vdwg.mxu0
        %1250 = vrot.lane.b32.xlu0 %v910, 64
        %v1251 = vpop.permute.xlu0 %1250
        %v1252 = vsel %vm965, %v880, 0
        %v1254 = vsel %vm965, %v1251, 0
        %1256 = vmatpush.xpose.msra.mxu0 0.0
        %1257 = vmatpush.xpose.msra.mxu0 0.0
        %1258 = vmatpush.xpose.msra.mxu0 0.0
        %1259 = vmatpush.xpose.msra.mxu0 0.0
        %1260 = vmatpush.xpose.msra.mxu0 0.0
        %1261 = vmatpush.xpose.msra.mxu0 0.0
        %1262 = vmatpush.xpose.msra.mxu0 0.0
        %1263 = vmatpush.xpose.msra.mxu0 0.0
        %1264 = vmatpush.xpose.msra.mxu0 0.0
        %1265 = vmatpush.xpose.msra.mxu0 0.0
        %1266 = vmatpush.xpose.msra.mxu0 0.0
        %1267 = vmatpush.xpose.msra.mxu0 0.0
        %1268 = vmatpush.xpose.msra.mxu0 0.0
        %1269 = vmatpush.xpose.msra.mxu0 0.0
        %1270 = vmatpush.xpose.msra.mxu0 0.0
        %1271 = vmatpush.xpose.msra.mxu0 %v1254
        %1272 = vmatmul.f32.gmra.mxu0 %v1252
        %v1273 = vpop.f32.mrf.mxu0
        %v1274 = vadd.f32 0.0, %v1273
        %1275 = vdwg.mxu0
        %1276 = vrot.lane.b32.xlu0 %v912, 64
        %v1277 = vpop.permute.xlu0 %1276
        %v1278 = vsel %vm965, %v882, 0
        %v1280 = vsel %vm965, %v1277, 0
        %1282 = vmatpush.xpose.msra.mxu0 0.0
        %1283 = vmatpush.xpose.msra.mxu0 0.0
        %1284 = vmatpush.xpose.msra.mxu0 0.0
        %1285 = vmatpush.xpose.msra.mxu0 0.0
        %1286 = vmatpush.xpose.msra.mxu0 0.0
        %1287 = vmatpush.xpose.msra.mxu0 0.0
        %1288 = vmatpush.xpose.msra.mxu0 0.0
        %1289 = vmatpush.xpose.msra.mxu0 0.0
        %1290 = vmatpush.xpose.msra.mxu0 0.0
        %1291 = vmatpush.xpose.msra.mxu0 0.0
        %1292 = vmatpush.xpose.msra.mxu0 0.0
        %1293 = vmatpush.xpose.msra.mxu0 0.0
        %1294 = vmatpush.xpose.msra.mxu0 0.0
        %1295 = vmatpush.xpose.msra.mxu0 0.0
        %1296 = vmatpush.xpose.msra.mxu0 0.0
        %1297 = vmatpush.xpose.msra.mxu0 %v1280
        %1298 = vmatmul.f32.gmra.mxu0 %v1278
        %v1299 = vpop.f32.mrf.mxu0
        %v1300 = vadd.f32 0.0, %v1299
        %1301 = vdwg.mxu0
        %1302 = vrot.lane.b32.xlu0 %v914, 64
        %v1303 = vpop.permute.xlu0 %1302
        %v1304 = vsel %vm965, %v884, 0
        %v1306 = vsel %vm965, %v1303, 0
        %1308 = vmatpush.xpose.msra.mxu0 0.0
        %1309 = vmatpush.xpose.msra.mxu0 0.0
        %1310 = vmatpush.xpose.msra.mxu0 0.0
        %1311 = vmatpush.xpose.msra.mxu0 0.0
        %1312 = vmatpush.xpose.msra.mxu0 0.0
        %1313 = vmatpush.xpose.msra.mxu0 0.0
        %1314 = vmatpush.xpose.msra.mxu0 0.0
        %1315 = vmatpush.xpose.msra.mxu0 0.0
        %1316 = vmatpush.xpose.msra.mxu0 0.0
        %1317 = vmatpush.xpose.msra.mxu0 0.0
        %1318 = vmatpush.xpose.msra.mxu0 0.0
        %1319 = vmatpush.xpose.msra.mxu0 0.0
        %1320 = vmatpush.xpose.msra.mxu0 0.0
        %1321 = vmatpush.xpose.msra.mxu0 0.0
        %1322 = vmatpush.xpose.msra.mxu0 0.0
        %1323 = vmatpush.xpose.msra.mxu0 %v1306
        %1324 = vmatmul.f32.gmra.mxu0 %v1304
        %v1325 = vpop.f32.mrf.mxu0
        %v1326 = vadd.f32 0.0, %v1325
        %1327 = vdwg.mxu0
        %1328 = vrot.lane.b32.xlu0 %v916, 64
        %v1329 = vpop.permute.xlu0 %1328
        %v1330 = vsel %vm965, %v886, 0
        %v1332 = vsel %vm965, %v1329, 0
        %1334 = vmatpush.xpose.msra.mxu0 0.0
        %1335 = vmatpush.xpose.msra.mxu0 0.0
        %1336 = vmatpush.xpose.msra.mxu0 0.0
        %1337 = vmatpush.xpose.msra.mxu0 0.0
        %1338 = vmatpush.xpose.msra.mxu0 0.0
        %1339 = vmatpush.xpose.msra.mxu0 0.0
        %1340 = vmatpush.xpose.msra.mxu0 0.0
        %1341 = vmatpush.xpose.msra.mxu0 0.0
        %1342 = vmatpush.xpose.msra.mxu0 0.0
        %1343 = vmatpush.xpose.msra.mxu0 0.0
        %1344 = vmatpush.xpose.msra.mxu0 0.0
        %1345 = vmatpush.xpose.msra.mxu0 0.0
        %1346 = vmatpush.xpose.msra.mxu0 0.0
        %1347 = vmatpush.xpose.msra.mxu0 0.0
        %1348 = vmatpush.xpose.msra.mxu0 0.0
        %1349 = vmatpush.xpose.msra.mxu0 %v1332
        %1350 = vmatmul.f32.gmra.mxu0 %v1330
        %v1351 = vpop.f32.mrf.mxu0
        %v1352 = vadd.f32 0.0, %v1351
        %1353 = vdwg.mxu0
        %1354 = vrot.lane.b32.xlu0 %v918, 64
        %v1355 = vpop.permute.xlu0 %1354
        %v1356 = vsel %vm965, %v888, 0
        %v1358 = vsel %vm965, %v1355, 0
        %1360 = vmatpush.xpose.msra.mxu0 0.0
        %1361 = vmatpush.xpose.msra.mxu0 0.0
        %1362 = vmatpush.xpose.msra.mxu0 0.0
        %1363 = vmatpush.xpose.msra.mxu0 0.0
        %1364 = vmatpush.xpose.msra.mxu0 0.0
        %1365 = vmatpush.xpose.msra.mxu0 0.0
        %1366 = vmatpush.xpose.msra.mxu0 0.0
        %1367 = vmatpush.xpose.msra.mxu0 0.0
        %1368 = vmatpush.xpose.msra.mxu0 0.0
        %1369 = vmatpush.xpose.msra.mxu0 0.0
        %1370 = vmatpush.xpose.msra.mxu0 0.0
        %1371 = vmatpush.xpose.msra.mxu0 0.0
        %1372 = vmatpush.xpose.msra.mxu0 0.0
        %1373 = vmatpush.xpose.msra.mxu0 0.0
        %1374 = vmatpush.xpose.msra.mxu0 0.0
        %1375 = vmatpush.xpose.msra.mxu0 %v1358
        %1376 = vmatmul.f32.gmra.mxu0 %v1356
        %v1377 = vpop.f32.mrf.mxu0
        %v1378 = vadd.f32 0.0, %v1377
        %1379 = vdwg.mxu0
        %v1380 = vsel %vm965, %v988, -inf
        %1381 = vmax.xlane.f32.xlu0 %v1380
        %v1382 = vpop.xlane.xlu0 %1381
        %v1383 = vsel %vm965, %v1014, -inf
        %1384 = vmax.xlane.f32.xlu0 %v1383
        %v1385 = vpop.xlane.xlu0 %1384
        %v1386 = vsel %vm965, %v1040, -inf
        %1387 = vmax.xlane.f32.xlu0 %v1386
        %v1388 = vpop.xlane.xlu0 %1387
        %v1389 = vsel %vm965, %v1066, -inf
        %1390 = vmax.xlane.f32.xlu0 %v1389
        %v1391 = vpop.xlane.xlu0 %1390
        %v1392 = vsel %vm965, %v1092, -inf
        %1393 = vmax.xlane.f32.xlu0 %v1392
        %v1394 = vpop.xlane.xlu0 %1393
        %v1395 = vsel %vm965, %v1118, -inf
        %1396 = vmax.xlane.f32.xlu0 %v1395
        %v1397 = vpop.xlane.xlu0 %1396
        %v1398 = vsel %vm965, %v1144, -inf
        %1399 = vmax.xlane.f32.xlu0 %v1398
        %v1400 = vpop.xlane.xlu0 %1399
        %v1401 = vsel %vm965, %v1170, -inf
        %1402 = vmax.xlane.f32.xlu0 %v1401
        %v1403 = vpop.xlane.xlu0 %1402
        %v1404 = vsel %vm965, %v1196, -inf
        %1405 = vmax.xlane.f32.xlu0 %v1404
        %v1406 = vpop.xlane.xlu0 %1405
        %v1407 = vsel %vm965, %v1222, -inf
        %1408 = vmax.xlane.f32.xlu0 %v1407
        %v1409 = vpop.xlane.xlu0 %1408
        %v1410 = vsel %vm965, %v1248, -inf
        %1411 = vmax.xlane.f32.xlu0 %v1410
        %v1412 = vpop.xlane.xlu0 %1411
        %v1413 = vsel %vm965, %v1274, -inf
        %1414 = vmax.xlane.f32.xlu0 %v1413
        %v1415 = vpop.xlane.xlu0 %1414
        %v1416 = vsel %vm965, %v1300, -inf
        %1417 = vmax.xlane.f32.xlu0 %v1416
        %v1418 = vpop.xlane.xlu0 %1417
        %v1419 = vsel %vm965, %v1326, -inf
        %1420 = vmax.xlane.f32.xlu0 %v1419
        %v1421 = vpop.xlane.xlu0 %1420
        %v1422 = vsel %vm965, %v1352, -inf
        %1423 = vmax.xlane.f32.xlu0 %v1422
        %v1424 = vpop.xlane.xlu0 %1423
        %v1425 = vsel %vm965, %v1378, -inf
        %1426 = vmax.xlane.f32.xlu0 %v1425
        %v1427 = vpop.xlane.xlu0 %1426
        %v1428 = vsub.f32 %v988, %v1382
        %v1429 = vsub.f32 %v1014, %v1385
        %v1430 = vsub.f32 %v1040, %v1388
        %v1431 = vsub.f32 %v1066, %v1391
        %v1432 = vsub.f32 %v1092, %v1394
        %v1433 = vsub.f32 %v1118, %v1397
        %v1434 = vsub.f32 %v1144, %v1400
        %v1435 = vsub.f32 %v1170, %v1403
        %v1436 = vsub.f32 %v1196, %v1406
        %v1437 = vsub.f32 %v1222, %v1409
        %v1438 = vsub.f32 %v1248, %v1412
        %v1439 = vsub.f32 %v1274, %v1415
        %v1440 = vsub.f32 %v1300, %v1418
        %v1441 = vsub.f32 %v1326, %v1421
        %v1442 = vsub.f32 %v1352, %v1424
        %v1443 = vsub.f32 %v1378, %v1427
        %v1444 = vmul.f32 %v1428, 1.442695
        %v1445 = vpow.pop %v1444
        %v1446 = vmul.f32 %v1429, 1.442695
        %v1447 = vpow.pop %v1446
        %v1448 = vmul.f32 %v1430, 1.442695
        %v1449 = vpow.pop %v1448
        %v1450 = vmul.f32 %v1431, 1.442695
        %v1451 = vpow.pop %v1450
        %v1452 = vmul.f32 %v1432, 1.442695
        %v1453 = vpow.pop %v1452
        %v1454 = vmul.f32 %v1433, 1.442695
        %v1455 = vpow.pop %v1454
        %v1456 = vmul.f32 %v1434, 1.442695
        %v1457 = vpow.pop %v1456
        %v1458 = vmul.f32 %v1435, 1.442695
        %v1459 = vpow.pop %v1458
        %v1460 = vmul.f32 %v1436, 1.442695
        %v1461 = vpow.pop %v1460
        %v1462 = vmul.f32 %v1437, 1.442695
        %v1463 = vpow.pop %v1462
        %v1464 = vmul.f32 %v1438, 1.442695
        %v1465 = vpow.pop %v1464
        %v1466 = vmul.f32 %v1439, 1.442695
        %v1467 = vpow.pop %v1466
        %v1468 = vmul.f32 %v1440, 1.442695
        %v1469 = vpow.pop %v1468
        %v1470 = vmul.f32 %v1441, 1.442695
        %v1471 = vpow.pop %v1470
        %v1472 = vmul.f32 %v1442, 1.442695
        %v1473 = vpow.pop %v1472
        %v1474 = vmul.f32 %v1443, 1.442695
        %v1475 = vpow.pop %v1474
        %v1476 = vsel %vm965, %v1445, 0.0
        %1477 = vadd.xlane.f32.xlu0 %v1476
        %v1478 = vpop.xlane.xlu0 %1477
        %v1479 = vsel %vm965, %v1447, 0.0
        %1480 = vadd.xlane.f32.xlu0 %v1479
        %v1481 = vpop.xlane.xlu0 %1480
        %v1482 = vsel %vm965, %v1449, 0.0
        %1483 = vadd.xlane.f32.xlu0 %v1482
        %v1484 = vpop.xlane.xlu0 %1483
        %v1485 = vsel %vm965, %v1451, 0.0
        %1486 = vadd.xlane.f32.xlu0 %v1485
        %v1487 = vpop.xlane.xlu0 %1486
        %v1488 = vsel %vm965, %v1453, 0.0
        %1489 = vadd.xlane.f32.xlu0 %v1488
        %v1490 = vpop.xlane.xlu0 %1489
        %v1491 = vsel %vm965, %v1455, 0.0
        %1492 = vadd.xlane.f32.xlu0 %v1491
        %v1493 = vpop.xlane.xlu0 %1492
        %v1494 = vsel %vm965, %v1457, 0.0
        %1495 = vadd.xlane.f32.xlu0 %v1494
        %v1496 = vpop.xlane.xlu0 %1495
        %v1497 = vsel %vm965, %v1459, 0.0
        %1498 = vadd.xlane.f32.xlu0 %v1497
        %v1499 = vpop.xlane.xlu0 %1498
        %v1500 = vsel %vm965, %v1461, 0.0
        %1501 = vadd.xlane.f32.xlu0 %v1500
        %v1502 = vpop.xlane.xlu0 %1501
        %v1503 = vsel %vm965, %v1463, 0.0
        %1504 = vadd.xlane.f32.xlu0 %v1503
        %v1505 = vpop.xlane.xlu0 %1504
        %v1506 = vsel %vm965, %v1465, 0.0
        %1507 = vadd.xlane.f32.xlu0 %v1506
        %v1508 = vpop.xlane.xlu0 %1507
        %v1509 = vsel %vm965, %v1467, 0.0
        %1510 = vadd.xlane.f32.xlu0 %v1509
        %v1511 = vpop.xlane.xlu0 %1510
        %v1512 = vsel %vm965, %v1469, 0.0
        %1513 = vadd.xlane.f32.xlu0 %v1512
        %v1514 = vpop.xlane.xlu0 %1513
        %v1515 = vsel %vm965, %v1471, 0.0
        %1516 = vadd.xlane.f32.xlu0 %v1515
        %v1517 = vpop.xlane.xlu0 %1516
        %v1518 = vsel %vm965, %v1473, 0.0
        %1519 = vadd.xlane.f32.xlu0 %v1518
        %v1520 = vpop.xlane.xlu0 %1519
        %v1521 = vsel %vm965, %v1475, 0.0
        %1522 = vadd.xlane.f32.xlu0 %v1521
        %v1523 = vpop.xlane.xlu0 %1522
        %v1524 = vrcp.pop %v1478
        %v1525 = vmul.f32 %v1478, %v1524
        %v1526 = vsub.f32 1.0, %v1525
        %v1527 = vmul.f32 %v1524, %v1526
        %v1528 = vadd.f32 %v1524, %v1527
        %vm1529 = vweird.f32 %v1478
        %vm1530 = vweird.f32 %v1524
        %vm1531 = vmor %vm1529, %vm1530
        %v1532 = vsel %vm1531, %v1524, %v1528
        %v1533 = vand.u32 2147483647, %v1478
        %vm1534 = vcmp.eq.f32.partialorder %v1533, 8.507059e+37
        %v1535 = vand.u32 %v1478, 2147483648
        %v1536 = vor.u32 1.1754944e-38, %v1535
        %v1537 = vsel %vm1534, %v1536, %v1532
        %v1538 = vmul.f32 %v1445, %v1537
        %v1539 = vrcp.pop %v1481
        %v1540 = vmul.f32 %v1481, %v1539
        %v1541 = vsub.f32 1.0, %v1540
        %v1542 = vmul.f32 %v1539, %v1541
        %v1543 = vadd.f32 %v1539, %v1542
        %vm1544 = vweird.f32 %v1481
        %vm1545 = vweird.f32 %v1539
        %vm1546 = vmor %vm1544, %vm1545
        %v1547 = vsel %vm1546, %v1539, %v1543
        %v1548 = vand.u32 2147483647, %v1481
        %vm1549 = vcmp.eq.f32.partialorder %v1548, 8.507059e+37
        %v1550 = vand.u32 %v1481, 2147483648
        %v1551 = vor.u32 1.1754944e-38, %v1550
        %v1552 = vsel %vm1549, %v1551, %v1547
        %v1553 = vmul.f32 %v1447, %v1552
        %v1554 = vrcp.pop %v1484
        %v1555 = vmul.f32 %v1484, %v1554
        %v1556 = vsub.f32 1.0, %v1555
        %v1557 = vmul.f32 %v1554, %v1556
        %v1558 = vadd.f32 %v1554, %v1557
        %vm1559 = vweird.f32 %v1484
        %vm1560 = vweird.f32 %v1554
        %vm1561 = vmor %vm1559, %vm1560
        %v1562 = vsel %vm1561, %v1554, %v1558
        %v1563 = vand.u32 2147483647, %v1484
        %vm1564 = vcmp.eq.f32.partialorder %v1563, 8.507059e+37
        %v1565 = vand.u32 %v1484, 2147483648
        %v1566 = vor.u32 1.1754944e-38, %v1565
        %v1567 = vsel %vm1564, %v1566, %v1562
        %v1568 = vmul.f32 %v1449, %v1567
        %v1569 = vrcp.pop %v1487
        %v1570 = vmul.f32 %v1487, %v1569
        %v1571 = vsub.f32 1.0, %v1570
        %v1572 = vmul.f32 %v1569, %v1571
        %v1573 = vadd.f32 %v1569, %v1572
        %vm1574 = vweird.f32 %v1487
        %vm1575 = vweird.f32 %v1569
        %vm1576 = vmor %vm1574, %vm1575
        %v1577 = vsel %vm1576, %v1569, %v1573
        %v1578 = vand.u32 2147483647, %v1487
        %vm1579 = vcmp.eq.f32.partialorder %v1578, 8.507059e+37
        %v1580 = vand.u32 %v1487, 2147483648
        %v1581 = vor.u32 1.1754944e-38, %v1580
        %v1582 = vsel %vm1579, %v1581, %v1577
        %v1583 = vmul.f32 %v1451, %v1582
        %v1584 = vrcp.pop %v1490
        %v1585 = vmul.f32 %v1490, %v1584
        %v1586 = vsub.f32 1.0, %v1585
        %v1587 = vmul.f32 %v1584, %v1586
        %v1588 = vadd.f32 %v1584, %v1587
        %vm1589 = vweird.f32 %v1490
        %vm1590 = vweird.f32 %v1584
        %vm1591 = vmor %vm1589, %vm1590
        %v1592 = vsel %vm1591, %v1584, %v1588
        %v1593 = vand.u32 2147483647, %v1490
        %vm1594 = vcmp.eq.f32.partialorder %v1593, 8.507059e+37
        %v1595 = vand.u32 %v1490, 2147483648
        %v1596 = vor.u32 1.1754944e-38, %v1595
        %v1597 = vsel %vm1594, %v1596, %v1592
        %v1598 = vmul.f32 %v1453, %v1597
        %v1599 = vrcp.pop %v1493
        %v1600 = vmul.f32 %v1493, %v1599
        %v1601 = vsub.f32 1.0, %v1600
        %v1602 = vmul.f32 %v1599, %v1601
        %v1603 = vadd.f32 %v1599, %v1602
        %vm1604 = vweird.f32 %v1493
        %vm1605 = vweird.f32 %v1599
        %vm1606 = vmor %vm1604, %vm1605
        %v1607 = vsel %vm1606, %v1599, %v1603
        %v1608 = vand.u32 2147483647, %v1493
        %vm1609 = vcmp.eq.f32.partialorder %v1608, 8.507059e+37
        %v1610 = vand.u32 %v1493, 2147483648
        %v1611 = vor.u32 1.1754944e-38, %v1610
        %v1612 = vsel %vm1609, %v1611, %v1607
        %v1613 = vmul.f32 %v1455, %v1612
        %v1614 = vrcp.pop %v1496
        %v1615 = vmul.f32 %v1496, %v1614
        %v1616 = vsub.f32 1.0, %v1615
        %v1617 = vmul.f32 %v1614, %v1616
        %v1618 = vadd.f32 %v1614, %v1617
        %vm1619 = vweird.f32 %v1496
        %vm1620 = vweird.f32 %v1614
        %vm1621 = vmor %vm1619, %vm1620
        %v1622 = vsel %vm1621, %v1614, %v1618
        %v1623 = vand.u32 2147483647, %v1496
        %vm1624 = vcmp.eq.f32.partialorder %v1623, 8.507059e+37
        %v1625 = vand.u32 %v1496, 2147483648
        %v1626 = vor.u32 1.1754944e-38, %v1625
        %v1627 = vsel %vm1624, %v1626, %v1622
        %v1628 = vmul.f32 %v1457, %v1627
        %v1629 = vrcp.pop %v1499
        %v1630 = vmul.f32 %v1499, %v1629
        %v1631 = vsub.f32 1.0, %v1630
        %v1632 = vmul.f32 %v1629, %v1631
        %v1633 = vadd.f32 %v1629, %v1632
        %vm1634 = vweird.f32 %v1499
        %vm1635 = vweird.f32 %v1629
        %vm1636 = vmor %vm1634, %vm1635
        %v1637 = vsel %vm1636, %v1629, %v1633
        %v1638 = vand.u32 2147483647, %v1499
        %vm1639 = vcmp.eq.f32.partialorder %v1638, 8.507059e+37
        %v1640 = vand.u32 %v1499, 2147483648
        %v1641 = vor.u32 1.1754944e-38, %v1640
        %v1642 = vsel %vm1639, %v1641, %v1637
        %v1643 = vmul.f32 %v1459, %v1642
        %v1644 = vrcp.pop %v1502
        %v1645 = vmul.f32 %v1502, %v1644
        %v1646 = vsub.f32 1.0, %v1645
        %v1647 = vmul.f32 %v1644, %v1646
        %v1648 = vadd.f32 %v1644, %v1647
        %vm1649 = vweird.f32 %v1502
        %vm1650 = vweird.f32 %v1644
        %vm1651 = vmor %vm1649, %vm1650
        %v1652 = vsel %vm1651, %v1644, %v1648
        %v1653 = vand.u32 2147483647, %v1502
        %vm1654 = vcmp.eq.f32.partialorder %v1653, 8.507059e+37
        %v1655 = vand.u32 %v1502, 2147483648
        %v1656 = vor.u32 1.1754944e-38, %v1655
        %v1657 = vsel %vm1654, %v1656, %v1652
        %v1658 = vmul.f32 %v1461, %v1657
        %v1659 = vrcp.pop %v1505
        %v1660 = vmul.f32 %v1505, %v1659
        %v1661 = vsub.f32 1.0, %v1660
        %v1662 = vmul.f32 %v1659, %v1661
        %v1663 = vadd.f32 %v1659, %v1662
        %vm1664 = vweird.f32 %v1505
        %vm1665 = vweird.f32 %v1659
        %vm1666 = vmor %vm1664, %vm1665
        %v1667 = vsel %vm1666, %v1659, %v1663
        %v1668 = vand.u32 2147483647, %v1505
        %vm1669 = vcmp.eq.f32.partialorder %v1668, 8.507059e+37
        %v1670 = vand.u32 %v1505, 2147483648
        %v1671 = vor.u32 1.1754944e-38, %v1670
        %v1672 = vsel %vm1669, %v1671, %v1667
        %v1673 = vmul.f32 %v1463, %v1672
        %v1674 = vrcp.pop %v1508
        %v1675 = vmul.f32 %v1508, %v1674
        %v1676 = vsub.f32 1.0, %v1675
        %v1677 = vmul.f32 %v1674, %v1676
        %v1678 = vadd.f32 %v1674, %v1677
        %vm1679 = vweird.f32 %v1508
        %vm1680 = vweird.f32 %v1674
        %vm1681 = vmor %vm1679, %vm1680
        %v1682 = vsel %vm1681, %v1674, %v1678
        %v1683 = vand.u32 2147483647, %v1508
        %vm1684 = vcmp.eq.f32.partialorder %v1683, 8.507059e+37
        %v1685 = vand.u32 %v1508, 2147483648
        %v1686 = vor.u32 1.1754944e-38, %v1685
        %v1687 = vsel %vm1684, %v1686, %v1682
        %v1688 = vmul.f32 %v1465, %v1687
        %v1689 = vrcp.pop %v1511
        %v1690 = vmul.f32 %v1511, %v1689
        %v1691 = vsub.f32 1.0, %v1690
        %v1692 = vmul.f32 %v1689, %v1691
        %v1693 = vadd.f32 %v1689, %v1692
        %vm1694 = vweird.f32 %v1511
        %vm1695 = vweird.f32 %v1689
        %vm1696 = vmor %vm1694, %vm1695
        %v1697 = vsel %vm1696, %v1689, %v1693
        %v1698 = vand.u32 2147483647, %v1511
        %vm1699 = vcmp.eq.f32.partialorder %v1698, 8.507059e+37
        %v1700 = vand.u32 %v1511, 2147483648
        %v1701 = vor.u32 1.1754944e-38, %v1700
        %v1702 = vsel %vm1699, %v1701, %v1697
        %v1703 = vmul.f32 %v1467, %v1702
        %v1704 = vrcp.pop %v1514
        %v1705 = vmul.f32 %v1514, %v1704
        %v1706 = vsub.f32 1.0, %v1705
        %v1707 = vmul.f32 %v1704, %v1706
        %v1708 = vadd.f32 %v1704, %v1707
        %vm1709 = vweird.f32 %v1514
        %vm1710 = vweird.f32 %v1704
        %vm1711 = vmor %vm1709, %vm1710
        %v1712 = vsel %vm1711, %v1704, %v1708
        %v1713 = vand.u32 2147483647, %v1514
        %vm1714 = vcmp.eq.f32.partialorder %v1713, 8.507059e+37
        %v1715 = vand.u32 %v1514, 2147483648
        %v1716 = vor.u32 1.1754944e-38, %v1715
        %v1717 = vsel %vm1714, %v1716, %v1712
        %v1718 = vmul.f32 %v1469, %v1717
        %v1719 = vrcp.pop %v1517
        %v1720 = vmul.f32 %v1517, %v1719
        %v1721 = vsub.f32 1.0, %v1720
        %v1722 = vmul.f32 %v1719, %v1721
        %v1723 = vadd.f32 %v1719, %v1722
        %vm1724 = vweird.f32 %v1517
        %vm1725 = vweird.f32 %v1719
        %vm1726 = vmor %vm1724, %vm1725
        %v1727 = vsel %vm1726, %v1719, %v1723
        %v1728 = vand.u32 2147483647, %v1517
        %vm1729 = vcmp.eq.f32.partialorder %v1728, 8.507059e+37
        %v1730 = vand.u32 %v1517, 2147483648
        %v1731 = vor.u32 1.1754944e-38, %v1730
        %v1732 = vsel %vm1729, %v1731, %v1727
        %v1733 = vmul.f32 %v1471, %v1732
        %v1734 = vrcp.pop %v1520
        %v1735 = vmul.f32 %v1520, %v1734
        %v1736 = vsub.f32 1.0, %v1735
        %v1737 = vmul.f32 %v1734, %v1736
        %v1738 = vadd.f32 %v1734, %v1737
        %vm1739 = vweird.f32 %v1520
        %vm1740 = vweird.f32 %v1734
        %vm1741 = vmor %vm1739, %vm1740
        %v1742 = vsel %vm1741, %v1734, %v1738
        %v1743 = vand.u32 2147483647, %v1520
        %vm1744 = vcmp.eq.f32.partialorder %v1743, 8.507059e+37
        %v1745 = vand.u32 %v1520, 2147483648
        %v1746 = vor.u32 1.1754944e-38, %v1745
        %v1747 = vsel %vm1744, %v1746, %v1742
        %v1748 = vmul.f32 %v1473, %v1747
        %v1749 = vrcp.pop %v1523
        %v1750 = vmul.f32 %v1523, %v1749
        %v1751 = vsub.f32 1.0, %v1750
        %v1752 = vmul.f32 %v1749, %v1751
        %v1753 = vadd.f32 %v1749, %v1752
        %vm1754 = vweird.f32 %v1523
        %vm1755 = vweird.f32 %v1749
        %vm1756 = vmor %vm1754, %vm1755
        %v1757 = vsel %vm1756, %v1749, %v1753
        %v1758 = vand.u32 2147483647, %v1523
        %vm1759 = vcmp.eq.f32.partialorder %v1758, 8.507059e+37
        %v1760 = vand.u32 %v1523, 2147483648
        %v1761 = vor.u32 1.1754944e-38, %v1760
        %v1762 = vsel %vm1759, %v1761, %v1757
        %v1763 = vmul.f32 %v1475, %v1762
        %v1765 = vsel %vm965, %v1538, 0
        %1767 = vmatpush.msra.mxu0 0.0
        %1768 = vmatpush.msra.mxu0 0.0
        %1769 = vmatpush.msra.mxu0 0.0
        %1770 = vmatpush.msra.mxu0 0.0
        %1771 = vmatpush.msra.mxu0 0.0
        %1772 = vmatpush.msra.mxu0 0.0
        %1773 = vmatpush.msra.mxu0 0.0
        %1774 = vmatpush.msra.mxu0 0.0
        %1775 = vmatpush.msra.mxu0 0.0
        %1776 = vmatpush.msra.mxu0 0.0
        %1777 = vmatpush.msra.mxu0 0.0
        %1778 = vmatpush.msra.mxu0 0.0
        %1779 = vmatpush.msra.mxu0 0.0
        %1780 = vmatpush.msra.mxu0 0.0
        %1781 = vmatpush.msra.mxu0 0.0
        %1782 = vmatpush.msra.mxu0 %v852
        %1783 = vmatmul.f32.gmra.mxu0 %v1765
        %v1784 = vpop.f32.mrf.mxu0
        %v1785 = vadd.f32 0.0, %v1784
        %1786 = vdwg.mxu0
        %v1788 = vsel %vm965, %v1553, 0
        %1790 = vmatpush.msra.mxu0 0.0
        %1791 = vmatpush.msra.mxu0 0.0
        %1792 = vmatpush.msra.mxu0 0.0
        %1793 = vmatpush.msra.mxu0 0.0
        %1794 = vmatpush.msra.mxu0 0.0
        %1795 = vmatpush.msra.mxu0 0.0
        %1796 = vmatpush.msra.mxu0 0.0
        %1797 = vmatpush.msra.mxu0 0.0
        %1798 = vmatpush.msra.mxu0 0.0
        %1799 = vmatpush.msra.mxu0 0.0
        %1800 = vmatpush.msra.mxu0 0.0
        %1801 = vmatpush.msra.mxu0 0.0
        %1802 = vmatpush.msra.mxu0 0.0
        %1803 = vmatpush.msra.mxu0 0.0
        %1804 = vmatpush.msra.mxu0 0.0
        %1805 = vmatpush.msra.mxu0 %v921
        %1806 = vmatmul.f32.gmra.mxu0 %v1788
        %v1807 = vpop.f32.mrf.mxu0
        %v1808 = vadd.f32 0.0, %v1807
        %1809 = vdwg.mxu0
        %v1811 = vsel %vm965, %v1568, 0
        %1813 = vmatpush.msra.mxu0 0.0
        %1814 = vmatpush.msra.mxu0 0.0
        %1815 = vmatpush.msra.mxu0 0.0
        %1816 = vmatpush.msra.mxu0 0.0
        %1817 = vmatpush.msra.mxu0 0.0
        %1818 = vmatpush.msra.mxu0 0.0
        %1819 = vmatpush.msra.mxu0 0.0
        %1820 = vmatpush.msra.mxu0 0.0
        %1821 = vmatpush.msra.mxu0 0.0
        %1822 = vmatpush.msra.mxu0 0.0
        %1823 = vmatpush.msra.mxu0 0.0
        %1824 = vmatpush.msra.mxu0 0.0
        %1825 = vmatpush.msra.mxu0 0.0
        %1826 = vmatpush.msra.mxu0 0.0
        %1827 = vmatpush.msra.mxu0 0.0
        %1828 = vmatpush.msra.mxu0 %v924
        %1829 = vmatmul.f32.gmra.mxu0 %v1811
        %v1830 = vpop.f32.mrf.mxu0
        %v1831 = vadd.f32 0.0, %v1830
        %1832 = vdwg.mxu0
        %v1834 = vsel %vm965, %v1583, 0
        %1836 = vmatpush.msra.mxu0 0.0
        %1837 = vmatpush.msra.mxu0 0.0
        %1838 = vmatpush.msra.mxu0 0.0
        %1839 = vmatpush.msra.mxu0 0.0
        %1840 = vmatpush.msra.mxu0 0.0
        %1841 = vmatpush.msra.mxu0 0.0
        %1842 = vmatpush.msra.mxu0 0.0
        %1843 = vmatpush.msra.mxu0 0.0
        %1844 = vmatpush.msra.mxu0 0.0
        %1845 = vmatpush.msra.mxu0 0.0
        %1846 = vmatpush.msra.mxu0 0.0
        %1847 = vmatpush.msra.mxu0 0.0
        %1848 = vmatpush.msra.mxu0 0.0
        %1849 = vmatpush.msra.mxu0 0.0
        %1850 = vmatpush.msra.mxu0 0.0
        %1851 = vmatpush.msra.mxu0 %v927
        %1852 = vmatmul.f32.gmra.mxu0 %v1834
        %v1853 = vpop.f32.mrf.mxu0
        %v1854 = vadd.f32 0.0, %v1853
        %1855 = vdwg.mxu0
        %v1857 = vsel %vm965, %v1598, 0
        %1859 = vmatpush.msra.mxu0 0.0
        %1860 = vmatpush.msra.mxu0 0.0
        %1861 = vmatpush.msra.mxu0 0.0
        %1862 = vmatpush.msra.mxu0 0.0
        %1863 = vmatpush.msra.mxu0 0.0
        %1864 = vmatpush.msra.mxu0 0.0
        %1865 = vmatpush.msra.mxu0 0.0
        %1866 = vmatpush.msra.mxu0 0.0
        %1867 = vmatpush.msra.mxu0 0.0
        %1868 = vmatpush.msra.mxu0 0.0
        %1869 = vmatpush.msra.mxu0 0.0
        %1870 = vmatpush.msra.mxu0 0.0
        %1871 = vmatpush.msra.mxu0 0.0
        %1872 = vmatpush.msra.mxu0 0.0
        %1873 = vmatpush.msra.mxu0 0.0
        %1874 = vmatpush.msra.mxu0 %v930
        %1875 = vmatmul.f32.gmra.mxu0 %v1857
        %v1876 = vpop.f32.mrf.mxu0
        %v1877 = vadd.f32 0.0, %v1876
        %1878 = vdwg.mxu0
        %v1880 = vsel %vm965, %v1613, 0
        %1882 = vmatpush.msra.mxu0 0.0
        %1883 = vmatpush.msra.mxu0 0.0
        %1884 = vmatpush.msra.mxu0 0.0
        %1885 = vmatpush.msra.mxu0 0.0
        %1886 = vmatpush.msra.mxu0 0.0
        %1887 = vmatpush.msra.mxu0 0.0
        %1888 = vmatpush.msra.mxu0 0.0
        %1889 = vmatpush.msra.mxu0 0.0
        %1890 = vmatpush.msra.mxu0 0.0
        %1891 = vmatpush.msra.mxu0 0.0
        %1892 = vmatpush.msra.mxu0 0.0
        %1893 = vmatpush.msra.mxu0 0.0
        %1894 = vmatpush.msra.mxu0 0.0
        %1895 = vmatpush.msra.mxu0 0.0
        %1896 = vmatpush.msra.mxu0 0.0
        %1897 = vmatpush.msra.mxu0 %v933
        %1898 = vmatmul.f32.gmra.mxu0 %v1880
        %v1899 = vpop.f32.mrf.mxu0
        %v1900 = vadd.f32 0.0, %v1899
        %1901 = vdwg.mxu0
        %v1903 = vsel %vm965, %v1628, 0
        %1905 = vmatpush.msra.mxu0 0.0
        %1906 = vmatpush.msra.mxu0 0.0
        %1907 = vmatpush.msra.mxu0 0.0
        %1908 = vmatpush.msra.mxu0 0.0
        %1909 = vmatpush.msra.mxu0 0.0
        %1910 = vmatpush.msra.mxu0 0.0
        %1911 = vmatpush.msra.mxu0 0.0
        %1912 = vmatpush.msra.mxu0 0.0
        %1913 = vmatpush.msra.mxu0 0.0
        %1914 = vmatpush.msra.mxu0 0.0
        %1915 = vmatpush.msra.mxu0 0.0
        %1916 = vmatpush.msra.mxu0 0.0
        %1917 = vmatpush.msra.mxu0 0.0
        %1918 = vmatpush.msra.mxu0 0.0
        %1919 = vmatpush.msra.mxu0 0.0
        %1920 = vmatpush.msra.mxu0 %v936
        %1921 = vmatmul.f32.gmra.mxu0 %v1903
        %v1922 = vpop.f32.mrf.mxu0
        %v1923 = vadd.f32 0.0, %v1922
        %1924 = vdwg.mxu0
        %v1926 = vsel %vm965, %v1643, 0
        %1928 = vmatpush.msra.mxu0 0.0
        %1929 = vmatpush.msra.mxu0 0.0
        %1930 = vmatpush.msra.mxu0 0.0
        %1931 = vmatpush.msra.mxu0 0.0
        %1932 = vmatpush.msra.mxu0 0.0
        %1933 = vmatpush.msra.mxu0 0.0
        %1934 = vmatpush.msra.mxu0 0.0
        %1935 = vmatpush.msra.mxu0 0.0
        %1936 = vmatpush.msra.mxu0 0.0
        %1937 = vmatpush.msra.mxu0 0.0
        %1938 = vmatpush.msra.mxu0 0.0
        %1939 = vmatpush.msra.mxu0 0.0
        %1940 = vmatpush.msra.mxu0 0.0
        %1941 = vmatpush.msra.mxu0 0.0
        %1942 = vmatpush.msra.mxu0 0.0
        %1943 = vmatpush.msra.mxu0 %v939
        %1944 = vmatmul.f32.gmra.mxu0 %v1926
        %v1945 = vpop.f32.mrf.mxu0
        %v1946 = vadd.f32 0.0, %v1945
        %1947 = vdwg.mxu0
        %v1949 = vsel %vm965, %v1658, 0
        %1951 = vmatpush.msra.mxu0 0.0
        %1952 = vmatpush.msra.mxu0 0.0
        %1953 = vmatpush.msra.mxu0 0.0
        %1954 = vmatpush.msra.mxu0 0.0
        %1955 = vmatpush.msra.mxu0 0.0
        %1956 = vmatpush.msra.mxu0 0.0
        %1957 = vmatpush.msra.mxu0 0.0
        %1958 = vmatpush.msra.mxu0 0.0
        %1959 = vmatpush.msra.mxu0 0.0
        %1960 = vmatpush.msra.mxu0 0.0
        %1961 = vmatpush.msra.mxu0 0.0
        %1962 = vmatpush.msra.mxu0 0.0
        %1963 = vmatpush.msra.mxu0 0.0
        %1964 = vmatpush.msra.mxu0 0.0
        %1965 = vmatpush.msra.mxu0 0.0
        %1966 = vmatpush.msra.mxu0 %v855
        %1967 = vmatmul.f32.gmra.mxu0 %v1949
        %v1968 = vpop.f32.mrf.mxu0
        %v1969 = vadd.f32 0.0, %v1968
        %1970 = vdwg.mxu0
        %v1972 = vsel %vm965, %v1673, 0
        %1974 = vmatpush.msra.mxu0 0.0
        %1975 = vmatpush.msra.mxu0 0.0
        %1976 = vmatpush.msra.mxu0 0.0
        %1977 = vmatpush.msra.mxu0 0.0
        %1978 = vmatpush.msra.mxu0 0.0
        %1979 = vmatpush.msra.mxu0 0.0
        %1980 = vmatpush.msra.mxu0 0.0
        %1981 = vmatpush.msra.mxu0 0.0
        %1982 = vmatpush.msra.mxu0 0.0
        %1983 = vmatpush.msra.mxu0 0.0
        %1984 = vmatpush.msra.mxu0 0.0
        %1985 = vmatpush.msra.mxu0 0.0
        %1986 = vmatpush.msra.mxu0 0.0
        %1987 = vmatpush.msra.mxu0 0.0
        %1988 = vmatpush.msra.mxu0 0.0
        %1989 = vmatpush.msra.mxu0 %v943
        %1990 = vmatmul.f32.gmra.mxu0 %v1972
        %v1991 = vpop.f32.mrf.mxu0
        %v1992 = vadd.f32 0.0, %v1991
        %1993 = vdwg.mxu0
        %v1995 = vsel %vm965, %v1688, 0
        %1997 = vmatpush.msra.mxu0 0.0
        %1998 = vmatpush.msra.mxu0 0.0
        %1999 = vmatpush.msra.mxu0 0.0
        %2000 = vmatpush.msra.mxu0 0.0
        %2001 = vmatpush.msra.mxu0 0.0
        %2002 = vmatpush.msra.mxu0 0.0
        %2003 = vmatpush.msra.mxu0 0.0
        %2004 = vmatpush.msra.mxu0 0.0
        %2005 = vmatpush.msra.mxu0 0.0
        %2006 = vmatpush.msra.mxu0 0.0
        %2007 = vmatpush.msra.mxu0 0.0
        %2008 = vmatpush.msra.mxu0 0.0
        %2009 = vmatpush.msra.mxu0 0.0
        %2010 = vmatpush.msra.mxu0 0.0
        %2011 = vmatpush.msra.mxu0 0.0
        %2012 = vmatpush.msra.mxu0 %v946
        %2013 = vmatmul.f32.gmra.mxu0 %v1995
        %v2014 = vpop.f32.mrf.mxu0
        %v2015 = vadd.f32 0.0, %v2014
        %2016 = vdwg.mxu0
        %v2018 = vsel %vm965, %v1703, 0
        %2020 = vmatpush.msra.mxu0 0.0
        %2021 = vmatpush.msra.mxu0 0.0
        %2022 = vmatpush.msra.mxu0 0.0
        %2023 = vmatpush.msra.mxu0 0.0
        %2024 = vmatpush.msra.mxu0 0.0
        %2025 = vmatpush.msra.mxu0 0.0
        %2026 = vmatpush.msra.mxu0 0.0
        %2027 = vmatpush.msra.mxu0 0.0
        %2028 = vmatpush.msra.mxu0 0.0
        %2029 = vmatpush.msra.mxu0 0.0
        %2030 = vmatpush.msra.mxu0 0.0
        %2031 = vmatpush.msra.mxu0 0.0
        %2032 = vmatpush.msra.mxu0 0.0
        %2033 = vmatpush.msra.mxu0 0.0
        %2034 = vmatpush.msra.mxu0 0.0
        %2035 = vmatpush.msra.mxu0 %v949
        %2036 = vmatmul.f32.gmra.mxu0 %v2018
        %v2037 = vpop.f32.mrf.mxu0
        %v2038 = vadd.f32 0.0, %v2037
        %2039 = vdwg.mxu0
        %v2041 = vsel %vm965, %v1718, 0
        %2043 = vmatpush.msra.mxu0 0.0
        %2044 = vmatpush.msra.mxu0 0.0
        %2045 = vmatpush.msra.mxu0 0.0
        %2046 = vmatpush.msra.mxu0 0.0
        %2047 = vmatpush.msra.mxu0 0.0
        %2048 = vmatpush.msra.mxu0 0.0
        %2049 = vmatpush.msra.mxu0 0.0
        %2050 = vmatpush.msra.mxu0 0.0
        %2051 = vmatpush.msra.mxu0 0.0
        %2052 = vmatpush.msra.mxu0 0.0
        %2053 = vmatpush.msra.mxu0 0.0
        %2054 = vmatpush.msra.mxu0 0.0
        %2055 = vmatpush.msra.mxu0 0.0
        %2056 = vmatpush.msra.mxu0 0.0
        %2057 = vmatpush.msra.mxu0 0.0
        %2058 = vmatpush.msra.mxu0 %v952
        %2059 = vmatmul.f32.gmra.mxu0 %v2041
        %v2060 = vpop.f32.mrf.mxu0
        %v2061 = vadd.f32 0.0, %v2060
        %2062 = vdwg.mxu0
        %v2064 = vsel %vm965, %v1733, 0
        %2066 = vmatpush.msra.mxu0 0.0
        %2067 = vmatpush.msra.mxu0 0.0
        %2068 = vmatpush.msra.mxu0 0.0
        %2069 = vmatpush.msra.mxu0 0.0
        %2070 = vmatpush.msra.mxu0 0.0
        %2071 = vmatpush.msra.mxu0 0.0
        %2072 = vmatpush.msra.mxu0 0.0
        %2073 = vmatpush.msra.mxu0 0.0
        %2074 = vmatpush.msra.mxu0 0.0
        %2075 = vmatpush.msra.mxu0 0.0
        %2076 = vmatpush.msra.mxu0 0.0
        %2077 = vmatpush.msra.mxu0 0.0
        %2078 = vmatpush.msra.mxu0 0.0
        %2079 = vmatpush.msra.mxu0 0.0
        %2080 = vmatpush.msra.mxu0 0.0
        %2081 = vmatpush.msra.mxu0 %v955
        %2082 = vmatmul.f32.gmra.mxu0 %v2064
        %v2083 = vpop.f32.mrf.mxu0
        %v2084 = vadd.f32 0.0, %v2083
        %2085 = vdwg.mxu0
        %v2087 = vsel %vm965, %v1748, 0
        %2089 = vmatpush.msra.mxu0 0.0
        %2090 = vmatpush.msra.mxu0 0.0
        %2091 = vmatpush.msra.mxu0 0.0
        %2092 = vmatpush.msra.mxu0 0.0
        %2093 = vmatpush.msra.mxu0 0.0
        %2094 = vmatpush.msra.mxu0 0.0
        %2095 = vmatpush.msra.mxu0 0.0
        %2096 = vmatpush.msra.mxu0 0.0
        %2097 = vmatpush.msra.mxu0 0.0
        %2098 = vmatpush.msra.mxu0 0.0
        %2099 = vmatpush.msra.mxu0 0.0
        %2100 = vmatpush.msra.mxu0 0.0
        %2101 = vmatpush.msra.mxu0 0.0
        %2102 = vmatpush.msra.mxu0 0.0
        %2103 = vmatpush.msra.mxu0 0.0
        %2104 = vmatpush.msra.mxu0 %v958
        %2105 = vmatmul.f32.gmra.mxu0 %v2087
        %v2106 = vpop.f32.mrf.mxu0
        %v2107 = vadd.f32 0.0, %v2106
        %2108 = vdwg.mxu0
        %v2110 = vsel %vm965, %v1763, 0
        %2112 = vmatpush.msra.mxu0 0.0
        %2113 = vmatpush.msra.mxu0 0.0
        %2114 = vmatpush.msra.mxu0 0.0
        %2115 = vmatpush.msra.mxu0 0.0
        %2116 = vmatpush.msra.mxu0 0.0
        %2117 = vmatpush.msra.mxu0 0.0
        %2118 = vmatpush.msra.mxu0 0.0
        %2119 = vmatpush.msra.mxu0 0.0
        %2120 = vmatpush.msra.mxu0 0.0
        %2121 = vmatpush.msra.mxu0 0.0
        %2122 = vmatpush.msra.mxu0 0.0
        %2123 = vmatpush.msra.mxu0 0.0
        %2124 = vmatpush.msra.mxu0 0.0
        %2125 = vmatpush.msra.mxu0 0.0
        %2126 = vmatpush.msra.mxu0 0.0
        %2127 = vmatpush.msra.mxu0 %v961
        %2128 = vmatmul.f32.gmra.mxu0 %v2110
        %v2129 = vpop.f32.mrf.mxu0
        %v2130 = vadd.f32 0.0, %v2129
        %2131 = vdwg.mxu0
        %2132 = vst.msk [vmem:[#allocation3] sm:$0xff] %vm965, %v1785
        %2134 = vrot.lane.b32.xlu0 %v1808, 8
        %v2135 = vpop.permute.xlu0 %2134
        %vm2137 = vcmask 130112
        %2138 = vst.msk [vmem:[#allocation3] sm:$0xff] %vm2137, %v2135
        %2140 = vrot.lane.b32.xlu0 %v1831, 16
        %v2141 = vpop.permute.xlu0 %2140
        %vm2143 = vcmask 195712
        %2144 = vst.msk [vmem:[#allocation3] sm:$0xff] %vm2143, %v2141
        %2146 = vrot.lane.b32.xlu0 %v1854, 24
        %v2147 = vpop.permute.xlu0 %2146
        %vm2149 = vcmask 261312
        %2150 = vst.msk [vmem:[#allocation3] sm:$0xff] %vm2149, %v2147
        %2152 = vrot.lane.b32.xlu0 %v1877, 32
        %v2153 = vpop.permute.xlu0 %2152
        %vm2155 = vcmask 326912
        %2156 = vst.msk [vmem:[#allocation3] sm:$0xff] %vm2155, %v2153
        %2158 = vrot.lane.b32.xlu0 %v1900, 40
        %v2159 = vpop.permute.xlu0 %2158
        %vm2161 = vcmask 392512
        %2162 = vst.msk [vmem:[#allocation3] sm:$0xff] %vm2161, %v2159
        %2164 = vrot.lane.b32.xlu0 %v1923, 48
        %v2165 = vpop.permute.xlu0 %2164
        %vm2167 = vcmask 458112
        %2168 = vst.msk [vmem:[#allocation3] sm:$0xff] %vm2167, %v2165
        %2170 = vrot.lane.b32.xlu0 %v1946, 56
        %v2171 = vpop.permute.xlu0 %2170
        %vm2173 = vcmask 523712
        %2174 = vst.msk [vmem:[#allocation3] sm:$0xff] %vm2173, %v2171
        %2175 = vst.msk [vmem:[#allocation3 + $0x8] sm:$0xff] %vm965, %v1969
        %2177 = vrot.lane.b32.xlu0 %v1992, 8
        %v2178 = vpop.permute.xlu0 %2177
        %2180 = vst.msk [vmem:[#allocation3 + $0x8] sm:$0xff] %vm2137, %v2178
        %2182 = vrot.lane.b32.xlu0 %v2015, 16
        %v2183 = vpop.permute.xlu0 %2182
        %2185 = vst.msk [vmem:[#allocation3 + $0x8] sm:$0xff] %vm2143, %v2183
        %2187 = vrot.lane.b32.xlu0 %v2038, 24
        %v2188 = vpop.permute.xlu0 %2187
        %2190 = vst.msk [vmem:[#allocation3 + $0x8] sm:$0xff] %vm2149, %v2188
        %2192 = vrot.lane.b32.xlu0 %v2061, 32
        %v2193 = vpop.permute.xlu0 %2192
        %2195 = vst.msk [vmem:[#allocation3 + $0x8] sm:$0xff] %vm2155, %v2193
        %2197 = vrot.lane.b32.xlu0 %v2084, 40
        %v2198 = vpop.permute.xlu0 %2197
        %2200 = vst.msk [vmem:[#allocation3 + $0x8] sm:$0xff] %vm2161, %v2198
        %2202 = vrot.lane.b32.xlu0 %v2107, 48
        %v2203 = vpop.permute.xlu0 %2202
        %2205 = vst.msk [vmem:[#allocation3 + $0x8] sm:$0xff] %vm2167, %v2203
        %2207 = vrot.lane.b32.xlu0 %v2130, 56
        %v2208 = vpop.permute.xlu0 %2207
        %2210 = vst.msk [vmem:[#allocation3 + $0x8] sm:$0xff] %vm2173, %v2208
        %v2211 = vld [vmem:[#allocation3] sm:$0xff]
        %v2212 = vld [vmem:[#allocation3 + $0x8] sm:$0xff]
        %v2213 = vld [vmem:[%s692] sm:$0xff]
        %v2214 = vld [vmem:[%s692 + $0x8] sm:$0xff]
        %v2215 = vld [vmem:[%s692 + $0x10] sm:$0xff]
        %v2216 = vld [vmem:[%s692 + $0x18] sm:$0xff]
        %v2217 = vld [vmem:[%s692 + $0x20] sm:$0xff]
        %v2218 = vld [vmem:[%s692 + $0x28] sm:$0xff]
        %v2219 = vld [vmem:[%s692 + $0x30] sm:$0xff]
        %v2220 = vld [vmem:[%s692 + $0x38] sm:$0xff]
        %v2221 = vld [vmem:[%s695] sm:$0x1]
        %v2223 = vperm.slane %v2221, 0
        %v2226 = vsel %vm804, %v2211, 0
        %v2229 = vsel %vm804, %v2212, 0
        %2231 = vmatpush.msra.mxu0 0.0
        %2232 = vmatpush.msra.mxu0 0.0
        %2233 = vmatpush.msra.mxu0 0.0
        %2234 = vmatpush.msra.mxu0 0.0
        %2235 = vmatpush.msra.mxu0 0.0
        %2236 = vmatpush.msra.mxu0 0.0
        %2237 = vmatpush.msra.mxu0 0.0
        %2238 = vmatpush.msra.mxu0 0.0
        %2239 = vmatpush.msra.mxu0 %v2220
        %2240 = vmatpush.msra.mxu0 %v2219
        %2241 = vmatpush.msra.mxu0 %v2218
        %2242 = vmatpush.msra.mxu0 %v2217
        %2243 = vmatpush.msra.mxu0 %v2216
        %2244 = vmatpush.msra.mxu0 %v2215
        %2245 = vmatpush.msra.mxu0 %v2214
        %2246 = vmatpush.msra.mxu0 %v2213
        %2247 = vmatmul.f32.gmra.mxu0 %v2226
        %v2248 = vpop.f32.mrf.mxu0
        %v2249 = vadd.f32 %v2223, %v2248
        %2250 = vmatmul.f32.gmra.mxu0 %v2229
        %v2251 = vpop.f32.mrf.mxu0
        %v2252 = vadd.f32 %v2223, %v2251
        %2253 = vdwg.mxu0
        %v2254 = vadd.f32 %v780, %v2249
        %v2255 = vadd.f32 %v781, %v2252
        %v2256 = vld [vmem:[%s698] sm:$0x1]
        %v2257 = vld [vmem:[%s701] sm:$0x1]
        %v2258 = vsel %vm804, %v2254, 0.0
        %2259 = vadd.xlane.f32.xlu0 %v2258
        %v2260 = vpop.xlane.xlu0 %2259
        %v2261 = vsel %vm804, %v2255, 0.0
        %2262 = vadd.xlane.f32.xlu0 %v2261
        %v2263 = vpop.xlane.xlu0 %2262
        %v2264 = vrcp.pop 64.0
        %v2265 = vmul.f32 64.0, %v2264
        %v2266 = vsub.f32 1.0, %v2265
        %v2267 = vmul.f32 %v2264, %v2266
        %v2268 = vadd.f32 %v2264, %v2267
        %vm2269 = vweird.f32 %v2264
        %v2270 = vsel %vm2269, %v2264, %v2268
        %v2271 = vmul.f32 %v2260, %v2270
        %v2272 = vmul.f32 %v2263, %v2270
        %v2273 = vsub.f32 %v2254, %v2271
        %v2274 = vsub.f32 %v2255, %v2272
        %v2275 = vmul.f32 %v2273, %v2273
        %v2276 = vmul.f32 %v2274, %v2274
        %v2277 = vsel %vm804, %v2275, 0.0
        %2278 = vadd.xlane.f32.xlu0 %v2277
        %v2279 = vpop.xlane.xlu0 %2278
        %v2280 = vsel %vm804, %v2276, 0.0
        %2281 = vadd.xlane.f32.xlu0 %v2280
        %v2282 = vpop.xlane.xlu0 %2281
        %v2283 = vmul.f32 %v2279, %v2270
        %v2284 = vmul.f32 %v2282, %v2270
        %v2285 = vadd.f32 %v2283, 1e-05
        %v2286 = vadd.f32 %v2284, 1e-05
        %v2287 = vrsqrt.pop %v2285
        %v2288 = vmul.f32 %v2287, %v2285
        %v2289 = vmul.f32 %v2288, %v2287
        %v2290 = vmul.f32 0.5, %v2289
        %v2291 = vsub.f32 1.5, %v2290
        %v2292 = vmul.f32 %v2287, %v2291
        %vm2293 = vweird.f32 %v2285
        %vm2294 = vweird.f32 %v2287
        %vm2295 = vmor %vm2293, %vm2294
        %v2296 = vsel %vm2295, %v2287, %v2292
        %v2297 = vrsqrt.pop %v2286
        %v2298 = vmul.f32 %v2297, %v2286
        %v2299 = vmul.f32 %v2298, %v2297
        %v2300 = vmul.f32 0.5, %v2299
        %v2301 = vsub.f32 1.5, %v2300
        %v2302 = vmul.f32 %v2297, %v2301
        %vm2303 = vweird.f32 %v2286
        %vm2304 = vweird.f32 %v2297
        %vm2305 = vmor %vm2303, %vm2304
        %v2306 = vsel %vm2305, %v2297, %v2302
        %v2307 = vmul.f32 %v2273, %v2296
        %v2308 = vmul.f32 %v2274, %v2306
        %v2310 = vperm.slane %v2256, 0
        %v2312 = vmul.f32 %v2307, %v2310
        %v2313 = vmul.f32 %v2308, %v2310
        %v2315 = vperm.slane %v2257, 0
        %v2317 = vadd.f32 %v2312, %v2315
        %v2318 = vadd.f32 %v2313, %v2315
        %v2319 = vld [vmem:[%s706] sm:$0xff]
        %v2320 = vld [vmem:[%s706 + $0x8] sm:$0xff]
        %v2321 = vld [vmem:[%s706 + $0x10] sm:$0xff]
        %v2322 = vld [vmem:[%s706 + $0x18] sm:$0xff]
        %v2323 = vld [vmem:[%s706 + $0x20] sm:$0xff]
        %v2324 = vld [vmem:[%s706 + $0x28] sm:$0xff]
        %v2325 = vld [vmem:[%s706 + $0x30] sm:$0xff]
        %v2326 = vld [vmem:[%s706 + $0x38] sm:$0xff]
        %v2327 = vld [vmem:[%s706 + $0x40] sm:$0xff]
        %v2328 = vld [vmem:[%s706 + $0x48] sm:$0xff]
        %v2329 = vld [vmem:[%s706 + $0x50] sm:$0xff]
        %v2330 = vld [vmem:[%s706 + $0x58] sm:$0xff]
        %v2331 = vld [vmem:[%s706 + $0x60] sm:$0xff]
        %v2332 = vld [vmem:[%s706 + $0x68] sm:$0xff]
        %v2333 = vld [vmem:[%s706 + $0x70] sm:$0xff]
        %v2334 = vld [vmem:[%s706 + $0x78] sm:$0xff]
        %v2335 = vld [vmem:[%s710] sm:$0x3]
        %v2337 = vperm.slane %v2335, 0
        %v2338 = vperm.slane %v2335, 1
        %v2342 = vsel %vm804, %v2317, 0
        %v2345 = vsel %vm804, %v2318, 0
        %2347 = vmatpush.msra.mxu0 0.0
        %2348 = vmatpush.msra.mxu0 0.0
        %2349 = vmatpush.msra.mxu0 0.0
        %2350 = vmatpush.msra.mxu0 0.0
        %2351 = vmatpush.msra.mxu0 0.0
        %2352 = vmatpush.msra.mxu0 0.0
        %2353 = vmatpush.msra.mxu0 0.0
        %2354 = vmatpush.msra.mxu0 0.0
        %2355 = vmatpush.msra.mxu0 %v2333
        %2356 = vmatpush.msra.mxu0 %v2331
        %2357 = vmatpush.msra.mxu0 %v2329
        %2358 = vmatpush.msra.mxu0 %v2327
        %2359 = vmatpush.msra.mxu0 %v2325
        %2360 = vmatpush.msra.mxu0 %v2323
        %2361 = vmatpush.msra.mxu0 %v2321
        %2362 = vmatpush.msra.mxu0 %v2319
        %2363 = vmatmul.f32.gmra.mxu0 %v2342
        %v2364 = vpop.f32.mrf.mxu0
        %v2365 = vadd.f32 %v2337, %v2364
        %2366 = vmatmul.f32.gmra.mxu0 %v2345
        %v2367 = vpop.f32.mrf.mxu0
        %v2368 = vadd.f32 %v2337, %v2367
        %2369 = vdwg.mxu0
        %2370 = vmatpush.msra.mxu0 0.0
        %2371 = vmatpush.msra.mxu0 0.0
        %2372 = vmatpush.msra.mxu0 0.0
        %2373 = vmatpush.msra.mxu0 0.0
        %2374 = vmatpush.msra.mxu0 0.0
        %2375 = vmatpush.msra.mxu0 0.0
        %2376 = vmatpush.msra.mxu0 0.0
        %2377 = vmatpush.msra.mxu0 0.0
        %2378 = vmatpush.msra.mxu0 %v2334
        %2379 = vmatpush.msra.mxu0 %v2332
        %2380 = vmatpush.msra.mxu0 %v2330
        %2381 = vmatpush.msra.mxu0 %v2328
        %2382 = vmatpush.msra.mxu0 %v2326
        %2383 = vmatpush.msra.mxu0 %v2324
        %2384 = vmatpush.msra.mxu0 %v2322
        %2385 = vmatpush.msra.mxu0 %v2320
        %2386 = vmatmul.f32.gmra.mxu0 %v2342
        %v2387 = vpop.f32.mrf.mxu0
        %v2388 = vadd.f32 %v2338, %v2387
        %2389 = vmatmul.f32.gmra.mxu0 %v2345
        %v2390 = vpop.f32.mrf.mxu0
        %v2391 = vadd.f32 %v2338, %v2390
        %2392 = vdwg.mxu0
        %v2393 = vmax.f32 %v2365, 0.0
        %v2394 = vmax.f32 %v2388, 0.0
        %v2395 = vmax.f32 %v2368, 0.0
        %v2396 = vmax.f32 %v2391, 0.0
        %v2397 = vld [vmem:[%s715] sm:$0xff]
        %v2398 = vld [vmem:[%s715 + $0x8] sm:$0xff]
        %v2399 = vld [vmem:[%s715 + $0x10] sm:$0xff]
        %v2400 = vld [vmem:[%s715 + $0x18] sm:$0xff]
        %v2401 = vld [vmem:[%s715 + $0x20] sm:$0xff]
        %v2402 = vld [vmem:[%s715 + $0x28] sm:$0xff]
        %v2403 = vld [vmem:[%s715 + $0x30] sm:$0xff]
        %v2404 = vld [vmem:[%s715 + $0x38] sm:$0xff]
        %v2405 = vld [vmem:[%s715 + $0x40] sm:$0xff]
        %v2406 = vld [vmem:[%s715 + $0x48] sm:$0xff]
        %v2407 = vld [vmem:[%s715 + $0x50] sm:$0xff]
        %v2408 = vld [vmem:[%s715 + $0x58] sm:$0xff]
        %v2409 = vld [vmem:[%s715 + $0x60] sm:$0xff]
        %v2410 = vld [vmem:[%s715 + $0x68] sm:$0xff]
        %v2411 = vld [vmem:[%s715 + $0x70] sm:$0xff]
        %v2412 = vld [vmem:[%s715 + $0x78] sm:$0xff]
        %v2413 = vld [vmem:[%s715 + $0x80] sm:$0xff]
        %v2414 = vld [vmem:[%s715 + $0x88] sm:$0xff]
        %v2415 = vld [vmem:[%s715 + $0x90] sm:$0xff]
        %v2416 = vld [vmem:[%s715 + $0x98] sm:$0xff]
        %v2417 = vld [vmem:[%s715 + $0xa0] sm:$0xff]
        %v2418 = vld [vmem:[%s715 + $0xa8] sm:$0xff]
        %v2419 = vld [vmem:[%s715 + $0xb0] sm:$0xff]
        %v2420 = vld [vmem:[%s715 + $0xb8] sm:$0xff]
        %v2421 = vld [vmem:[%s715 + $0xc0] sm:$0xff]
        %v2422 = vld [vmem:[%s715 + $0xc8] sm:$0xff]
        %v2423 = vld [vmem:[%s715 + $0xd0] sm:$0xff]
        %v2424 = vld [vmem:[%s715 + $0xd8] sm:$0xff]
        %v2425 = vld [vmem:[%s715 + $0xe0] sm:$0xff]
        %v2426 = vld [vmem:[%s715 + $0xe8] sm:$0xff]
        %v2427 = vld [vmem:[%s715 + $0xf0] sm:$0xff]
        %v2428 = vld [vmem:[%s715 + $0xf8] sm:$0xff]
        %v2429 = vld [vmem:[%s718] sm:$0x1]
        %v2431 = vperm.slane %v2429, 0
        %2433 = vmatpush.msra.mxu0 %v2412
        %2434 = vmatpush.msra.mxu0 %v2411
        %2435 = vmatpush.msra.mxu0 %v2410
        %2436 = vmatpush.msra.mxu0 %v2409
        %2437 = vmatpush.msra.mxu0 %v2408
        %2438 = vmatpush.msra.mxu0 %v2407
        %2439 = vmatpush.msra.mxu0 %v2406
        %2440 = vmatpush.msra.mxu0 %v2405
        %2441 = vmatpush.msra.mxu0 %v2404
        %2442 = vmatpush.msra.mxu0 %v2403
        %2443 = vmatpush.msra.mxu0 %v2402
        %2444 = vmatpush.msra.mxu0 %v2401
        %2445 = vmatpush.msra.mxu0 %v2400
        %2446 = vmatpush.msra.mxu0 %v2399
        %2447 = vmatpush.msra.mxu0 %v2398
        %2448 = vmatpush.msra.mxu0 %v2397
        %2449 = vmatmul.f32.gmra.mxu0 %v2393
        %v2450 = vpop.f32.mrf.mxu0
        %v2451 = vadd.f32 %v2431, %v2450
        %2452 = vmatmul.f32.gmra.mxu0 %v2395
        %v2453 = vpop.f32.mrf.mxu0
        %v2454 = vadd.f32 %v2431, %v2453
        %2455 = vdwg.mxu0
        %2456 = vmatpush.msra.mxu0 %v2428
        %2457 = vmatpush.msra.mxu0 %v2427
        %2458 = vmatpush.msra.mxu0 %v2426
        %2459 = vmatpush.msra.mxu0 %v2425
        %2460 = vmatpush.msra.mxu0 %v2424
        %2461 = vmatpush.msra.mxu0 %v2423
        %2462 = vmatpush.msra.mxu0 %v2422
        %2463 = vmatpush.msra.mxu0 %v2421
        %2464 = vmatpush.msra.mxu0 %v2420
        %2465 = vmatpush.msra.mxu0 %v2419
        %2466 = vmatpush.msra.mxu0 %v2418
        %2467 = vmatpush.msra.mxu0 %v2417
        %2468 = vmatpush.msra.mxu0 %v2416
        %2469 = vmatpush.msra.mxu0 %v2415
        %2470 = vmatpush.msra.mxu0 %v2414
        %2471 = vmatpush.msra.mxu0 %v2413
        %2472 = vmatmul.f32.gmra.mxu0 %v2394
        %v2473 = vpop.f32.mrf.mxu0
        %v2474 = vadd.f32 %v2451, %v2473
        %2475 = vmatmul.f32.gmra.mxu0 %v2396
        %v2476 = vpop.f32.mrf.mxu0
        %v2477 = vadd.f32 %v2454, %v2476
        %2478 = vdwg.mxu0
        %v2479 = vadd.f32 %v2317, %v2474
        %v2480 = vadd.f32 %v2318, %v2477
        %v2481 = vld [vmem:[%s721] sm:$0x1]
        %v2482 = vld [vmem:[%s724] sm:$0x1]
        %v2483 = vsel %vm804, %v2479, 0.0
        %2484 = vadd.xlane.f32.xlu0 %v2483
        %v2485 = vpop.xlane.xlu0 %2484
        %v2486 = vsel %vm804, %v2480, 0.0
        %2487 = vadd.xlane.f32.xlu0 %v2486
        %v2488 = vpop.xlane.xlu0 %2487
        %v2489 = vmul.f32 %v2485, %v2270
        %v2490 = vmul.f32 %v2488, %v2270
        %v2491 = vsub.f32 %v2479, %v2489
        %v2492 = vsub.f32 %v2480, %v2490
        %v2493 = vmul.f32 %v2491, %v2491
        %v2494 = vmul.f32 %v2492, %v2492
        %v2495 = vsel %vm804, %v2493, 0.0
        %2496 = vadd.xlane.f32.xlu0 %v2495
        %v2497 = vpop.xlane.xlu0 %2496
        %v2498 = vsel %vm804, %v2494, 0.0
        %2499 = vadd.xlane.f32.xlu0 %v2498
        %v2500 = vpop.xlane.xlu0 %2499
        %v2501 = vmul.f32 %v2497, %v2270
        %v2502 = vmul.f32 %v2500, %v2270
        %v2503 = vadd.f32 %v2501, 1e-05
        %v2504 = vadd.f32 %v2502, 1e-05
        %v2505 = vrsqrt.pop %v2503
        %v2506 = vmul.f32 %v2505, %v2503
        %v2507 = vmul.f32 %v2506, %v2505
        %v2508 = vmul.f32 0.5, %v2507
        %v2509 = vsub.f32 1.5, %v2508
        %v2510 = vmul.f32 %v2505, %v2509
        %vm2511 = vweird.f32 %v2503
        %vm2512 = vweird.f32 %v2505
        %vm2513 = vmor %vm2511, %vm2512
        %v2514 = vsel %vm2513, %v2505, %v2510
        %v2515 = vrsqrt.pop %v2504
        %v2516 = vmul.f32 %v2515, %v2504
        %v2517 = vmul.f32 %v2516, %v2515
        %v2518 = vmul.f32 0.5, %v2517
        %v2519 = vsub.f32 1.5, %v2518
        %v2520 = vmul.f32 %v2515, %v2519
        %vm2521 = vweird.f32 %v2504
        %vm2522 = vweird.f32 %v2515
        %vm2523 = vmor %vm2521, %vm2522
        %v2524 = vsel %vm2523, %v2515, %v2520
        %v2525 = vmul.f32 %v2491, %v2514
        %v2526 = vmul.f32 %v2492, %v2524
        %v2528 = vperm.slane %v2481, 0
        %v2530 = vmul.f32 %v2525, %v2528
        %v2531 = vmul.f32 %v2526, %v2528
        %v2533 = vperm.slane %v2482, 0
        %v2535 = vadd.f32 %v2530, %v2533
        %v2536 = vadd.f32 %v2531, %v2533
        %2537 = vst.msk [vmem:[#allocation2] sm:$0xff] %vm804, %v2535
        %2538 = vst.msk [vmem:[#allocation2 + $0x8] sm:$0xff] %vm804, %v2536
        %p2539 = scmp.eq.s32.totalorder %s33, 5
        // Predicated region
        $region89: #{tpu_custom_call.1} parent=83 // pred_check
          %p2540 = pneg %p2539
        $region90: #{tpu_custom_call.1} parent=83 // pred_check_branch
          %2542 = sbr.rel (%p2540) target = $region92
        $region91: #{tpu_custom_call.1} parent=83 // pred_region
          %2543 = vst.msk [vmem:[#allocation4] sm:$0xff] %vm804, %v2535
          %2544 = vst.msk [vmem:[#allocation4 + $0x8] sm:$0xff] %vm804, %v2536
        $region92: #{tpu_custom_call.1} parent=83 // pred_fallthru
          _
        // Predicated region
        $region93: #{tpu_custom_call.1} parent=83 // pred_check
          %p2545 = pneg %p459
        $region94: #{tpu_custom_call.1} parent=83 // pred_check_branch
          %2547 = sbr.rel (%p2545) target = $region96
        $region95: #{tpu_custom_call.1} parent=83 // pred_region
          %s2548 = smul.u32 2, %s32
          %2550 = vsyncadd [#allocation5], 0
          %s2551 = smul.addr %s2548, 8
          %s2552 = scalar_lea.hbm %s16, %s2551
          %s2553 = sshll.u32 [#allocation4], 4
          %s2554 = int_to_ptr.vmem [resolvable:$true] %s2553
          %s2555 = sshll.u32 %s2552, 4
          %s2556 = int_to_ptr.hbm [resolvable:$true] %s2555
          %2561 = dma.vmem_to_hbm [thread:$0]  %s2554, 256, %s2556, [#allocation5], 128, 128, 8
        $region96: #{tpu_custom_call.1} parent=83 // pred_fallthru
          _
        // Predicated region
        $region97: #{tpu_custom_call.1} parent=83 // pred_check
          %p2562 = pneg %p459
        $region98: #{tpu_custom_call.1} parent=83 // pred_check_branch
          %2564 = sbr.rel (%p2562) target = $region100
        $region99: #{tpu_custom_call.1} parent=83 // pred_region
          %2566 = dma.done [#allocation5], 256
        $region100: #{tpu_custom_call.1} parent=83 // pred_fallthru
          _
      $region84: #{tpu_custom_call.1} parent=5 // pred_fallthru
        _
      %p2567 = scmp.le.s32.totalorder 2, %s23
      // Predicated region
      $region101: #{tpu_custom_call.1} parent=5 // pred_check
        %p2568 = pneg %p2567
      $region102: #{tpu_custom_call.1} parent=5 // pred_check_branch
        %2570 = sbr.rel (%p2568) target = $region104
      $region103: #{tpu_custom_call.1} parent=5 // pred_region
        %s2571 = ssub.s32 %s23, 2
      $region104: #{tpu_custom_call.1} parent=5 // pred_fallthru
        _
    $region6: #{tpu_custom_call.1} parent=1 // loop_footer
      %s27 = sadd.s32 1, %s23
    $region7: #{tpu_custom_call.1} parent=1 // loop_footer_branch
      %22 = sbr.rel target = $region3
    $region8: #{tpu_custom_call.1} parent=1 // loop_exit
      _
    %2572 = vsyncpa [#allocation5], 1
    %s2573 = scalar_lea.sflag [#allocation5], 1
    %2574 = vsyncpa %s2573, 1

</llo_original>
